<compile_context>
chip_gen: v5e
topology: v5e:2x2
jax: 0.10.0
libtpu: 0.0.40
codegen_flags: <defaults>
</compile_context>

<pallas_src>
import functools
from random import Random

import jax
import jax.numpy as jnp
from jax.experimental import pallas as pl
from jax.experimental.pallas import tpu as pltpu


def _fused_decoder_kernel(B, H, V, Vp, L, T,
                          tf_ref,      # SMEM (T,)   int32: 1 = teacher-force this step
                          tok_ref,     # SMEM (T*B,) int32: TF token id, index t*B + b
                          h0_ref,      # VMEM (L, B, H)   f32 initial hidden
                          c0_ref,      # VMEM (L, B, H)   f32 initial cell
                          embw0_ref,   # VMEM (Vp, 4H)    f32 emb_pad @ W_ih[0]^T (folded embedding)
                          wih_ref,     # VMEM (L, H, 4H)  f32 W_ih^T (row 0 unused: folded into embw0)
                          whh_ref,     # VMEM (L, H, 4H)  f32 W_hh^T
                          b_ref,       # VMEM (L, 1, 4H)  f32 b_ih + b_hh
                          embt_ref,    # VMEM (H, Vp)     f32 tied projection emb^T (zero-padded)
                          out_ref):    # VMEM (T*B, Vp)   f32 logits, lane/sublane-dense slab
    f32 = jnp.float32
    # Constants hoisted once (JAX does not CSE broadcast_in_dim across the unroll).
    lane = jax.lax.broadcasted_iota(jnp.int32, (B, Vp), 1)
    row = jax.lax.broadcasted_iota(jnp.int32, (B, Vp), 0)
    lane4 = jax.lax.broadcasted_iota(jnp.int32, (B, 4 * H), 1)
    g_mask = jnp.logical_and(lane4 >= 2 * H, lane4 < 3 * H)
    zero_bv = jnp.zeros((B, Vp), f32)

    # LSTM state is carried as plain traced values across the statically unrolled loop.
    h = [h0_ref[l] for l in range(L)]
    c = [c0_ref[l] for l in range(L)]
    prev_logits = None

    for t in range(T):                                   # static unroll: full LLO visibility
        # ---- teacher-forcing one-hot built in-kernel from SMEM token ids ----
        tf1h = zero_bv
        for b in range(B):
            tok_b = tok_ref[t * B + b]                   # scalar read from SMEM
            tf1h = jnp.where(row == b, (lane == tok_b).astype(f32), tf1h)

        if t == 0:
            sel = tf1h                                   # step 0 always consumes the given x
        else:
            # Greedy feedback: one-hot(argmax(prev_logits)); padded vocab lanes masked out.
            masked = jnp.where(lane < V, prev_logits, -1e30)
            row_max = jnp.max(masked, axis=-1, keepdims=True)
            first = jnp.min(jnp.where(masked >= row_max, lane, Vp),
                            axis=-1, keepdims=True)      # first maximal lane (torch tie-break)
            fb1h = (lane == first).astype(f32)
            use_tf = (tf_ref[t] != 0).astype(f32)
            sel = use_tf * tf1h + (1.0 - use_tf) * fb1h
        # TODO(synk): nn.Dropout is identity in eval mode; not applied here.

        # ---- L stacked LSTM cells; gate order [i, f, g, o] as in torch.nn.LSTM ----
        x = sel
        for l in range(L):
            if l == 0:
                ih = jnp.dot(x, embw0_ref[...], preferred_element_type=f32)  # folded embedding
            else:
                ih = jnp.dot(x, wih_ref[l], preferred_element_type=f32)
            gates = ih + jnp.dot(h[l], whh_ref[l], preferred_element_type=f32) + b_ref[l]
            # Single EUP pass: sigmoid(z) = 0.5 * tanh(z / 2) + 0.5.
            th = jnp.tanh(jnp.where(g_mask, gates, 0.5 * gates))
            act = jnp.where(g_mask, th, 0.5 * th + 0.5)
            i_g = act[:, 0 * H:1 * H]
            f_g = act[:, 1 * H:2 * H]
            g_g = act[:, 2 * H:3 * H]
            o_g = act[:, 3 * H:4 * H]
            c[l] = f_g * c[l] + i_g * g_g
            h[l] = o_g * jnp.tanh(c[l])
            x = h[l]

        # ---- tied output projection to the (padded, lane-dense) vocab ----
        logits = jnp.dot(x, embt_ref[...], preferred_element_type=f32)       # (B, Vp)
        prev_logits = logits
        out_ref[t * B:(t + 1) * B, :] = logits           # static slice into the dense slab


def make_fused_decoder(B, H, V, Vp, L, T):
    kernel = functools.partial(_fused_decoder_kernel, B, H, V, Vp, L, T)
    smem = pl.BlockSpec(memory_space=pltpu.MemorySpace.SMEM)
    vmem = pl.BlockSpec(memory_space=pltpu.MemorySpace.VMEM)
    call = pl.pallas_call(
        kernel,
        out_shape=jax.ShapeDtypeStruct((T * B, Vp), jnp.float32),
        in_specs=[smem, smem, vmem, vmem, vmem, vmem, vmem, vmem, vmem],
        out_specs=vmem,
    )
    return jax.jit(call)


if __name__ == "__main__":
    # Small shapes consistent with the module: hidden=32, vocab=64, num_layers=2, T=8.
    B, H, V, L, T = 2, 32, 64, 2, 8
    Vp = 128                       # vocab padded to one full lane width
    tf_ratio = 0.5

    key = jax.random.PRNGKey(0)
    keys = jax.random.split(key, 8)
    emb_w = jax.random.normal(keys[0], (V, H), jnp.float32) * 0.1      # shared_embedding.weight
    k = 1.0 / jnp.sqrt(jnp.float32(H))
    w_ih = jax.random.uniform(keys[1], (L, 4 * H, H), jnp.float32, -k, k)
    w_hh = jax.random.uniform(keys[2], (L, 4 * H, H), jnp.float32, -k, k)
    b_ih = jax.random.uniform(keys[3], (L, 4 * H), jnp.float32, -k, k)
    b_hh = jax.random.uniform(keys[4], (L, 4 * H), jnp.float32, -k, k)

    # Host-side parameter glue: transpose LSTM weights, fold biases, zero-pad the vocab
    # axis to 128 lanes, and fold the embedding into layer-0 input weights.
    w_ih_t = jnp.transpose(w_ih, (0, 2, 1))                 # (L, H, 4H)
    w_hh_t = jnp.transpose(w_hh, (0, 2, 1))                 # (L, H, 4H)
    bias = (b_ih + b_hh)[:, None, :]                        # (L, 1, 4H)
    emb_pad = jnp.zeros((Vp, H), jnp.float32).at[:V].set(emb_w)   # (Vp, H)
    emb_t_pad = emb_pad.T                                   # (H, Vp)
    emb_w0 = emb_pad @ w_ih_t[0]                            # (Vp, 4H) folded embedding+layer0

    x_tok = jax.random.randint(keys[5], (B, 1), 0, V)       # initial decoder token ids
    target = jax.random.randint(keys[6], (B, T), 0, V)      # teacher-forcing targets
    hidden = jax.random.normal(keys[7], (L, B, H), jnp.float32)
    cell = jnp.zeros((L, B, H), jnp.float32)

    # Per-step teacher-forcing coin flips (deterministic stand-in for Python's random()).
    # Step 0 always consumes the initial input token.
    rng = Random(0)
    tf_flags = [1] + [1 if tf_ratio > rng.random() else 0 for _ in range(1, T)]
    tf_mask = jnp.asarray(tf_flags, jnp.int32)              # (T,)

    # Teacher-forcing token per step: col 0 = initial x, cols 1..T-1 = target[:, 1:].
    step_tokens = jnp.concatenate([x_tok, target[:, 1:]], axis=1)        # (B, T)
    tok_ids = jnp.asarray(step_tokens.T.reshape(-1), jnp.int32)          # (T*B,), idx t*B + b

    decoder = make_fused_decoder(B, H, V, Vp, L, T)
    logits_flat = decoder(tf_mask, tok_ids, hidden, cell, emb_w0,
                          w_ih_t, w_hh_t, bias, emb_t_pad)   # (T*B, Vp), one kernel launch
    jax.block_until_ready(logits_flat)

    outputs = jnp.transpose(logits_flat.reshape(T, B, Vp)[:, :, :V], (1, 0, 2))   # (B, T, V)
    jax.block_until_ready(outputs)
    assert outputs.shape == (B, T, V)
    assert bool(jnp.all(jnp.isfinite(outputs)))
    print("KERNEL_OK")
</pallas_src>

<mosaic_0001>
module attributes {stable_mosaic.version = 11 : i64} {
  func.func @_fused_decoder_kernel(%arg0: memref<8xi32, #tpu.memory_space<smem>>, %arg1: memref<16xi32, #tpu.memory_space<smem>>, %arg2: memref<2x2x32xf32, #tpu.memory_space<vmem>>, %arg3: memref<2x2x32xf32, #tpu.memory_space<vmem>>, %arg4: memref<128x128xf32, #tpu.memory_space<vmem>>, %arg5: memref<2x32x128xf32, #tpu.memory_space<vmem>>, %arg6: memref<2x32x128xf32, #tpu.memory_space<vmem>>, %arg7: memref<2x1x128xf32, #tpu.memory_space<vmem>>, %arg8: memref<32x128xf32, #tpu.memory_space<vmem>>, %arg9: memref<16x128xf32, #tpu.memory_space<vmem>>) attributes {dimension_semantics = [], scalar_prefetch = 0 : i64, scratch_operands = 0 : i64, tpu.core_type = #tpu.core_type<tc>} {
    %0 = tpu.iota {dimensions = array<i32: 1>} : vector<2x128xi32>
    %1 = tpu.iota {dimensions = array<i32: 0>} : vector<2x128xi32>
    %2 = tpu.iota {dimensions = array<i32: 1>} : vector<2x128xi32>
    %c64_i32 = arith.constant 64 : i32
    %3 = vector.broadcast %c64_i32 : i32 to vector<2x128xi32>
    %4 = arith.cmpi sge, %2, %3 : vector<2x128xi32>
    %c96_i32 = arith.constant 96 : i32
    %5 = vector.broadcast %c96_i32 : i32 to vector<2x128xi32>
    %6 = arith.cmpi slt, %2, %5 : vector<2x128xi32>
    %7 = arith.andi %4, %6 : vector<2x128xi1>
    %cst = arith.constant 0.000000e+00 : f32
    %8 = vector.broadcast %cst : f32 to vector<2x128xf32>
    %c0 = arith.constant 0 : index
    %c0_0 = arith.constant 0 : index
    %c0_1 = arith.constant 0 : index
    %9 = vector.load %arg2[%c0, %c0_0, %c0_1] : memref<2x2x32xf32, #tpu.memory_space<vmem>>, vector<1x2x32xf32>
    %10 = vector.shape_cast %9 : vector<1x2x32xf32> to vector<2x32xf32>
    %c1 = arith.constant 1 : index
    %c0_2 = arith.constant 0 : index
    %c0_3 = arith.constant 0 : index
    %11 = vector.load %arg2[%c1, %c0_2, %c0_3] : memref<2x2x32xf32, #tpu.memory_space<vmem>>, vector<1x2x32xf32>
    %12 = vector.shape_cast %11 : vector<1x2x32xf32> to vector<2x32xf32>
    %c0_4 = arith.constant 0 : index
    %c0_5 = arith.constant 0 : index
    %c0_6 = arith.constant 0 : index
    %13 = vector.load %arg3[%c0_4, %c0_5, %c0_6] : memref<2x2x32xf32, #tpu.memory_space<vmem>>, vector<1x2x32xf32>
    %14 = vector.shape_cast %13 : vector<1x2x32xf32> to vector<2x32xf32>
    %c1_7 = arith.constant 1 : index
    %c0_8 = arith.constant 0 : index
    %c0_9 = arith.constant 0 : index
    %15 = vector.load %arg3[%c1_7, %c0_8, %c0_9] : memref<2x2x32xf32, #tpu.memory_space<vmem>>, vector<1x2x32xf32>
    %16 = vector.shape_cast %15 : vector<1x2x32xf32> to vector<2x32xf32>
    %c0_10 = arith.constant 0 : index
    %17 = memref.load %arg1[%c0_10] : memref<16xi32, #tpu.memory_space<smem>>
    %c0_i32 = arith.constant 0 : i32
    %18 = vector.broadcast %c0_i32 : i32 to vector<2x128xi32>
    %19 = arith.cmpi eq, %1, %18 : vector<2x128xi32>
    %20 = vector.broadcast %17 : i32 to vector<2x128xi32>
    %21 = arith.cmpi eq, %0, %20 : vector<2x128xi32>
    %22 = arith.extui %21 : vector<2x128xi1> to vector<2x128xi32>
    %23 = arith.sitofp %22 : vector<2x128xi32> to vector<2x128xf32>
    %24 = arith.select %19, %23, %8 : vector<2x128xi1>, vector<2x128xf32>
    %c1_11 = arith.constant 1 : index
    %25 = memref.load %arg1[%c1_11] : memref<16xi32, #tpu.memory_space<smem>>
    %c1_i32 = arith.constant 1 : i32
    %26 = vector.broadcast %c1_i32 : i32 to vector<2x128xi32>
    %27 = arith.cmpi eq, %1, %26 : vector<2x128xi32>
    %28 = vector.broadcast %25 : i32 to vector<2x128xi32>
    %29 = arith.cmpi eq, %0, %28 : vector<2x128xi32>
    %30 = arith.extui %29 : vector<2x128xi1> to vector<2x128xi32>
    %31 = arith.sitofp %30 : vector<2x128xi32> to vector<2x128xf32>
    %32 = arith.select %27, %31, %24 : vector<2x128xi1>, vector<2x128xf32>
    %c0_12 = arith.constant 0 : index
    %c0_13 = arith.constant 0 : index
    %33 = vector.load %arg4[%c0_12, %c0_13] : memref<128x128xf32, #tpu.memory_space<vmem>>, vector<128x128xf32>
    %cst_14 = arith.constant dense<0.000000e+00> : vector<2x128xf32>
    %34 = tpu.matmul %32, %33, %cst_14 {dimension_numbers = #tpu.dot_dimension_numbers<[1], [0], [0], [1], [0, 0, 1, 1], [], []>} : vector<2x128xf32>, vector<128x128xf32>, vector<2x128xf32> -> vector<2x128xf32>
    %c0_15 = arith.constant 0 : index
    %c0_16 = arith.constant 0 : index
    %c0_17 = arith.constant 0 : index
    %35 = vector.load %arg6[%c0_15, %c0_16, %c0_17] : memref<2x32x128xf32, #tpu.memory_space<vmem>>, vector<1x32x128xf32>
    %36 = vector.shape_cast %35 : vector<1x32x128xf32> to vector<32x128xf32>
    %cst_18 = arith.constant dense<0.000000e+00> : vector<2x128xf32>
    %37 = tpu.matmul %10, %36, %cst_18 {dimension_numbers = #tpu.dot_dimension_numbers<[1], [0], [0], [1], [0, 0, 1, 1], [], []>} : vector<2x32xf32>, vector<32x128xf32>, vector<2x128xf32> -> vector<2x128xf32>
    %38 = arith.addf %34, %37 : vector<2x128xf32>
    %c0_19 = arith.constant 0 : index
    %c0_20 = arith.constant 0 : index
    %c0_21 = arith.constant 0 : index
    %39 = vector.load %arg7[%c0_19, %c0_20, %c0_21] : memref<2x1x128xf32, #tpu.memory_space<vmem>>, vector<1x1x128xf32>
    %40 = vector.shape_cast %39 : vector<1x1x128xf32> to vector<1x128xf32>
    %41 = vector.broadcast %40 : vector<1x128xf32> to vector<2x128xf32>
    %42 = arith.addf %38, %41 : vector<2x128xf32>
    %cst_22 = arith.constant 5.000000e-01 : f32
    %43 = vector.broadcast %cst_22 : f32 to vector<2x128xf32>
    %44 = arith.mulf %43, %42 : vector<2x128xf32>
    %45 = arith.select %7, %42, %44 : vector<2x128xi1>, vector<2x128xf32>
    %46 = math.tanh %45 : vector<2x128xf32>
    %cst_23 = arith.constant 5.000000e-01 : f32
    %47 = vector.broadcast %cst_23 : f32 to vector<2x128xf32>
    %48 = arith.mulf %47, %46 : vector<2x128xf32>
    %cst_24 = arith.constant 5.000000e-01 : f32
    %49 = vector.broadcast %cst_24 : f32 to vector<2x128xf32>
    %50 = arith.addf %48, %49 : vector<2x128xf32>
    %51 = arith.select %7, %46, %50 : vector<2x128xi1>, vector<2x128xf32>
    %52 = vector.extract_strided_slice %51 {offsets = [0, 0], sizes = [2, 32], strides = [1, 1]} : vector<2x128xf32> to vector<2x32xf32>
    %53 = vector.extract_strided_slice %51 {offsets = [0, 32], sizes = [2, 32], strides = [1, 1]} : vector<2x128xf32> to vector<2x32xf32>
    %54 = vector.extract_strided_slice %51 {offsets = [0, 64], sizes = [2, 32], strides = [1, 1]} : vector<2x128xf32> to vector<2x32xf32>
    %55 = vector.extract_strided_slice %51 {offsets = [0, 96], sizes = [2, 32], strides = [1, 1]} : vector<2x128xf32> to vector<2x32xf32>
    %56 = arith.mulf %53, %14 : vector<2x32xf32>
    %57 = arith.mulf %52, %54 : vector<2x32xf32>
    %58 = arith.addf %56, %57 : vector<2x32xf32>
    %59 = math.tanh %58 : vector<2x32xf32>
    %60 = arith.mulf %55, %59 : vector<2x32xf32>
    %c1_25 = arith.constant 1 : index
    %c0_26 = arith.constant 0 : index
    %c0_27 = arith.constant 0 : index
    %61 = vector.load %arg5[%c1_25, %c0_26, %c0_27] : memref<2x32x128xf32, #tpu.memory_space<vmem>>, vector<1x32x128xf32>
    %62 = vector.shape_cast %61 : vector<1x32x128xf32> to vector<32x128xf32>
    %cst_28 = arith.constant dense<0.000000e+00> : vector<2x128xf32>
    %63 = tpu.matmul %60, %62, %cst_28 {dimension_numbers = #tpu.dot_dimension_numbers<[1], [0], [0], [1], [0, 0, 1, 1], [], []>} : vector<2x32xf32>, vector<32x128xf32>, vector<2x128xf32> -> vector<2x128xf32>
    %c1_29 = arith.constant 1 : index
    %c0_30 = arith.constant 0 : index
    %c0_31 = arith.constant 0 : index
    %64 = vector.load %arg6[%c1_29, %c0_30, %c0_31] : memref<2x32x128xf32, #tpu.memory_space<vmem>>, vector<1x32x128xf32>
    %65 = vector.shape_cast %64 : vector<1x32x128xf32> to vector<32x128xf32>
    %cst_32 = arith.constant dense<0.000000e+00> : vector<2x128xf32>
    %66 = tpu.matmul %12, %65, %cst_32 {dimension_numbers = #tpu.dot_dimension_numbers<[1], [0], [0], [1], [0, 0, 1, 1], [], []>} : vector<2x32xf32>, vector<32x128xf32>, vector<2x128xf32> -> vector<2x128xf32>
    %67 = arith.addf %63, %66 : vector<2x128xf32>
    %c1_33 = arith.constant 1 : index
    %c0_34 = arith.constant 0 : index
    %c0_35 = arith.constant 0 : index
    %68 = vector.load %arg7[%c1_33, %c0_34, %c0_35] : memref<2x1x128xf32, #tpu.memory_space<vmem>>, vector<1x1x128xf32>
    %69 = vector.shape_cast %68 : vector<1x1x128xf32> to vector<1x128xf32>
    %70 = vector.broadcast %69 : vector<1x128xf32> to vector<2x128xf32>
    %71 = arith.addf %67, %70 : vector<2x128xf32>
    %cst_36 = arith.constant 5.000000e-01 : f32
    %72 = vector.broadcast %cst_36 : f32 to vector<2x128xf32>
    %73 = arith.mulf %72, %71 : vector<2x128xf32>
    %74 = arith.select %7, %71, %73 : vector<2x128xi1>, vector<2x128xf32>
    %75 = math.tanh %74 : vector<2x128xf32>
    %cst_37 = arith.constant 5.000000e-01 : f32
    %76 = vector.broadcast %cst_37 : f32 to vector<2x128xf32>
    %77 = arith.mulf %76, %75 : vector<2x128xf32>
    %cst_38 = arith.constant 5.000000e-01 : f32
    %78 = vector.broadcast %cst_38 : f32 to vector<2x128xf32>
    %79 = arith.addf %77, %78 : vector<2x128xf32>
    %80 = arith.select %7, %75, %79 : vector<2x128xi1>, vector<2x128xf32>
    %81 = vector.extract_strided_slice %80 {offsets = [0, 0], sizes = [2, 32], strides = [1, 1]} : vector<2x128xf32> to vector<2x32xf32>
    %82 = vector.extract_strided_slice %80 {offsets = [0, 32], sizes = [2, 32], strides = [1, 1]} : vector<2x128xf32> to vector<2x32xf32>
    %83 = vector.extract_strided_slice %80 {offsets = [0, 64], sizes = [2, 32], strides = [1, 1]} : vector<2x128xf32> to vector<2x32xf32>
    %84 = vector.extract_strided_slice %80 {offsets = [0, 96], sizes = [2, 32], strides = [1, 1]} : vector<2x128xf32> to vector<2x32xf32>
    %85 = arith.mulf %82, %16 : vector<2x32xf32>
    %86 = arith.mulf %81, %83 : vector<2x32xf32>
    %87 = arith.addf %85, %86 : vector<2x32xf32>
    %88 = math.tanh %87 : vector<2x32xf32>
    %89 = arith.mulf %84, %88 : vector<2x32xf32>
    %c0_39 = arith.constant 0 : index
    %c0_40 = arith.constant 0 : index
    %90 = vector.load %arg8[%c0_39, %c0_40] : memref<32x128xf32, #tpu.memory_space<vmem>>, vector<32x128xf32>
    %cst_41 = arith.constant dense<0.000000e+00> : vector<2x128xf32>
    %91 = tpu.matmul %89, %90, %cst_41 {dimension_numbers = #tpu.dot_dimension_numbers<[1], [0], [0], [1], [0, 0, 1, 1], [], []>} : vector<2x32xf32>, vector<32x128xf32>, vector<2x128xf32> -> vector<2x128xf32>
    %c0_42 = arith.constant 0 : index
    %c0_43 = arith.constant 0 : index
    %92 = vector.load %arg9[%c0_42, %c0_43] : memref<16x128xf32, #tpu.memory_space<vmem>>, vector<2x128xf32>
    tpu.vector_store %arg9[%c0_42, %c0_43], %91 {strides = array<i32>} : memref<16x128xf32, #tpu.memory_space<vmem>>, vector<2x128xf32>,
    %c2 = arith.constant 2 : index
    %93 = memref.load %arg1[%c2] : memref<16xi32, #tpu.memory_space<smem>>
    %c0_i32_44 = arith.constant 0 : i32
    %94 = vector.broadcast %c0_i32_44 : i32 to vector<2x128xi32>
    %95 = arith.cmpi eq, %1, %94 : vector<2x128xi32>
    %96 = vector.broadcast %93 : i32 to vector<2x128xi32>
    %97 = arith.cmpi eq, %0, %96 : vector<2x128xi32>
    %98 = arith.extui %97 : vector<2x128xi1> to vector<2x128xi32>
    %99 = arith.sitofp %98 : vector<2x128xi32> to vector<2x128xf32>
    %100 = arith.select %95, %99, %8 : vector<2x128xi1>, vector<2x128xf32>
    %c3 = arith.constant 3 : index
    %101 = memref.load %arg1[%c3] : memref<16xi32, #tpu.memory_space<smem>>
    %c1_i32_45 = arith.constant 1 : i32
    %102 = vector.broadcast %c1_i32_45 : i32 to vector<2x128xi32>
    %103 = arith.cmpi eq, %1, %102 : vector<2x128xi32>
    %104 = vector.broadcast %101 : i32 to vector<2x128xi32>
    %105 = arith.cmpi eq, %0, %104 : vector<2x128xi32>
    %106 = arith.extui %105 : vector<2x128xi1> to vector<2x128xi32>
    %107 = arith.sitofp %106 : vector<2x128xi32> to vector<2x128xf32>
    %108 = arith.select %103, %107, %100 : vector<2x128xi1>, vector<2x128xf32>
    %c64_i32_46 = arith.constant 64 : i32
    %109 = vector.broadcast %c64_i32_46 : i32 to vector<2x128xi32>
    %110 = arith.cmpi slt, %0, %109 : vector<2x128xi32>
    %cst_47 = arith.constant -1.000000e+30 : f32
    %111 = vector.broadcast %cst_47 : f32 to vector<2x128xf32>
    %112 = arith.select %110, %91, %111 : vector<2x128xi1>, vector<2x128xf32>
    %cst_48 = arith.constant dense<0xFF800000> : vector<2xf32>
    %113 = vector.multi_reduction <maximumf>, %112, %cst_48 [1] : vector<2x128xf32> to vector<2xf32>
    %114 = vector.shape_cast %113 : vector<2xf32> to vector<2x1xf32>
    %115 = vector.broadcast %114 : vector<2x1xf32> to vector<2x128xf32>
    %116 = arith.cmpf oge, %112, %115 : vector<2x128xf32>
    %c128_i32 = arith.constant 128 : i32
    %117 = vector.broadcast %c128_i32 : i32 to vector<2x128xi32>
    %118 = arith.select %116, %0, %117 : vector<2x128xi1>, vector<2x128xi32>
    %cst_49 = arith.constant dense<2147483647> : vector<2xi32>
    %119 = vector.multi_reduction <minsi>, %118, %cst_49 [1] : vector<2x128xi32> to vector<2xi32>
    %120 = vector.shape_cast %119 : vector<2xi32> to vector<2x1xi32>
    %121 = vector.broadcast %120 : vector<2x1xi32> to vector<2x128xi32>
    %122 = arith.cmpi eq, %0, %121 : vector<2x128xi32>
    %123 = arith.extui %122 : vector<2x128xi1> to vector<2x128xi32>
    %124 = arith.sitofp %123 : vector<2x128xi32> to vector<2x128xf32>
    %c1_50 = arith.constant 1 : index
    %125 = memref.load %arg0[%c1_50] : memref<8xi32, #tpu.memory_space<smem>>
    %c0_i32_51 = arith.constant 0 : i32
    %126 = arith.cmpi ne, %125, %c0_i32_51 : i32
    %127 = arith.extui %126 : i1 to i32
    %128 = arith.sitofp %127 : i32 to f32
    %129 = vector.broadcast %128 : f32 to vector<2x128xf32>
    %130 = arith.mulf %129, %108 : vector<2x128xf32>
    %cst_52 = arith.constant 1.000000e+00 : f32
    %131 = arith.subf %cst_52, %128 : f32
    %132 = vector.broadcast %131 : f32 to vector<2x128xf32>
    %133 = arith.mulf %132, %124 : vector<2x128xf32>
    %134 = arith.addf %130, %133 : vector<2x128xf32>
    %c0_53 = arith.constant 0 : index
    %c0_54 = arith.constant 0 : index
    %135 = vector.load %arg4[%c0_53, %c0_54] : memref<128x128xf32, #tpu.memory_space<vmem>>, vector<128x128xf32>
    %cst_55 = arith.constant dense<0.000000e+00> : vector<2x128xf32>
    %136 = tpu.matmul %134, %135, %cst_55 {dimension_numbers = #tpu.dot_dimension_numbers<[1], [0], [0], [1], [0, 0, 1, 1], [], []>} : vector<2x128xf32>, vector<128x128xf32>, vector<2x128xf32> -> vector<2x128xf32>
    %c0_56 = arith.constant 0 : index
    %c0_57 = arith.constant 0 : index
    %c0_58 = arith.constant 0 : index
    %137 = vector.load %arg6[%c0_56, %c0_57, %c0_58] : memref<2x32x128xf32, #tpu.memory_space<vmem>>, vector<1x32x128xf32>
    %138 = vector.shape_cast %137 : vector<1x32x128xf32> to vector<32x128xf32>
    %cst_59 = arith.constant dense<0.000000e+00> : vector<2x128xf32>
    %139 = tpu.matmul %60, %138, %cst_59 {dimension_numbers = #tpu.dot_dimension_numbers<[1], [0], [0], [1], [0, 0, 1, 1], [], []>} : vector<2x32xf32>, vector<32x128xf32>, vector<2x128xf32> -> vector<2x128xf32>
    %140 = arith.addf %136, %139 : vector<2x128xf32>
    %c0_60 = arith.constant 0 : index
    %c0_61 = arith.constant 0 : index
    %c0_62 = arith.constant 0 : index
    %141 = vector.load %arg7[%c0_60, %c0_61, %c0_62] : memref<2x1x128xf32, #tpu.memory_space<vmem>>, vector<1x1x128xf32>
    %142 = vector.shape_cast %141 : vector<1x1x128xf32> to vector<1x128xf32>
    %143 = vector.broadcast %142 : vector<1x128xf32> to vector<2x128xf32>
    %144 = arith.addf %140, %143 : vector<2x128xf32>
    %cst_63 = arith.constant 5.000000e-01 : f32
    %145 = vector.broadcast %cst_63 : f32 to vector<2x128xf32>
    %146 = arith.mulf %145, %144 : vector<2x128xf32>
    %147 = arith.select %7, %144, %146 : vector<2x128xi1>, vector<2x128xf32>
    %148 = math.tanh %147 : vector<2x128xf32>
    %cst_64 = arith.constant 5.000000e-01 : f32
    %149 = vector.broadcast %cst_64 : f32 to vector<2x128xf32>
    %150 = arith.mulf %149, %148 : vector<2x128xf32>
    %cst_65 = arith.constant 5.000000e-01 : f32
    %151 = vector.broadcast %cst_65 : f32 to vector<2x128xf32>
    %152 = arith.addf %150, %151 : vector<2x128xf32>
    %153 = arith.select %7, %148, %152 : vector<2x128xi1>, vector<2x128xf32>
    %154 = vector.extract_strided_slice %153 {offsets = [0, 0], sizes = [2, 32], strides = [1, 1]} : vector<2x128xf32> to vector<2x32xf32>
    %155 = vector.extract_strided_slice %153 {offsets = [0, 32], sizes = [2, 32], strides = [1, 1]} : vector<2x128xf32> to vector<2x32xf32>
    %156 = vector.extract_strided_slice %153 {offsets = [0, 64], sizes = [2, 32], strides = [1, 1]} : vector<2x128xf32> to vector<2x32xf32>
    %157 = vector.extract_strided_slice %153 {offsets = [0, 96], sizes = [2, 32], strides = [1, 1]} : vector<2x128xf32> to vector<2x32xf32>
    %158 = arith.mulf %155, %58 : vector<2x32xf32>
    %159 = arith.mulf %154, %156 : vector<2x32xf32>
    %160 = arith.addf %158, %159 : vector<2x32xf32>
    %161 = math.tanh %160 : vector<2x32xf32>
    %162 = arith.mulf %157, %161 : vector<2x32xf32>
    %c1_66 = arith.constant 1 : index
    %c0_67 = arith.constant 0 : index
    %c0_68 = arith.constant 0 : index
    %163 = vector.load %arg5[%c1_66, %c0_67, %c0_68] : memref<2x32x128xf32, #tpu.memory_space<vmem>>, vector<1x32x128xf32>
    %164 = vector.shape_cast %163 : vector<1x32x128xf32> to vector<32x128xf32>
    %cst_69 = arith.constant dense<0.000000e+00> : vector<2x128xf32>
    %165 = tpu.matmul %162, %164, %cst_69 {dimension_numbers = #tpu.dot_dimension_numbers<[1], [0], [0], [1], [0, 0, 1, 1], [], []>} : vector<2x32xf32>, vector<32x128xf32>, vector<2x128xf32> -> vector<2x128xf32>
    %c1_70 = arith.constant 1 : index
    %c0_71 = arith.constant 0 : index
    %c0_72 = arith.constant 0 : index
    %166 = vector.load %arg6[%c1_70, %c0_71, %c0_72] : memref<2x32x128xf32, #tpu.memory_space<vmem>>, vector<1x32x128xf32>
    %167 = vector.shape_cast %166 : vector<1x32x128xf32> to vector<32x128xf32>
    %cst_73 = arith.constant dense<0.000000e+00> : vector<2x128xf32>
    %168 = tpu.matmul %89, %167, %cst_73 {dimension_numbers = #tpu.dot_dimension_numbers<[1], [0], [0], [1], [0, 0, 1, 1], [], []>} : vector<2x32xf32>, vector<32x128xf32>, vector<2x128xf32> -> vector<2x128xf32>
    %169 = arith.addf %165, %168 : vector<2x128xf32>
    %c1_74 = arith.constant 1 : index
    %c0_75 = arith.constant 0 : index
    %c0_76 = arith.constant 0 : index
    %170 = vector.load %arg7[%c1_74, %c0_75, %c0_76] : memref<2x1x128xf32, #tpu.memory_space<vmem>>, vector<1x1x128xf32>
    %171 = vector.shape_cast %170 : vector<1x1x128xf32> to vector<1x128xf32>
    %172 = vector.broadcast %171 : vector<1x128xf32> to vector<2x128xf32>
    %173 = arith.addf %169, %172 : vector<2x128xf32>
    %cst_77 = arith.constant 5.000000e-01 : f32
    %174 = vector.broadcast %cst_77 : f32 to vector<2x128xf32>
    %175 = arith.mulf %174, %173 : vector<2x128xf32>
    %176 = arith.select %7, %173, %175 : vector<2x128xi1>, vector<2x128xf32>
    %177 = math.tanh %176 : vector<2x128xf32>
    %cst_78 = arith.constant 5.000000e-01 : f32
    %178 = vector.broadcast %cst_78 : f32 to vector<2x128xf32>
    %179 = arith.mulf %178, %177 : vector<2x128xf32>
    %cst_79 = arith.constant 5.000000e-01 : f32
    %180 = vector.broadcast %cst_79 : f32 to vector<2x128xf32>
    %181 = arith.addf %179, %180 : vector<2x128xf32>
    %182 = arith.select %7, %177, %181 : vector<2x128xi1>, vector<2x128xf32>
    %183 = vector.extract_strided_slice %182 {offsets = [0, 0], sizes = [2, 32], strides = [1, 1]} : vector<2x128xf32> to vector<2x32xf32>
    %184 = vector.extract_strided_slice %182 {offsets = [0, 32], sizes = [2, 32], strides = [1, 1]} : vector<2x128xf32> to vector<2x32xf32>
    %185 = vector.extract_strided_slice %182 {offsets = [0, 64], sizes = [2, 32], strides = [1, 1]} : vector<2x128xf32> to vector<2x32xf32>
    %186 = vector.extract_strided_slice %182 {offsets = [0, 96], sizes = [2, 32], strides = [1, 1]} : vector<2x128xf32> to vector<2x32xf32>
    %187 = arith.mulf %184, %87 : vector<2x32xf32>
    %188 = arith.mulf %183, %185 : vector<2x32xf32>
    %189 = arith.addf %187, %188 : vector<2x32xf32>
    %190 = math.tanh %189 : vector<2x32xf32>
    %191 = arith.mulf %186, %190 : vector<2x32xf32>
    %c0_80 = arith.constant 0 : index
    %c0_81 = arith.constant 0 : index
    %192 = vector.load %arg8[%c0_80, %c0_81] : memref<32x128xf32, #tpu.memory_space<vmem>>, vector<32x128xf32>
    %cst_82 = arith.constant dense<0.000000e+00> : vector<2x128xf32>
    %193 = tpu.matmul %191, %192, %cst_82 {dimension_numbers = #tpu.dot_dimension_numbers<[1], [0], [0], [1], [0, 0, 1, 1], [], []>} : vector<2x32xf32>, vector<32x128xf32>, vector<2x128xf32> -> vector<2x128xf32>
    %c2_83 = arith.constant 2 : index
    %c0_84 = arith.constant 0 : index
    %194 = vector.load %arg9[%c2_83, %c0_84] : memref<16x128xf32, #tpu.memory_space<vmem>>, vector<2x128xf32>
    tpu.vector_store %arg9[%c2_83, %c0_84], %193 {strides = array<i32>} : memref<16x128xf32, #tpu.memory_space<vmem>>, vector<2x128xf32>,
    %c4 = arith.constant 4 : index
    %195 = memref.load %arg1[%c4] : memref<16xi32, #tpu.memory_space<smem>>
    %c0_i32_85 = arith.constant 0 : i32
    %196 = vector.broadcast %c0_i32_85 : i32 to vector<2x128xi32>
    %197 = arith.cmpi eq, %1, %196 : vector<2x128xi32>
    %198 = vector.broadcast %195 : i32 to vector<2x128xi32>
    %199 = arith.cmpi eq, %0, %198 : vector<2x128xi32>
    %200 = arith.extui %199 : vector<2x128xi1> to vector<2x128xi32>
    %201 = arith.sitofp %200 : vector<2x128xi32> to vector<2x128xf32>
    %202 = arith.select %197, %201, %8 : vector<2x128xi1>, vector<2x128xf32>
    %c5 = arith.constant 5 : index
    %203 = memref.load %arg1[%c5] : memref<16xi32, #tpu.memory_space<smem>>
    %c1_i32_86 = arith.constant 1 : i32
    %204 = vector.broadcast %c1_i32_86 : i32 to vector<2x128xi32>
    %205 = arith.cmpi eq, %1, %204 : vector<2x128xi32>
    %206 = vector.broadcast %203 : i32 to vector<2x128xi32>
    %207 = arith.cmpi eq, %0, %206 : vector<2x128xi32>
    %208 = arith.extui %207 : vector<2x128xi1> to vector<2x128xi32>
    %209 = arith.sitofp %208 : vector<2x128xi32> to vector<2x128xf32>
    %210 = arith.select %205, %209, %202 : vector<2x128xi1>, vector<2x128xf32>
    %c64_i32_87 = arith.constant 64 : i32
    %211 = vector.broadcast %c64_i32_87 : i32 to vector<2x128xi32>
    %212 = arith.cmpi slt, %0, %211 : vector<2x128xi32>
    %cst_88 = arith.constant -1.000000e+30 : f32
    %213 = vector.broadcast %cst_88 : f32 to vector<2x128xf32>
    %214 = arith.select %212, %193, %213 : vector<2x128xi1>, vector<2x128xf32>
    %cst_89 = arith.constant dense<0xFF800000> : vector<2xf32>
    %215 = vector.multi_reduction <maximumf>, %214, %cst_89 [1] : vector<2x128xf32> to vector<2xf32>
    %216 = vector.shape_cast %215 : vector<2xf32> to vector<2x1xf32>
    %217 = vector.broadcast %216 : vector<2x1xf32> to vector<2x128xf32>
    %218 = arith.cmpf oge, %214, %217 : vector<2x128xf32>
    %c128_i32_90 = arith.constant 128 : i32
    %219 = vector.broadcast %c128_i32_90 : i32 to vector<2x128xi32>
    %220 = arith.select %218, %0, %219 : vector<2x128xi1>, vector<2x128xi32>
    %cst_91 = arith.constant dense<2147483647> : vector<2xi32>
    %221 = vector.multi_reduction <minsi>, %220, %cst_91 [1] : vector<2x128xi32> to vector<2xi32>
    %222 = vector.shape_cast %221 : vector<2xi32> to vector<2x1xi32>
    %223 = vector.broadcast %222 : vector<2x1xi32> to vector<2x128xi32>
    %224 = arith.cmpi eq, %0, %223 : vector<2x128xi32>
    %225 = arith.extui %224 : vector<2x128xi1> to vector<2x128xi32>
    %226 = arith.sitofp %225 : vector<2x128xi32> to vector<2x128xf32>
    %c2_92 = arith.constant 2 : index
    %227 = memref.load %arg0[%c2_92] : memref<8xi32, #tpu.memory_space<smem>>
    %c0_i32_93 = arith.constant 0 : i32
    %228 = arith.cmpi ne, %227, %c0_i32_93 : i32
    %229 = arith.extui %228 : i1 to i32
    %230 = arith.sitofp %229 : i32 to f32
    %231 = vector.broadcast %230 : f32 to vector<2x128xf32>
    %232 = arith.mulf %231, %210 : vector<2x128xf32>
    %cst_94 = arith.constant 1.000000e+00 : f32
    %233 = arith.subf %cst_94, %230 : f32
    %234 = vector.broadcast %233 : f32 to vector<2x128xf32>
    %235 = arith.mulf %234, %226 : vector<2x128xf32>
    %236 = arith.addf %232, %235 : vector<2x128xf32>
    %c0_95 = arith.constant 0 : index
    %c0_96 = arith.constant 0 : index
    %237 = vector.load %arg4[%c0_95, %c0_96] : memref<128x128xf32, #tpu.memory_space<vmem>>, vector<128x128xf32>
    %cst_97 = arith.constant dense<0.000000e+00> : vector<2x128xf32>
    %238 = tpu.matmul %236, %237, %cst_97 {dimension_numbers = #tpu.dot_dimension_numbers<[1], [0], [0], [1], [0, 0, 1, 1], [], []>} : vector<2x128xf32>, vector<128x128xf32>, vector<2x128xf32> -> vector<2x128xf32>
    %c0_98 = arith.constant 0 : index
    %c0_99 = arith.constant 0 : index
    %c0_100 = arith.constant 0 : index
    %239 = vector.load %arg6[%c0_98, %c0_99, %c0_100] : memref<2x32x128xf32, #tpu.memory_space<vmem>>, vector<1x32x128xf32>
    %240 = vector.shape_cast %239 : vector<1x32x128xf32> to vector<32x128xf32>
    %cst_101 = arith.constant dense<0.000000e+00> : vector<2x128xf32>
    %241 = tpu.matmul %162, %240, %cst_101 {dimension_numbers = #tpu.dot_dimension_numbers<[1], [0], [0], [1], [0, 0, 1, 1], [], []>} : vector<2x32xf32>, vector<32x128xf32>, vector<2x128xf32> -> vector<2x128xf32>
    %242 = arith.addf %238, %241 : vector<2x128xf32>
    %c0_102 = arith.constant 0 : index
    %c0_103 = arith.constant 0 : index
    %c0_104 = arith.constant 0 : index
    %243 = vector.load %arg7[%c0_102, %c0_103, %c0_104] : memref<2x1x128xf32, #tpu.memory_space<vmem>>, vector<1x1x128xf32>
    %244 = vector.shape_cast %243 : vector<1x1x128xf32> to vector<1x128xf32>
    %245 = vector.broadcast %244 : vector<1x128xf32> to vector<2x128xf32>
    %246 = arith.addf %242, %245 : vector<2x128xf32>
    %cst_105 = arith.constant 5.000000e-01 : f32
    %247 = vector.broadcast %cst_105 : f32 to vector<2x128xf32>
    %248 = arith.mulf %247, %246 : vector<2x128xf32>
    %249 = arith.select %7, %246, %248 : vector<2x128xi1>, vector<2x128xf32>
    %250 = math.tanh %249 : vector<2x128xf32>
    %cst_106 = arith.constant 5.000000e-01 : f32
    %251 = vector.broadcast %cst_106 : f32 to vector<2x128xf32>
    %252 = arith.mulf %251, %250 : vector<2x128xf32>
    %cst_107 = arith.constant 5.000000e-01 : f32
    %253 = vector.broadcast %cst_107 : f32 to vector<2x128xf32>
    %254 = arith.addf %252, %253 : vector<2x128xf32>
    %255 = arith.select %7, %250, %254 : vector<2x128xi1>, vector<2x128xf32>
    %256 = vector.extract_strided_slice %255 {offsets = [0, 0], sizes = [2, 32], strides = [1, 1]} : vector<2x128xf32> to vector<2x32xf32>
    %257 = vector.extract_strided_slice %255 {offsets = [0, 32], sizes = [2, 32], strides = [1, 1]} : vector<2x128xf32> to vector<2x32xf32>
    %258 = vector.extract_strided_slice %255 {offsets = [0, 64], sizes = [2, 32], strides = [1, 1]} : vector<2x128xf32> to vector<2x32xf32>
    %259 = vector.extract_strided_slice %255 {offsets = [0, 96], sizes = [2, 32], strides = [1, 1]} : vector<2x128xf32> to vector<2x32xf32>
    %260 = arith.mulf %257, %160 : vector<2x32xf32>
    %261 = arith.mulf %256, %258 : vector<2x32xf32>
    %262 = arith.addf %260, %261 : vector<2x32xf32>
    %263 = math.tanh %262 : vector<2x32xf32>
    %264 = arith.mulf %259, %263 : vector<2x32xf32>
    %c1_108 = arith.constant 1 : index
    %c0_109 = arith.constant 0 : index
    %c0_110 = arith.constant 0 : index
    %265 = vector.load %arg5[%c1_108, %c0_109, %c0_110] : memref<2x32x128xf32, #tpu.memory_space<vmem>>, vector<1x32x128xf32>
    %266 = vector.shape_cast %265 : vector<1x32x128xf32> to vector<32x128xf32>
    %cst_111 = arith.constant dense<0.000000e+00> : vector<2x128xf32>
    %267 = tpu.matmul %264, %266, %cst_111 {dimension_numbers = #tpu.dot_dimension_numbers<[1], [0], [0], [1], [0, 0, 1, 1], [], []>} : vector<2x32xf32>, vector<32x128xf32>, vector<2x128xf32> -> vector<2x128xf32>
    %c1_112 = arith.constant 1 : index
    %c0_113 = arith.constant 0 : index
    %c0_114 = arith.constant 0 : index
    %268 = vector.load %arg6[%c1_112, %c0_113, %c0_114] : memref<2x32x128xf32, #tpu.memory_space<vmem>>, vector<1x32x128xf32>
    %269 = vector.shape_cast %268 : vector<1x32x128xf32> to vector<32x128xf32>
    %cst_115 = arith.constant dense<0.000000e+00> : vector<2x128xf32>
    %270 = tpu.matmul %191, %269, %cst_115 {dimension_numbers = #tpu.dot_dimension_numbers<[1], [0], [0], [1], [0, 0, 1, 1], [], []>} : vector<2x32xf32>, vector<32x128xf32>, vector<2x128xf32> -> vector<2x128xf32>
    %271 = arith.addf %267, %270 : vector<2x128xf32>
    %c1_116 = arith.constant 1 : index
    %c0_117 = arith.constant 0 : index
    %c0_118 = arith.constant 0 : index
    %272 = vector.load %arg7[%c1_116, %c0_117, %c0_118] : memref<2x1x128xf32, #tpu.memory_space<vmem>>, vector<1x1x128xf32>
    %273 = vector.shape_cast %272 : vector<1x1x128xf32> to vector<1x128xf32>
    %274 = vector.broadcast %273 : vector<1x128xf32> to vector<2x128xf32>
    %275 = arith.addf %271, %274 : vector<2x128xf32>
    %cst_119 = arith.constant 5.000000e-01 : f32
    %276 = vector.broadcast %cst_119 : f32 to vector<2x128xf32>
    %277 = arith.mulf %276, %275 : vector<2x128xf32>
    %278 = arith.select %7, %275, %277 : vector<2x128xi1>, vector<2x128xf32>
    %279 = math.tanh %278 : vector<2x128xf32>
    %cst_120 = arith.constant 5.000000e-01 : f32
    %280 = vector.broadcast %cst_120 : f32 to vector<2x128xf32>
    %281 = arith.mulf %280, %279 : vector<2x128xf32>
    %cst_121 = arith.constant 5.000000e-01 : f32
    %282 = vector.broadcast %cst_121 : f32 to vector<2x128xf32>
    %283 = arith.addf %281, %282 : vector<2x128xf32>
    %284 = arith.select %7, %279, %283 : vector<2x128xi1>, vector<2x128xf32>
    %285 = vector.extract_strided_slice %284 {offsets = [0, 0], sizes = [2, 32], strides = [1, 1]} : vector<2x128xf32> to vector<2x32xf32>
    %286 = vector.extract_strided_slice %284 {offsets = [0, 32], sizes = [2, 32], strides = [1, 1]} : vector<2x128xf32> to vector<2x32xf32>
    %287 = vector.extract_strided_slice %284 {offsets = [0, 64], sizes = [2, 32], strides = [1, 1]} : vector<2x128xf32> to vector<2x32xf32>
    %288 = vector.extract_strided_slice %284 {offsets = [0, 96], sizes = [2, 32], strides = [1, 1]} : vector<2x128xf32> to vector<2x32xf32>
    %289 = arith.mulf %286, %189 : vector<2x32xf32>
    %290 = arith.mulf %285, %287 : vector<2x32xf32>
    %291 = arith.addf %289, %290 : vector<2x32xf32>
    %292 = math.tanh %291 : vector<2x32xf32>
    %293 = arith.mulf %288, %292 : vector<2x32xf32>
    %c0_122 = arith.constant 0 : index
    %c0_123 = arith.constant 0 : index
    %294 = vector.load %arg8[%c0_122, %c0_123] : memref<32x128xf32, #tpu.memory_space<vmem>>, vector<32x128xf32>
    %cst_124 = arith.constant dense<0.000000e+00> : vector<2x128xf32>
    %295 = tpu.matmul %293, %294, %cst_124 {dimension_numbers = #tpu.dot_dimension_numbers<[1], [0], [0], [1], [0, 0, 1, 1], [], []>} : vector<2x32xf32>, vector<32x128xf32>, vector<2x128xf32> -> vector<2x128xf32>
    %c4_125 = arith.constant 4 : index
    %c0_126 = arith.constant 0 : index
    %296 = vector.load %arg9[%c4_125, %c0_126] : memref<16x128xf32, #tpu.memory_space<vmem>>, vector<2x128xf32>
    tpu.vector_store %arg9[%c4_125, %c0_126], %295 {strides = array<i32>} : memref<16x128xf32, #tpu.memory_space<vmem>>, vector<2x128xf32>,
    %c6 = arith.constant 6 : index
    %297 = memref.load %arg1[%c6] : memref<16xi32, #tpu.memory_space<smem>>
    %c0_i32_127 = arith.constant 0 : i32
    %298 = vector.broadcast %c0_i32_127 : i32 to vector<2x128xi32>
    %299 = arith.cmpi eq, %1, %298 : vector<2x128xi32>
    %300 = vector.broadcast %297 : i32 to vector<2x128xi32>
    %301 = arith.cmpi eq, %0, %300 : vector<2x128xi32>
    %302 = arith.extui %301 : vector<2x128xi1> to vector<2x128xi32>
    %303 = arith.sitofp %302 : vector<2x128xi32> to vector<2x128xf32>
    %304 = arith.select %299, %303, %8 : vector<2x128xi1>, vector<2x128xf32>
    %c7 = arith.constant 7 : index
    %305 = memref.load %arg1[%c7] : memref<16xi32, #tpu.memory_space<smem>>
    %c1_i32_128 = arith.constant 1 : i32
    %306 = vector.broadcast %c1_i32_128 : i32 to vector<2x128xi32>
    %307 = arith.cmpi eq, %1, %306 : vector<2x128xi32>
    %308 = vector.broadcast %305 : i32 to vector<2x128xi32>
    %309 = arith.cmpi eq, %0, %308 : vector<2x128xi32>
    %310 = arith.extui %309 : vector<2x128xi1> to vector<2x128xi32>
    %311 = arith.sitofp %310 : vector<2x128xi32> to vector<2x128xf32>
    %312 = arith.select %307, %311, %304 : vector<2x128xi1>, vector<2x128xf32>
    %c64_i32_129 = arith.constant 64 : i32
    %313 = vector.broadcast %c64_i32_129 : i32 to vector<2x128xi32>
    %314 = arith.cmpi slt, %0, %313 : vector<2x128xi32>
    %cst_130 = arith.constant -1.000000e+30 : f32
    %315 = vector.broadcast %cst_130 : f32 to vector<2x128xf32>
    %316 = arith.select %314, %295, %315 : vector<2x128xi1>, vector<2x128xf32>
    %cst_131 = arith.constant dense<0xFF800000> : vector<2xf32>
    %317 = vector.multi_reduction <maximumf>, %316, %cst_131 [1] : vector<2x128xf32> to vector<2xf32>
    %318 = vector.shape_cast %317 : vector<2xf32> to vector<2x1xf32>
    %319 = vector.broadcast %318 : vector<2x1xf32> to vector<2x128xf32>
    %320 = arith.cmpf oge, %316, %319 : vector<2x128xf32>
    %c128_i32_132 = arith.constant 128 : i32
    %321 = vector.broadcast %c128_i32_132 : i32 to vector<2x128xi32>
    %322 = arith.select %320, %0, %321 : vector<2x128xi1>, vector<2x128xi32>
    %cst_133 = arith.constant dense<2147483647> : vector<2xi32>
    %323 = vector.multi_reduction <minsi>, %322, %cst_133 [1] : vector<2x128xi32> to vector<2xi32>
    %324 = vector.shape_cast %323 : vector<2xi32> to vector<2x1xi32>
    %325 = vector.broadcast %324 : vector<2x1xi32> to vector<2x128xi32>
    %326 = arith.cmpi eq, %0, %325 : vector<2x128xi32>
    %327 = arith.extui %326 : vector<2x128xi1> to vector<2x128xi32>
    %328 = arith.sitofp %327 : vector<2x128xi32> to vector<2x128xf32>
    %c3_134 = arith.constant 3 : index
    %329 = memref.load %arg0[%c3_134] : memref<8xi32, #tpu.memory_space<smem>>
    %c0_i32_135 = arith.constant 0 : i32
    %330 = arith.cmpi ne, %329, %c0_i32_135 : i32
    %331 = arith.extui %330 : i1 to i32
    %332 = arith.sitofp %331 : i32 to f32
    %333 = vector.broadcast %332 : f32 to vector<2x128xf32>
    %334 = arith.mulf %333, %312 : vector<2x128xf32>
    %cst_136 = arith.constant 1.000000e+00 : f32
    %335 = arith.subf %cst_136, %332 : f32
    %336 = vector.broadcast %335 : f32 to vector<2x128xf32>
    %337 = arith.mulf %336, %328 : vector<2x128xf32>
    %338 = arith.addf %334, %337 : vector<2x128xf32>
    %c0_137 = arith.constant 0 : index
    %c0_138 = arith.constant 0 : index
    %339 = vector.load %arg4[%c0_137, %c0_138] : memref<128x128xf32, #tpu.memory_space<vmem>>, vector<128x128xf32>
    %cst_139 = arith.constant dense<0.000000e+00> : vector<2x128xf32>
    %340 = tpu.matmul %338, %339, %cst_139 {dimension_numbers = #tpu.dot_dimension_numbers<[1], [0], [0], [1], [0, 0, 1, 1], [], []>} : vector<2x128xf32>, vector<128x128xf32>, vector<2x128xf32> -> vector<2x128xf32>
    %c0_140 = arith.constant 0 : index
    %c0_141 = arith.constant 0 : index
    %c0_142 = arith.constant 0 : index
    %341 = vector.load %arg6[%c0_140, %c0_141, %c0_142] : memref<2x32x128xf32, #tpu.memory_space<vmem>>, vector<1x32x128xf32>
    %342 = vector.shape_cast %341 : vector<1x32x128xf32> to vector<32x128xf32>
    %cst_143 = arith.constant dense<0.000000e+00> : vector<2x128xf32>
    %343 = tpu.matmul %264, %342, %cst_143 {dimension_numbers = #tpu.dot_dimension_numbers<[1], [0], [0], [1], [0, 0, 1, 1], [], []>} : vector<2x32xf32>, vector<32x128xf32>, vector<2x128xf32> -> vector<2x128xf32>
    %344 = arith.addf %340, %343 : vector<2x128xf32>
    %c0_144 = arith.constant 0 : index
    %c0_145 = arith.constant 0 : index
    %c0_146 = arith.constant 0 : index
    %345 = vector.load %arg7[%c0_144, %c0_145, %c0_146] : memref<2x1x128xf32, #tpu.memory_space<vmem>>, vector<1x1x128xf32>
    %346 = vector.shape_cast %345 : vector<1x1x128xf32> to vector<1x128xf32>
    %347 = vector.broadcast %346 : vector<1x128xf32> to vector<2x128xf32>
    %348 = arith.addf %344, %347 : vector<2x128xf32>
    %cst_147 = arith.constant 5.000000e-01 : f32
    %349 = vector.broadcast %cst_147 : f32 to vector<2x128xf32>
    %350 = arith.mulf %349, %348 : vector<2x128xf32>
    %351 = arith.select %7, %348, %350 : vector<2x128xi1>, vector<2x128xf32>
    %352 = math.tanh %351 : vector<2x128xf32>
    %cst_148 = arith.constant 5.000000e-01 : f32
    %353 = vector.broadcast %cst_148 : f32 to vector<2x128xf32>
    %354 = arith.mulf %353, %352 : vector<2x128xf32>
    %cst_149 = arith.constant 5.000000e-01 : f32
    %355 = vector.broadcast %cst_149 : f32 to vector<2x128xf32>
    %356 = arith.addf %354, %355 : vector<2x128xf32>
    %357 = arith.select %7, %352, %356 : vector<2x128xi1>, vector<2x128xf32>
    %358 = vector.extract_strided_slice %357 {offsets = [0, 0], sizes = [2, 32], strides = [1, 1]} : vector<2x128xf32> to vector<2x32xf32>
    %359 = vector.extract_strided_slice %357 {offsets = [0, 32], sizes = [2, 32], strides = [1, 1]} : vector<2x128xf32> to vector<2x32xf32>
    %360 = vector.extract_strided_slice %357 {offsets = [0, 64], sizes = [2, 32], strides = [1, 1]} : vector<2x128xf32> to vector<2x32xf32>
    %361 = vector.extract_strided_slice %357 {offsets = [0, 96], sizes = [2, 32], strides = [1, 1]} : vector<2x128xf32> to vector<2x32xf32>
    %362 = arith.mulf %359, %262 : vector<2x32xf32>
    %363 = arith.mulf %358, %360 : vector<2x32xf32>
    %364 = arith.addf %362, %363 : vector<2x32xf32>
    %365 = math.tanh %364 : vector<2x32xf32>
    %366 = arith.mulf %361, %365 : vector<2x32xf32>
    %c1_150 = arith.constant 1 : index
    %c0_151 = arith.constant 0 : index
    %c0_152 = arith.constant 0 : index
    %367 = vector.load %arg5[%c1_150, %c0_151, %c0_152] : memref<2x32x128xf32, #tpu.memory_space<vmem>>, vector<1x32x128xf32>
    %368 = vector.shape_cast %367 : vector<1x32x128xf32> to vector<32x128xf32>
    %cst_153 = arith.constant dense<0.000000e+00> : vector<2x128xf32>
    %369 = tpu.matmul %366, %368, %cst_153 {dimension_numbers = #tpu.dot_dimension_numbers<[1], [0], [0], [1], [0, 0, 1, 1], [], []>} : vector<2x32xf32>, vector<32x128xf32>, vector<2x128xf32> -> vector<2x128xf32>
    %c1_154 = arith.constant 1 : index
    %c0_155 = arith.constant 0 : index
    %c0_156 = arith.constant 0 : index
    %370 = vector.load %arg6[%c1_154, %c0_155, %c0_156] : memref<2x32x128xf32, #tpu.memory_space<vmem>>, vector<1x32x128xf32>
    %371 = vector.shape_cast %370 : vector<1x32x128xf32> to vector<32x128xf32>
    %cst_157 = arith.constant dense<0.000000e+00> : vector<2x128xf32>
    %372 = tpu.matmul %293, %371, %cst_157 {dimension_numbers = #tpu.dot_dimension_numbers<[1], [0], [0], [1], [0, 0, 1, 1], [], []>} : vector<2x32xf32>, vector<32x128xf32>, vector<2x128xf32> -> vector<2x128xf32>
    %373 = arith.addf %369, %372 : vector<2x128xf32>
    %c1_158 = arith.constant 1 : index
    %c0_159 = arith.constant 0 : index
    %c0_160 = arith.constant 0 : index
    %374 = vector.load %arg7[%c1_158, %c0_159, %c0_160] : memref<2x1x128xf32, #tpu.memory_space<vmem>>, vector<1x1x128xf32>
    %375 = vector.shape_cast %374 : vector<1x1x128xf32> to vector<1x128xf32>
    %376 = vector.broadcast %375 : vector<1x128xf32> to vector<2x128xf32>
    %377 = arith.addf %373, %376 : vector<2x128xf32>
    %cst_161 = arith.constant 5.000000e-01 : f32
    %378 = vector.broadcast %cst_161 : f32 to vector<2x128xf32>
    %379 = arith.mulf %378, %377 : vector<2x128xf32>
    %380 = arith.select %7, %377, %379 : vector<2x128xi1>, vector<2x128xf32>
    %381 = math.tanh %380 : vector<2x128xf32>
    %cst_162 = arith.constant 5.000000e-01 : f32
    %382 = vector.broadcast %cst_162 : f32 to vector<2x128xf32>
    %383 = arith.mulf %382, %381 : vector<2x128xf32>
    %cst_163 = arith.constant 5.000000e-01 : f32
    %384 = vector.broadcast %cst_163 : f32 to vector<2x128xf32>
    %385 = arith.addf %383, %384 : vector<2x128xf32>
    %386 = arith.select %7, %381, %385 : vector<2x128xi1>, vector<2x128xf32>
    %387 = vector.extract_strided_slice %386 {offsets = [0, 0], sizes = [2, 32], strides = [1, 1]} : vector<2x128xf32> to vector<2x32xf32>
    %388 = vector.extract_strided_slice %386 {offsets = [0, 32], sizes = [2, 32], strides = [1, 1]} : vector<2x128xf32> to vector<2x32xf32>
    %389 = vector.extract_strided_slice %386 {offsets = [0, 64], sizes = [2, 32], strides = [1, 1]} : vector<2x128xf32> to vector<2x32xf32>
    %390 = vector.extract_strided_slice %386 {offsets = [0, 96], sizes = [2, 32], strides = [1, 1]} : vector<2x128xf32> to vector<2x32xf32>
    %391 = arith.mulf %388, %291 : vector<2x32xf32>
    %392 = arith.mulf %387, %389 : vector<2x32xf32>
    %393 = arith.addf %391, %392 : vector<2x32xf32>
    %394 = math.tanh %393 : vector<2x32xf32>
    %395 = arith.mulf %390, %394 : vector<2x32xf32>
    %c0_164 = arith.constant 0 : index
    %c0_165 = arith.constant 0 : index
    %396 = vector.load %arg8[%c0_164, %c0_165] : memref<32x128xf32, #tpu.memory_space<vmem>>, vector<32x128xf32>
    %cst_166 = arith.constant dense<0.000000e+00> : vector<2x128xf32>
    %397 = tpu.matmul %395, %396, %cst_166 {dimension_numbers = #tpu.dot_dimension_numbers<[1], [0], [0], [1], [0, 0, 1, 1], [], []>} : vector<2x32xf32>, vector<32x128xf32>, vector<2x128xf32> -> vector<2x128xf32>
    %c6_167 = arith.constant 6 : index
    %c0_168 = arith.constant 0 : index
    %398 = vector.load %arg9[%c6_167, %c0_168] : memref<16x128xf32, #tpu.memory_space<vmem>>, vector<2x128xf32>
    tpu.vector_store %arg9[%c6_167, %c0_168], %397 {strides = array<i32>} : memref<16x128xf32, #tpu.memory_space<vmem>>, vector<2x128xf32>,
    %c8 = arith.constant 8 : index
    %399 = memref.load %arg1[%c8] : memref<16xi32, #tpu.memory_space<smem>>
    %c0_i32_169 = arith.constant 0 : i32
    %400 = vector.broadcast %c0_i32_169 : i32 to vector<2x128xi32>
    %401 = arith.cmpi eq, %1, %400 : vector<2x128xi32>
    %402 = vector.broadcast %399 : i32 to vector<2x128xi32>
    %403 = arith.cmpi eq, %0, %402 : vector<2x128xi32>
    %404 = arith.extui %403 : vector<2x128xi1> to vector<2x128xi32>
    %405 = arith.sitofp %404 : vector<2x128xi32> to vector<2x128xf32>
    %406 = arith.select %401, %405, %8 : vector<2x128xi1>, vector<2x128xf32>
    %c9 = arith.constant 9 : index
    %407 = memref.load %arg1[%c9] : memref<16xi32, #tpu.memory_space<smem>>
    %c1_i32_170 = arith.constant 1 : i32
    %408 = vector.broadcast %c1_i32_170 : i32 to vector<2x128xi32>
    %409 = arith.cmpi eq, %1, %408 : vector<2x128xi32>
    %410 = vector.broadcast %407 : i32 to vector<2x128xi32>
    %411 = arith.cmpi eq, %0, %410 : vector<2x128xi32>
    %412 = arith.extui %411 : vector<2x128xi1> to vector<2x128xi32>
    %413 = arith.sitofp %412 : vector<2x128xi32> to vector<2x128xf32>
    %414 = arith.select %409, %413, %406 : vector<2x128xi1>, vector<2x128xf32>
    %c64_i32_171 = arith.constant 64 : i32
    %415 = vector.broadcast %c64_i32_171 : i32 to vector<2x128xi32>
    %416 = arith.cmpi slt, %0, %415 : vector<2x128xi32>
    %cst_172 = arith.constant -1.000000e+30 : f32
    %417 = vector.broadcast %cst_172 : f32 to vector<2x128xf32>
    %418 = arith.select %416, %397, %417 : vector<2x128xi1>, vector<2x128xf32>
    %cst_173 = arith.constant dense<0xFF800000> : vector<2xf32>
    %419 = vector.multi_reduction <maximumf>, %418, %cst_173 [1] : vector<2x128xf32> to vector<2xf32>
    %420 = vector.shape_cast %419 : vector<2xf32> to vector<2x1xf32>
    %421 = vector.broadcast %420 : vector<2x1xf32> to vector<2x128xf32>
    %422 = arith.cmpf oge, %418, %421 : vector<2x128xf32>
    %c128_i32_174 = arith.constant 128 : i32
    %423 = vector.broadcast %c128_i32_174 : i32 to vector<2x128xi32>
    %424 = arith.select %422, %0, %423 : vector<2x128xi1>, vector<2x128xi32>
    %cst_175 = arith.constant dense<2147483647> : vector<2xi32>
    %425 = vector.multi_reduction <minsi>, %424, %cst_175 [1] : vector<2x128xi32> to vector<2xi32>
    %426 = vector.shape_cast %425 : vector<2xi32> to vector<2x1xi32>
    %427 = vector.broadcast %426 : vector<2x1xi32> to vector<2x128xi32>
    %428 = arith.cmpi eq, %0, %427 : vector<2x128xi32>
    %429 = arith.extui %428 : vector<2x128xi1> to vector<2x128xi32>
    %430 = arith.sitofp %429 : vector<2x128xi32> to vector<2x128xf32>
    %c4_176 = arith.constant 4 : index
    %431 = memref.load %arg0[%c4_176] : memref<8xi32, #tpu.memory_space<smem>>
    %c0_i32_177 = arith.constant 0 : i32
    %432 = arith.cmpi ne, %431, %c0_i32_177 : i32
    %433 = arith.extui %432 : i1 to i32
    %434 = arith.sitofp %433 : i32 to f32
    %435 = vector.broadcast %434 : f32 to vector<2x128xf32>
    %436 = arith.mulf %435, %414 : vector<2x128xf32>
    %cst_178 = arith.constant 1.000000e+00 : f32
    %437 = arith.subf %cst_178, %434 : f32
    %438 = vector.broadcast %437 : f32 to vector<2x128xf32>
    %439 = arith.mulf %438, %430 : vector<2x128xf32>
    %440 = arith.addf %436, %439 : vector<2x128xf32>
    %c0_179 = arith.constant 0 : index
    %c0_180 = arith.constant 0 : index
    %441 = vector.load %arg4[%c0_179, %c0_180] : memref<128x128xf32, #tpu.memory_space<vmem>>, vector<128x128xf32>
    %cst_181 = arith.constant dense<0.000000e+00> : vector<2x128xf32>
    %442 = tpu.matmul %440, %441, %cst_181 {dimension_numbers = #tpu.dot_dimension_numbers<[1], [0], [0], [1], [0, 0, 1, 1], [], []>} : vector<2x128xf32>, vector<128x128xf32>, vector<2x128xf32> -> vector<2x128xf32>
    %c0_182 = arith.constant 0 : index
    %c0_183 = arith.constant 0 : index
    %c0_184 = arith.constant 0 : index
    %443 = vector.load %arg6[%c0_182, %c0_183, %c0_184] : memref<2x32x128xf32, #tpu.memory_space<vmem>>, vector<1x32x128xf32>
    %444 = vector.shape_cast %443 : vector<1x32x128xf32> to vector<32x128xf32>
    %cst_185 = arith.constant dense<0.000000e+00> : vector<2x128xf32>
    %445 = tpu.matmul %366, %444, %cst_185 {dimension_numbers = #tpu.dot_dimension_numbers<[1], [0], [0], [1], [0, 0, 1, 1], [], []>} : vector<2x32xf32>, vector<32x128xf32>, vector<2x128xf32> -> vector<2x128xf32>
    %446 = arith.addf %442, %445 : vector<2x128xf32>
    %c0_186 = arith.constant 0 : index
    %c0_187 = arith.constant 0 : index
    %c0_188 = arith.constant 0 : index
    %447 = vector.load %arg7[%c0_186, %c0_187, %c0_188] : memref<2x1x128xf32, #tpu.memory_space<vmem>>, vector<1x1x128xf32>
    %448 = vector.shape_cast %447 : vector<1x1x128xf32> to vector<1x128xf32>
    %449 = vector.broadcast %448 : vector<1x128xf32> to vector<2x128xf32>
    %450 = arith.addf %446, %449 : vector<2x128xf32>
    %cst_189 = arith.constant 5.000000e-01 : f32
    %451 = vector.broadcast %cst_189 : f32 to vector<2x128xf32>
    %452 = arith.mulf %451, %450 : vector<2x128xf32>
    %453 = arith.select %7, %450, %452 : vector<2x128xi1>, vector<2x128xf32>
    %454 = math.tanh %453 : vector<2x128xf32>
    %cst_190 = arith.constant 5.000000e-01 : f32
    %455 = vector.broadcast %cst_190 : f32 to vector<2x128xf32>
    %456 = arith.mulf %455, %454 : vector<2x128xf32>
    %cst_191 = arith.constant 5.000000e-01 : f32
    %457 = vector.broadcast %cst_191 : f32 to vector<2x128xf32>
    %458 = arith.addf %456, %457 : vector<2x128xf32>
    %459 = arith.select %7, %454, %458 : vector<2x128xi1>, vector<2x128xf32>
    %460 = vector.extract_strided_slice %459 {offsets = [0, 0], sizes = [2, 32], strides = [1, 1]} : vector<2x128xf32> to vector<2x32xf32>
    %461 = vector.extract_strided_slice %459 {offsets = [0, 32], sizes = [2, 32], strides = [1, 1]} : vector<2x128xf32> to vector<2x32xf32>
    %462 = vector.extract_strided_slice %459 {offsets = [0, 64], sizes = [2, 32], strides = [1, 1]} : vector<2x128xf32> to vector<2x32xf32>
    %463 = vector.extract_strided_slice %459 {offsets = [0, 96], sizes = [2, 32], strides = [1, 1]} : vector<2x128xf32> to vector<2x32xf32>
    %464 = arith.mulf %461, %364 : vector<2x32xf32>
    %465 = arith.mulf %460, %462 : vector<2x32xf32>
    %466 = arith.addf %464, %465 : vector<2x32xf32>
    %467 = math.tanh %466 : vector<2x32xf32>
    %468 = arith.mulf %463, %467 : vector<2x32xf32>
    %c1_192 = arith.constant 1 : index
    %c0_193 = arith.constant 0 : index
    %c0_194 = arith.constant 0 : index
    %469 = vector.load %arg5[%c1_192, %c0_193, %c0_194] : memref<2x32x128xf32, #tpu.memory_space<vmem>>, vector<1x32x128xf32>
    %470 = vector.shape_cast %469 : vector<1x32x128xf32> to vector<32x128xf32>
    %cst_195 = arith.constant dense<0.000000e+00> : vector<2x128xf32>
    %471 = tpu.matmul %468, %470, %cst_195 {dimension_numbers = #tpu.dot_dimension_numbers<[1], [0], [0], [1], [0, 0, 1, 1], [], []>} : vector<2x32xf32>, vector<32x128xf32>, vector<2x128xf32> -> vector<2x128xf32>
    %c1_196 = arith.constant 1 : index
    %c0_197 = arith.constant 0 : index
    %c0_198 = arith.constant 0 : index
    %472 = vector.load %arg6[%c1_196, %c0_197, %c0_198] : memref<2x32x128xf32, #tpu.memory_space<vmem>>, vector<1x32x128xf32>
    %473 = vector.shape_cast %472 : vector<1x32x128xf32> to vector<32x128xf32>
    %cst_199 = arith.constant dense<0.000000e+00> : vector<2x128xf32>
    %474 = tpu.matmul %395, %473, %cst_199 {dimension_numbers = #tpu.dot_dimension_numbers<[1], [0], [0], [1], [0, 0, 1, 1], [], []>} : vector<2x32xf32>, vector<32x128xf32>, vector<2x128xf32> -> vector<2x128xf32>
    %475 = arith.addf %471, %474 : vector<2x128xf32>
    %c1_200 = arith.constant 1 : index
    %c0_201 = arith.constant 0 : index
    %c0_202 = arith.constant 0 : index
    %476 = vector.load %arg7[%c1_200, %c0_201, %c0_202] : memref<2x1x128xf32, #tpu.memory_space<vmem>>, vector<1x1x128xf32>
    %477 = vector.shape_cast %476 : vector<1x1x128xf32> to vector<1x128xf32>
    %478 = vector.broadcast %477 : vector<1x128xf32> to vector<2x128xf32>
    %479 = arith.addf %475, %478 : vector<2x128xf32>
    %cst_203 = arith.constant 5.000000e-01 : f32
    %480 = vector.broadcast %cst_203 : f32 to vector<2x128xf32>
    %481 = arith.mulf %480, %479 : vector<2x128xf32>
    %482 = arith.select %7, %479, %481 : vector<2x128xi1>, vector<2x128xf32>
    %483 = math.tanh %482 : vector<2x128xf32>
    %cst_204 = arith.constant 5.000000e-01 : f32
    %484 = vector.broadcast %cst_204 : f32 to vector<2x128xf32>
    %485 = arith.mulf %484, %483 : vector<2x128xf32>
    %cst_205 = arith.constant 5.000000e-01 : f32
    %486 = vector.broadcast %cst_205 : f32 to vector<2x128xf32>
    %487 = arith.addf %485, %486 : vector<2x128xf32>
    %488 = arith.select %7, %483, %487 : vector<2x128xi1>, vector<2x128xf32>
    %489 = vector.extract_strided_slice %488 {offsets = [0, 0], sizes = [2, 32], strides = [1, 1]} : vector<2x128xf32> to vector<2x32xf32>
    %490 = vector.extract_strided_slice %488 {offsets = [0, 32], sizes = [2, 32], strides = [1, 1]} : vector<2x128xf32> to vector<2x32xf32>
    %491 = vector.extract_strided_slice %488 {offsets = [0, 64], sizes = [2, 32], strides = [1, 1]} : vector<2x128xf32> to vector<2x32xf32>
    %492 = vector.extract_strided_slice %488 {offsets = [0, 96], sizes = [2, 32], strides = [1, 1]} : vector<2x128xf32> to vector<2x32xf32>
    %493 = arith.mulf %490, %393 : vector<2x32xf32>
    %494 = arith.mulf %489, %491 : vector<2x32xf32>
    %495 = arith.addf %493, %494 : vector<2x32xf32>
    %496 = math.tanh %495 : vector<2x32xf32>
    %497 = arith.mulf %492, %496 : vector<2x32xf32>
    %c0_206 = arith.constant 0 : index
    %c0_207 = arith.constant 0 : index
    %498 = vector.load %arg8[%c0_206, %c0_207] : memref<32x128xf32, #tpu.memory_space<vmem>>, vector<32x128xf32>
    %cst_208 = arith.constant dense<0.000000e+00> : vector<2x128xf32>
    %499 = tpu.matmul %497, %498, %cst_208 {dimension_numbers = #tpu.dot_dimension_numbers<[1], [0], [0], [1], [0, 0, 1, 1], [], []>} : vector<2x32xf32>, vector<32x128xf32>, vector<2x128xf32> -> vector<2x128xf32>
    %c8_209 = arith.constant 8 : index
    %c0_210 = arith.constant 0 : index
    %500 = vector.load %arg9[%c8_209, %c0_210] : memref<16x128xf32, #tpu.memory_space<vmem>>, vector<2x128xf32>
    tpu.vector_store %arg9[%c8_209, %c0_210], %499 {strides = array<i32>} : memref<16x128xf32, #tpu.memory_space<vmem>>, vector<2x128xf32>,
    %c10 = arith.constant 10 : index
    %501 = memref.load %arg1[%c10] : memref<16xi32, #tpu.memory_space<smem>>
    %c0_i32_211 = arith.constant 0 : i32
    %502 = vector.broadcast %c0_i32_211 : i32 to vector<2x128xi32>
    %503 = arith.cmpi eq, %1, %502 : vector<2x128xi32>
    %504 = vector.broadcast %501 : i32 to vector<2x128xi32>
    %505 = arith.cmpi eq, %0, %504 : vector<2x128xi32>
    %506 = arith.extui %505 : vector<2x128xi1> to vector<2x128xi32>
    %507 = arith.sitofp %506 : vector<2x128xi32> to vector<2x128xf32>
    %508 = arith.select %503, %507, %8 : vector<2x128xi1>, vector<2x128xf32>
    %c11 = arith.constant 11 : index
    %509 = memref.load %arg1[%c11] : memref<16xi32, #tpu.memory_space<smem>>
    %c1_i32_212 = arith.constant 1 : i32
    %510 = vector.broadcast %c1_i32_212 : i32 to vector<2x128xi32>
    %511 = arith.cmpi eq, %1, %510 : vector<2x128xi32>
    %512 = vector.broadcast %509 : i32 to vector<2x128xi32>
    %513 = arith.cmpi eq, %0, %512 : vector<2x128xi32>
    %514 = arith.extui %513 : vector<2x128xi1> to vector<2x128xi32>
    %515 = arith.sitofp %514 : vector<2x128xi32> to vector<2x128xf32>
    %516 = arith.select %511, %515, %508 : vector<2x128xi1>, vector<2x128xf32>
    %c64_i32_213 = arith.constant 64 : i32
    %517 = vector.broadcast %c64_i32_213 : i32 to vector<2x128xi32>
    %518 = arith.cmpi slt, %0, %517 : vector<2x128xi32>
    %cst_214 = arith.constant -1.000000e+30 : f32
    %519 = vector.broadcast %cst_214 : f32 to vector<2x128xf32>
    %520 = arith.select %518, %499, %519 : vector<2x128xi1>, vector<2x128xf32>
    %cst_215 = arith.constant dense<0xFF800000> : vector<2xf32>
    %521 = vector.multi_reduction <maximumf>, %520, %cst_215 [1] : vector<2x128xf32> to vector<2xf32>
    %522 = vector.shape_cast %521 : vector<2xf32> to vector<2x1xf32>
    %523 = vector.broadcast %522 : vector<2x1xf32> to vector<2x128xf32>
    %524 = arith.cmpf oge, %520, %523 : vector<2x128xf32>
    %c128_i32_216 = arith.constant 128 : i32
    %525 = vector.broadcast %c128_i32_216 : i32 to vector<2x128xi32>
    %526 = arith.select %524, %0, %525 : vector<2x128xi1>, vector<2x128xi32>
    %cst_217 = arith.constant dense<2147483647> : vector<2xi32>
    %527 = vector.multi_reduction <minsi>, %526, %cst_217 [1] : vector<2x128xi32> to vector<2xi32>
    %528 = vector.shape_cast %527 : vector<2xi32> to vector<2x1xi32>
    %529 = vector.broadcast %528 : vector<2x1xi32> to vector<2x128xi32>
    %530 = arith.cmpi eq, %0, %529 : vector<2x128xi32>
    %531 = arith.extui %530 : vector<2x128xi1> to vector<2x128xi32>
    %532 = arith.sitofp %531 : vector<2x128xi32> to vector<2x128xf32>
    %c5_218 = arith.constant 5 : index
    %533 = memref.load %arg0[%c5_218] : memref<8xi32, #tpu.memory_space<smem>>
    %c0_i32_219 = arith.constant 0 : i32
    %534 = arith.cmpi ne, %533, %c0_i32_219 : i32
    %535 = arith.extui %534 : i1 to i32
    %536 = arith.sitofp %535 : i32 to f32
    %537 = vector.broadcast %536 : f32 to vector<2x128xf32>
    %538 = arith.mulf %537, %516 : vector<2x128xf32>
    %cst_220 = arith.constant 1.000000e+00 : f32
    %539 = arith.subf %cst_220, %536 : f32
    %540 = vector.broadcast %539 : f32 to vector<2x128xf32>
    %541 = arith.mulf %540, %532 : vector<2x128xf32>
    %542 = arith.addf %538, %541 : vector<2x128xf32>
    %c0_221 = arith.constant 0 : index
    %c0_222 = arith.constant 0 : index
    %543 = vector.load %arg4[%c0_221, %c0_222] : memref<128x128xf32, #tpu.memory_space<vmem>>, vector<128x128xf32>
    %cst_223 = arith.constant dense<0.000000e+00> : vector<2x128xf32>
    %544 = tpu.matmul %542, %543, %cst_223 {dimension_numbers = #tpu.dot_dimension_numbers<[1], [0], [0], [1], [0, 0, 1, 1], [], []>} : vector<2x128xf32>, vector<128x128xf32>, vector<2x128xf32> -> vector<2x128xf32>
    %c0_224 = arith.constant 0 : index
    %c0_225 = arith.constant 0 : index
    %c0_226 = arith.constant 0 : index
    %545 = vector.load %arg6[%c0_224, %c0_225, %c0_226] : memref<2x32x128xf32, #tpu.memory_space<vmem>>, vector<1x32x128xf32>
    %546 = vector.shape_cast %545 : vector<1x32x128xf32> to vector<32x128xf32>
    %cst_227 = arith.constant dense<0.000000e+00> : vector<2x128xf32>
    %547 = tpu.matmul %468, %546, %cst_227 {dimension_numbers = #tpu.dot_dimension_numbers<[1], [0], [0], [1], [0, 0, 1, 1], [], []>} : vector<2x32xf32>, vector<32x128xf32>, vector<2x128xf32> -> vector<2x128xf32>
    %548 = arith.addf %544, %547 : vector<2x128xf32>
    %c0_228 = arith.constant 0 : index
    %c0_229 = arith.constant 0 : index
    %c0_230 = arith.constant 0 : index
    %549 = vector.load %arg7[%c0_228, %c0_229, %c0_230] : memref<2x1x128xf32, #tpu.memory_space<vmem>>, vector<1x1x128xf32>
    %550 = vector.shape_cast %549 : vector<1x1x128xf32> to vector<1x128xf32>
    %551 = vector.broadcast %550 : vector<1x128xf32> to vector<2x128xf32>
    %552 = arith.addf %548, %551 : vector<2x128xf32>
    %cst_231 = arith.constant 5.000000e-01 : f32
    %553 = vector.broadcast %cst_231 : f32 to vector<2x128xf32>
    %554 = arith.mulf %553, %552 : vector<2x128xf32>
    %555 = arith.select %7, %552, %554 : vector<2x128xi1>, vector<2x128xf32>
    %556 = math.tanh %555 : vector<2x128xf32>
    %cst_232 = arith.constant 5.000000e-01 : f32
    %557 = vector.broadcast %cst_232 : f32 to vector<2x128xf32>
    %558 = arith.mulf %557, %556 : vector<2x128xf32>
    %cst_233 = arith.constant 5.000000e-01 : f32
    %559 = vector.broadcast %cst_233 : f32 to vector<2x128xf32>
    %560 = arith.addf %558, %559 : vector<2x128xf32>
    %561 = arith.select %7, %556, %560 : vector<2x128xi1>, vector<2x128xf32>
    %562 = vector.extract_strided_slice %561 {offsets = [0, 0], sizes = [2, 32], strides = [1, 1]} : vector<2x128xf32> to vector<2x32xf32>
    %563 = vector.extract_strided_slice %561 {offsets = [0, 32], sizes = [2, 32], strides = [1, 1]} : vector<2x128xf32> to vector<2x32xf32>
    %564 = vector.extract_strided_slice %561 {offsets = [0, 64], sizes = [2, 32], strides = [1, 1]} : vector<2x128xf32> to vector<2x32xf32>
    %565 = vector.extract_strided_slice %561 {offsets = [0, 96], sizes = [2, 32], strides = [1, 1]} : vector<2x128xf32> to vector<2x32xf32>
    %566 = arith.mulf %563, %466 : vector<2x32xf32>
    %567 = arith.mulf %562, %564 : vector<2x32xf32>
    %568 = arith.addf %566, %567 : vector<2x32xf32>
    %569 = math.tanh %568 : vector<2x32xf32>
    %570 = arith.mulf %565, %569 : vector<2x32xf32>
    %c1_234 = arith.constant 1 : index
    %c0_235 = arith.constant 0 : index
    %c0_236 = arith.constant 0 : index
    %571 = vector.load %arg5[%c1_234, %c0_235, %c0_236] : memref<2x32x128xf32, #tpu.memory_space<vmem>>, vector<1x32x128xf32>
    %572 = vector.shape_cast %571 : vector<1x32x128xf32> to vector<32x128xf32>
    %cst_237 = arith.constant dense<0.000000e+00> : vector<2x128xf32>
    %573 = tpu.matmul %570, %572, %cst_237 {dimension_numbers = #tpu.dot_dimension_numbers<[1], [0], [0], [1], [0, 0, 1, 1], [], []>} : vector<2x32xf32>, vector<32x128xf32>, vector<2x128xf32> -> vector<2x128xf32>
    %c1_238 = arith.constant 1 : index
    %c0_239 = arith.constant 0 : index
    %c0_240 = arith.constant 0 : index
    %574 = vector.load %arg6[%c1_238, %c0_239, %c0_240] : memref<2x32x128xf32, #tpu.memory_space<vmem>>, vector<1x32x128xf32>
    %575 = vector.shape_cast %574 : vector<1x32x128xf32> to vector<32x128xf32>
    %cst_241 = arith.constant dense<0.000000e+00> : vector<2x128xf32>
    %576 = tpu.matmul %497, %575, %cst_241 {dimension_numbers = #tpu.dot_dimension_numbers<[1], [0], [0], [1], [0, 0, 1, 1], [], []>} : vector<2x32xf32>, vector<32x128xf32>, vector<2x128xf32> -> vector<2x128xf32>
    %577 = arith.addf %573, %576 : vector<2x128xf32>
    %c1_242 = arith.constant 1 : index
    %c0_243 = arith.constant 0 : index
    %c0_244 = arith.constant 0 : index
    %578 = vector.load %arg7[%c1_242, %c0_243, %c0_244] : memref<2x1x128xf32, #tpu.memory_space<vmem>>, vector<1x1x128xf32>
    %579 = vector.shape_cast %578 : vector<1x1x128xf32> to vector<1x128xf32>
    %580 = vector.broadcast %579 : vector<1x128xf32> to vector<2x128xf32>
    %581 = arith.addf %577, %580 : vector<2x128xf32>
    %cst_245 = arith.constant 5.000000e-01 : f32
    %582 = vector.broadcast %cst_245 : f32 to vector<2x128xf32>
    %583 = arith.mulf %582, %581 : vector<2x128xf32>
    %584 = arith.select %7, %581, %583 : vector<2x128xi1>, vector<2x128xf32>
    %585 = math.tanh %584 : vector<2x128xf32>
    %cst_246 = arith.constant 5.000000e-01 : f32
    %586 = vector.broadcast %cst_246 : f32 to vector<2x128xf32>
    %587 = arith.mulf %586, %585 : vector<2x128xf32>
    %cst_247 = arith.constant 5.000000e-01 : f32
    %588 = vector.broadcast %cst_247 : f32 to vector<2x128xf32>
    %589 = arith.addf %587, %588 : vector<2x128xf32>
    %590 = arith.select %7, %585, %589 : vector<2x128xi1>, vector<2x128xf32>
    %591 = vector.extract_strided_slice %590 {offsets = [0, 0], sizes = [2, 32], strides = [1, 1]} : vector<2x128xf32> to vector<2x32xf32>
    %592 = vector.extract_strided_slice %590 {offsets = [0, 32], sizes = [2, 32], strides = [1, 1]} : vector<2x128xf32> to vector<2x32xf32>
    %593 = vector.extract_strided_slice %590 {offsets = [0, 64], sizes = [2, 32], strides = [1, 1]} : vector<2x128xf32> to vector<2x32xf32>
    %594 = vector.extract_strided_slice %590 {offsets = [0, 96], sizes = [2, 32], strides = [1, 1]} : vector<2x128xf32> to vector<2x32xf32>
    %595 = arith.mulf %592, %495 : vector<2x32xf32>
    %596 = arith.mulf %591, %593 : vector<2x32xf32>
    %597 = arith.addf %595, %596 : vector<2x32xf32>
    %598 = math.tanh %597 : vector<2x32xf32>
    %599 = arith.mulf %594, %598 : vector<2x32xf32>
    %c0_248 = arith.constant 0 : index
    %c0_249 = arith.constant 0 : index
    %600 = vector.load %arg8[%c0_248, %c0_249] : memref<32x128xf32, #tpu.memory_space<vmem>>, vector<32x128xf32>
    %cst_250 = arith.constant dense<0.000000e+00> : vector<2x128xf32>
    %601 = tpu.matmul %599, %600, %cst_250 {dimension_numbers = #tpu.dot_dimension_numbers<[1], [0], [0], [1], [0, 0, 1, 1], [], []>} : vector<2x32xf32>, vector<32x128xf32>, vector<2x128xf32> -> vector<2x128xf32>
    %c10_251 = arith.constant 10 : index
    %c0_252 = arith.constant 0 : index
    %602 = vector.load %arg9[%c10_251, %c0_252] : memref<16x128xf32, #tpu.memory_space<vmem>>, vector<2x128xf32>
    tpu.vector_store %arg9[%c10_251, %c0_252], %601 {strides = array<i32>} : memref<16x128xf32, #tpu.memory_space<vmem>>, vector<2x128xf32>,
    %c12 = arith.constant 12 : index
    %603 = memref.load %arg1[%c12] : memref<16xi32, #tpu.memory_space<smem>>
    %c0_i32_253 = arith.constant 0 : i32
    %604 = vector.broadcast %c0_i32_253 : i32 to vector<2x128xi32>
    %605 = arith.cmpi eq, %1, %604 : vector<2x128xi32>
    %606 = vector.broadcast %603 : i32 to vector<2x128xi32>
    %607 = arith.cmpi eq, %0, %606 : vector<2x128xi32>
    %608 = arith.extui %607 : vector<2x128xi1> to vector<2x128xi32>
    %609 = arith.sitofp %608 : vector<2x128xi32> to vector<2x128xf32>
    %610 = arith.select %605, %609, %8 : vector<2x128xi1>, vector<2x128xf32>
    %c13 = arith.constant 13 : index
    %611 = memref.load %arg1[%c13] : memref<16xi32, #tpu.memory_space<smem>>
    %c1_i32_254 = arith.constant 1 : i32
    %612 = vector.broadcast %c1_i32_254 : i32 to vector<2x128xi32>
    %613 = arith.cmpi eq, %1, %612 : vector<2x128xi32>
    %614 = vector.broadcast %611 : i32 to vector<2x128xi32>
    %615 = arith.cmpi eq, %0, %614 : vector<2x128xi32>
    %616 = arith.extui %615 : vector<2x128xi1> to vector<2x128xi32>
    %617 = arith.sitofp %616 : vector<2x128xi32> to vector<2x128xf32>
    %618 = arith.select %613, %617, %610 : vector<2x128xi1>, vector<2x128xf32>
    %c64_i32_255 = arith.constant 64 : i32
    %619 = vector.broadcast %c64_i32_255 : i32 to vector<2x128xi32>
    %620 = arith.cmpi slt, %0, %619 : vector<2x128xi32>
    %cst_256 = arith.constant -1.000000e+30 : f32
    %621 = vector.broadcast %cst_256 : f32 to vector<2x128xf32>
    %622 = arith.select %620, %601, %621 : vector<2x128xi1>, vector<2x128xf32>
    %cst_257 = arith.constant dense<0xFF800000> : vector<2xf32>
    %623 = vector.multi_reduction <maximumf>, %622, %cst_257 [1] : vector<2x128xf32> to vector<2xf32>
    %624 = vector.shape_cast %623 : vector<2xf32> to vector<2x1xf32>
    %625 = vector.broadcast %624 : vector<2x1xf32> to vector<2x128xf32>
    %626 = arith.cmpf oge, %622, %625 : vector<2x128xf32>
    %c128_i32_258 = arith.constant 128 : i32
    %627 = vector.broadcast %c128_i32_258 : i32 to vector<2x128xi32>
    %628 = arith.select %626, %0, %627 : vector<2x128xi1>, vector<2x128xi32>
    %cst_259 = arith.constant dense<2147483647> : vector<2xi32>
    %629 = vector.multi_reduction <minsi>, %628, %cst_259 [1] : vector<2x128xi32> to vector<2xi32>
    %630 = vector.shape_cast %629 : vector<2xi32> to vector<2x1xi32>
    %631 = vector.broadcast %630 : vector<2x1xi32> to vector<2x128xi32>
    %632 = arith.cmpi eq, %0, %631 : vector<2x128xi32>
    %633 = arith.extui %632 : vector<2x128xi1> to vector<2x128xi32>
    %634 = arith.sitofp %633 : vector<2x128xi32> to vector<2x128xf32>
    %c6_260 = arith.constant 6 : index
    %635 = memref.load %arg0[%c6_260] : memref<8xi32, #tpu.memory_space<smem>>
    %c0_i32_261 = arith.constant 0 : i32
    %636 = arith.cmpi ne, %635, %c0_i32_261 : i32
    %637 = arith.extui %636 : i1 to i32
    %638 = arith.sitofp %637 : i32 to f32
    %639 = vector.broadcast %638 : f32 to vector<2x128xf32>
    %640 = arith.mulf %639, %618 : vector<2x128xf32>
    %cst_262 = arith.constant 1.000000e+00 : f32
    %641 = arith.subf %cst_262, %638 : f32
    %642 = vector.broadcast %641 : f32 to vector<2x128xf32>
    %643 = arith.mulf %642, %634 : vector<2x128xf32>
    %644 = arith.addf %640, %643 : vector<2x128xf32>
    %c0_263 = arith.constant 0 : index
    %c0_264 = arith.constant 0 : index
    %645 = vector.load %arg4[%c0_263, %c0_264] : memref<128x128xf32, #tpu.memory_space<vmem>>, vector<128x128xf32>
    %cst_265 = arith.constant dense<0.000000e+00> : vector<2x128xf32>
    %646 = tpu.matmul %644, %645, %cst_265 {dimension_numbers = #tpu.dot_dimension_numbers<[1], [0], [0], [1], [0, 0, 1, 1], [], []>} : vector<2x128xf32>, vector<128x128xf32>, vector<2x128xf32> -> vector<2x128xf32>
    %c0_266 = arith.constant 0 : index
    %c0_267 = arith.constant 0 : index
    %c0_268 = arith.constant 0 : index
    %647 = vector.load %arg6[%c0_266, %c0_267, %c0_268] : memref<2x32x128xf32, #tpu.memory_space<vmem>>, vector<1x32x128xf32>
    %648 = vector.shape_cast %647 : vector<1x32x128xf32> to vector<32x128xf32>
    %cst_269 = arith.constant dense<0.000000e+00> : vector<2x128xf32>
    %649 = tpu.matmul %570, %648, %cst_269 {dimension_numbers = #tpu.dot_dimension_numbers<[1], [0], [0], [1], [0, 0, 1, 1], [], []>} : vector<2x32xf32>, vector<32x128xf32>, vector<2x128xf32> -> vector<2x128xf32>
    %650 = arith.addf %646, %649 : vector<2x128xf32>
    %c0_270 = arith.constant 0 : index
    %c0_271 = arith.constant 0 : index
    %c0_272 = arith.constant 0 : index
    %651 = vector.load %arg7[%c0_270, %c0_271, %c0_272] : memref<2x1x128xf32, #tpu.memory_space<vmem>>, vector<1x1x128xf32>
    %652 = vector.shape_cast %651 : vector<1x1x128xf32> to vector<1x128xf32>
    %653 = vector.broadcast %652 : vector<1x128xf32> to vector<2x128xf32>
    %654 = arith.addf %650, %653 : vector<2x128xf32>
    %cst_273 = arith.constant 5.000000e-01 : f32
    %655 = vector.broadcast %cst_273 : f32 to vector<2x128xf32>
    %656 = arith.mulf %655, %654 : vector<2x128xf32>
    %657 = arith.select %7, %654, %656 : vector<2x128xi1>, vector<2x128xf32>
    %658 = math.tanh %657 : vector<2x128xf32>
    %cst_274 = arith.constant 5.000000e-01 : f32
    %659 = vector.broadcast %cst_274 : f32 to vector<2x128xf32>
    %660 = arith.mulf %659, %658 : vector<2x128xf32>
    %cst_275 = arith.constant 5.000000e-01 : f32
    %661 = vector.broadcast %cst_275 : f32 to vector<2x128xf32>
    %662 = arith.addf %660, %661 : vector<2x128xf32>
    %663 = arith.select %7, %658, %662 : vector<2x128xi1>, vector<2x128xf32>
    %664 = vector.extract_strided_slice %663 {offsets = [0, 0], sizes = [2, 32], strides = [1, 1]} : vector<2x128xf32> to vector<2x32xf32>
    %665 = vector.extract_strided_slice %663 {offsets = [0, 32], sizes = [2, 32], strides = [1, 1]} : vector<2x128xf32> to vector<2x32xf32>
    %666 = vector.extract_strided_slice %663 {offsets = [0, 64], sizes = [2, 32], strides = [1, 1]} : vector<2x128xf32> to vector<2x32xf32>
    %667 = vector.extract_strided_slice %663 {offsets = [0, 96], sizes = [2, 32], strides = [1, 1]} : vector<2x128xf32> to vector<2x32xf32>
    %668 = arith.mulf %665, %568 : vector<2x32xf32>
    %669 = arith.mulf %664, %666 : vector<2x32xf32>
    %670 = arith.addf %668, %669 : vector<2x32xf32>
    %671 = math.tanh %670 : vector<2x32xf32>
    %672 = arith.mulf %667, %671 : vector<2x32xf32>
    %c1_276 = arith.constant 1 : index
    %c0_277 = arith.constant 0 : index
    %c0_278 = arith.constant 0 : index
    %673 = vector.load %arg5[%c1_276, %c0_277, %c0_278] : memref<2x32x128xf32, #tpu.memory_space<vmem>>, vector<1x32x128xf32>
    %674 = vector.shape_cast %673 : vector<1x32x128xf32> to vector<32x128xf32>
    %cst_279 = arith.constant dense<0.000000e+00> : vector<2x128xf32>
    %675 = tpu.matmul %672, %674, %cst_279 {dimension_numbers = #tpu.dot_dimension_numbers<[1], [0], [0], [1], [0, 0, 1, 1], [], []>} : vector<2x32xf32>, vector<32x128xf32>, vector<2x128xf32> -> vector<2x128xf32>
    %c1_280 = arith.constant 1 : index
    %c0_281 = arith.constant 0 : index
    %c0_282 = arith.constant 0 : index
    %676 = vector.load %arg6[%c1_280, %c0_281, %c0_282] : memref<2x32x128xf32, #tpu.memory_space<vmem>>, vector<1x32x128xf32>
    %677 = vector.shape_cast %676 : vector<1x32x128xf32> to vector<32x128xf32>
    %cst_283 = arith.constant dense<0.000000e+00> : vector<2x128xf32>
    %678 = tpu.matmul %599, %677, %cst_283 {dimension_numbers = #tpu.dot_dimension_numbers<[1], [0], [0], [1], [0, 0, 1, 1], [], []>} : vector<2x32xf32>, vector<32x128xf32>, vector<2x128xf32> -> vector<2x128xf32>
    %679 = arith.addf %675, %678 : vector<2x128xf32>
    %c1_284 = arith.constant 1 : index
    %c0_285 = arith.constant 0 : index
    %c0_286 = arith.constant 0 : index
    %680 = vector.load %arg7[%c1_284, %c0_285, %c0_286] : memref<2x1x128xf32, #tpu.memory_space<vmem>>, vector<1x1x128xf32>
    %681 = vector.shape_cast %680 : vector<1x1x128xf32> to vector<1x128xf32>
    %682 = vector.broadcast %681 : vector<1x128xf32> to vector<2x128xf32>
    %683 = arith.addf %679, %682 : vector<2x128xf32>
    %cst_287 = arith.constant 5.000000e-01 : f32
    %684 = vector.broadcast %cst_287 : f32 to vector<2x128xf32>
    %685 = arith.mulf %684, %683 : vector<2x128xf32>
    %686 = arith.select %7, %683, %685 : vector<2x128xi1>, vector<2x128xf32>
    %687 = math.tanh %686 : vector<2x128xf32>
    %cst_288 = arith.constant 5.000000e-01 : f32
    %688 = vector.broadcast %cst_288 : f32 to vector<2x128xf32>
    %689 = arith.mulf %688, %687 : vector<2x128xf32>
    %cst_289 = arith.constant 5.000000e-01 : f32
    %690 = vector.broadcast %cst_289 : f32 to vector<2x128xf32>
    %691 = arith.addf %689, %690 : vector<2x128xf32>
    %692 = arith.select %7, %687, %691 : vector<2x128xi1>, vector<2x128xf32>
    %693 = vector.extract_strided_slice %692 {offsets = [0, 0], sizes = [2, 32], strides = [1, 1]} : vector<2x128xf32> to vector<2x32xf32>
    %694 = vector.extract_strided_slice %692 {offsets = [0, 32], sizes = [2, 32], strides = [1, 1]} : vector<2x128xf32> to vector<2x32xf32>
    %695 = vector.extract_strided_slice %692 {offsets = [0, 64], sizes = [2, 32], strides = [1, 1]} : vector<2x128xf32> to vector<2x32xf32>
    %696 = vector.extract_strided_slice %692 {offsets = [0, 96], sizes = [2, 32], strides = [1, 1]} : vector<2x128xf32> to vector<2x32xf32>
    %697 = arith.mulf %694, %597 : vector<2x32xf32>
    %698 = arith.mulf %693, %695 : vector<2x32xf32>
    %699 = arith.addf %697, %698 : vector<2x32xf32>
    %700 = math.tanh %699 : vector<2x32xf32>
    %701 = arith.mulf %696, %700 : vector<2x32xf32>
    %c0_290 = arith.constant 0 : index
    %c0_291 = arith.constant 0 : index
    %702 = vector.load %arg8[%c0_290, %c0_291] : memref<32x128xf32, #tpu.memory_space<vmem>>, vector<32x128xf32>
    %cst_292 = arith.constant dense<0.000000e+00> : vector<2x128xf32>
    %703 = tpu.matmul %701, %702, %cst_292 {dimension_numbers = #tpu.dot_dimension_numbers<[1], [0], [0], [1], [0, 0, 1, 1], [], []>} : vector<2x32xf32>, vector<32x128xf32>, vector<2x128xf32> -> vector<2x128xf32>
    %c12_293 = arith.constant 12 : index
    %c0_294 = arith.constant 0 : index
    %704 = vector.load %arg9[%c12_293, %c0_294] : memref<16x128xf32, #tpu.memory_space<vmem>>, vector<2x128xf32>
    tpu.vector_store %arg9[%c12_293, %c0_294], %703 {strides = array<i32>} : memref<16x128xf32, #tpu.memory_space<vmem>>, vector<2x128xf32>,
    %c14 = arith.constant 14 : index
    %705 = memref.load %arg1[%c14] : memref<16xi32, #tpu.memory_space<smem>>
    %c0_i32_295 = arith.constant 0 : i32
    %706 = vector.broadcast %c0_i32_295 : i32 to vector<2x128xi32>
    %707 = arith.cmpi eq, %1, %706 : vector<2x128xi32>
    %708 = vector.broadcast %705 : i32 to vector<2x128xi32>
    %709 = arith.cmpi eq, %0, %708 : vector<2x128xi32>
    %710 = arith.extui %709 : vector<2x128xi1> to vector<2x128xi32>
    %711 = arith.sitofp %710 : vector<2x128xi32> to vector<2x128xf32>
    %712 = arith.select %707, %711, %8 : vector<2x128xi1>, vector<2x128xf32>
    %c15 = arith.constant 15 : index
    %713 = memref.load %arg1[%c15] : memref<16xi32, #tpu.memory_space<smem>>
    %c1_i32_296 = arith.constant 1 : i32
    %714 = vector.broadcast %c1_i32_296 : i32 to vector<2x128xi32>
    %715 = arith.cmpi eq, %1, %714 : vector<2x128xi32>
    %716 = vector.broadcast %713 : i32 to vector<2x128xi32>
    %717 = arith.cmpi eq, %0, %716 : vector<2x128xi32>
    %718 = arith.extui %717 : vector<2x128xi1> to vector<2x128xi32>
    %719 = arith.sitofp %718 : vector<2x128xi32> to vector<2x128xf32>
    %720 = arith.select %715, %719, %712 : vector<2x128xi1>, vector<2x128xf32>
    %c64_i32_297 = arith.constant 64 : i32
    %721 = vector.broadcast %c64_i32_297 : i32 to vector<2x128xi32>
    %722 = arith.cmpi slt, %0, %721 : vector<2x128xi32>
    %cst_298 = arith.constant -1.000000e+30 : f32
    %723 = vector.broadcast %cst_298 : f32 to vector<2x128xf32>
    %724 = arith.select %722, %703, %723 : vector<2x128xi1>, vector<2x128xf32>
    %cst_299 = arith.constant dense<0xFF800000> : vector<2xf32>
    %725 = vector.multi_reduction <maximumf>, %724, %cst_299 [1] : vector<2x128xf32> to vector<2xf32>
    %726 = vector.shape_cast %725 : vector<2xf32> to vector<2x1xf32>
    %727 = vector.broadcast %726 : vector<2x1xf32> to vector<2x128xf32>
    %728 = arith.cmpf oge, %724, %727 : vector<2x128xf32>
    %c128_i32_300 = arith.constant 128 : i32
    %729 = vector.broadcast %c128_i32_300 : i32 to vector<2x128xi32>
    %730 = arith.select %728, %0, %729 : vector<2x128xi1>, vector<2x128xi32>
    %cst_301 = arith.constant dense<2147483647> : vector<2xi32>
    %731 = vector.multi_reduction <minsi>, %730, %cst_301 [1] : vector<2x128xi32> to vector<2xi32>
    %732 = vector.shape_cast %731 : vector<2xi32> to vector<2x1xi32>
    %733 = vector.broadcast %732 : vector<2x1xi32> to vector<2x128xi32>
    %734 = arith.cmpi eq, %0, %733 : vector<2x128xi32>
    %735 = arith.extui %734 : vector<2x128xi1> to vector<2x128xi32>
    %736 = arith.sitofp %735 : vector<2x128xi32> to vector<2x128xf32>
    %c7_302 = arith.constant 7 : index
    %737 = memref.load %arg0[%c7_302] : memref<8xi32, #tpu.memory_space<smem>>
    %c0_i32_303 = arith.constant 0 : i32
    %738 = arith.cmpi ne, %737, %c0_i32_303 : i32
    %739 = arith.extui %738 : i1 to i32
    %740 = arith.sitofp %739 : i32 to f32
    %741 = vector.broadcast %740 : f32 to vector<2x128xf32>
    %742 = arith.mulf %741, %720 : vector<2x128xf32>
    %cst_304 = arith.constant 1.000000e+00 : f32
    %743 = arith.subf %cst_304, %740 : f32
    %744 = vector.broadcast %743 : f32 to vector<2x128xf32>
    %745 = arith.mulf %744, %736 : vector<2x128xf32>
    %746 = arith.addf %742, %745 : vector<2x128xf32>
    %c0_305 = arith.constant 0 : index
    %c0_306 = arith.constant 0 : index
    %747 = vector.load %arg4[%c0_305, %c0_306] : memref<128x128xf32, #tpu.memory_space<vmem>>, vector<128x128xf32>
    %cst_307 = arith.constant dense<0.000000e+00> : vector<2x128xf32>
    %748 = tpu.matmul %746, %747, %cst_307 {dimension_numbers = #tpu.dot_dimension_numbers<[1], [0], [0], [1], [0, 0, 1, 1], [], []>} : vector<2x128xf32>, vector<128x128xf32>, vector<2x128xf32> -> vector<2x128xf32>
    %c0_308 = arith.constant 0 : index
    %c0_309 = arith.constant 0 : index
    %c0_310 = arith.constant 0 : index
    %749 = vector.load %arg6[%c0_308, %c0_309, %c0_310] : memref<2x32x128xf32, #tpu.memory_space<vmem>>, vector<1x32x128xf32>
    %750 = vector.shape_cast %749 : vector<1x32x128xf32> to vector<32x128xf32>
    %cst_311 = arith.constant dense<0.000000e+00> : vector<2x128xf32>
    %751 = tpu.matmul %672, %750, %cst_311 {dimension_numbers = #tpu.dot_dimension_numbers<[1], [0], [0], [1], [0, 0, 1, 1], [], []>} : vector<2x32xf32>, vector<32x128xf32>, vector<2x128xf32> -> vector<2x128xf32>
    %752 = arith.addf %748, %751 : vector<2x128xf32>
    %c0_312 = arith.constant 0 : index
    %c0_313 = arith.constant 0 : index
    %c0_314 = arith.constant 0 : index
    %753 = vector.load %arg7[%c0_312, %c0_313, %c0_314] : memref<2x1x128xf32, #tpu.memory_space<vmem>>, vector<1x1x128xf32>
    %754 = vector.shape_cast %753 : vector<1x1x128xf32> to vector<1x128xf32>
    %755 = vector.broadcast %754 : vector<1x128xf32> to vector<2x128xf32>
    %756 = arith.addf %752, %755 : vector<2x128xf32>
    %cst_315 = arith.constant 5.000000e-01 : f32
    %757 = vector.broadcast %cst_315 : f32 to vector<2x128xf32>
    %758 = arith.mulf %757, %756 : vector<2x128xf32>
    %759 = arith.select %7, %756, %758 : vector<2x128xi1>, vector<2x128xf32>
    %760 = math.tanh %759 : vector<2x128xf32>
    %cst_316 = arith.constant 5.000000e-01 : f32
    %761 = vector.broadcast %cst_316 : f32 to vector<2x128xf32>
    %762 = arith.mulf %761, %760 : vector<2x128xf32>
    %cst_317 = arith.constant 5.000000e-01 : f32
    %763 = vector.broadcast %cst_317 : f32 to vector<2x128xf32>
    %764 = arith.addf %762, %763 : vector<2x128xf32>
    %765 = arith.select %7, %760, %764 : vector<2x128xi1>, vector<2x128xf32>
    %766 = vector.extract_strided_slice %765 {offsets = [0, 0], sizes = [2, 32], strides = [1, 1]} : vector<2x128xf32> to vector<2x32xf32>
    %767 = vector.extract_strided_slice %765 {offsets = [0, 32], sizes = [2, 32], strides = [1, 1]} : vector<2x128xf32> to vector<2x32xf32>
    %768 = vector.extract_strided_slice %765 {offsets = [0, 64], sizes = [2, 32], strides = [1, 1]} : vector<2x128xf32> to vector<2x32xf32>
    %769 = vector.extract_strided_slice %765 {offsets = [0, 96], sizes = [2, 32], strides = [1, 1]} : vector<2x128xf32> to vector<2x32xf32>
    %770 = arith.mulf %767, %670 : vector<2x32xf32>
    %771 = arith.mulf %766, %768 : vector<2x32xf32>
    %772 = arith.addf %770, %771 : vector<2x32xf32>
    %773 = math.tanh %772 : vector<2x32xf32>
    %774 = arith.mulf %769, %773 : vector<2x32xf32>
    %c1_318 = arith.constant 1 : index
    %c0_319 = arith.constant 0 : index
    %c0_320 = arith.constant 0 : index
    %775 = vector.load %arg5[%c1_318, %c0_319, %c0_320] : memref<2x32x128xf32, #tpu.memory_space<vmem>>, vector<1x32x128xf32>
    %776 = vector.shape_cast %775 : vector<1x32x128xf32> to vector<32x128xf32>
    %cst_321 = arith.constant dense<0.000000e+00> : vector<2x128xf32>
    %777 = tpu.matmul %774, %776, %cst_321 {dimension_numbers = #tpu.dot_dimension_numbers<[1], [0], [0], [1], [0, 0, 1, 1], [], []>} : vector<2x32xf32>, vector<32x128xf32>, vector<2x128xf32> -> vector<2x128xf32>
    %c1_322 = arith.constant 1 : index
    %c0_323 = arith.constant 0 : index
    %c0_324 = arith.constant 0 : index
    %778 = vector.load %arg6[%c1_322, %c0_323, %c0_324] : memref<2x32x128xf32, #tpu.memory_space<vmem>>, vector<1x32x128xf32>
    %779 = vector.shape_cast %778 : vector<1x32x128xf32> to vector<32x128xf32>
    %cst_325 = arith.constant dense<0.000000e+00> : vector<2x128xf32>
    %780 = tpu.matmul %701, %779, %cst_325 {dimension_numbers = #tpu.dot_dimension_numbers<[1], [0], [0], [1], [0, 0, 1, 1], [], []>} : vector<2x32xf32>, vector<32x128xf32>, vector<2x128xf32> -> vector<2x128xf32>
    %781 = arith.addf %777, %780 : vector<2x128xf32>
    %c1_326 = arith.constant 1 : index
    %c0_327 = arith.constant 0 : index
    %c0_328 = arith.constant 0 : index
    %782 = vector.load %arg7[%c1_326, %c0_327, %c0_328] : memref<2x1x128xf32, #tpu.memory_space<vmem>>, vector<1x1x128xf32>
    %783 = vector.shape_cast %782 : vector<1x1x128xf32> to vector<1x128xf32>
    %784 = vector.broadcast %783 : vector<1x128xf32> to vector<2x128xf32>
    %785 = arith.addf %781, %784 : vector<2x128xf32>
    %cst_329 = arith.constant 5.000000e-01 : f32
    %786 = vector.broadcast %cst_329 : f32 to vector<2x128xf32>
    %787 = arith.mulf %786, %785 : vector<2x128xf32>
    %788 = arith.select %7, %785, %787 : vector<2x128xi1>, vector<2x128xf32>
    %789 = math.tanh %788 : vector<2x128xf32>
    %cst_330 = arith.constant 5.000000e-01 : f32
    %790 = vector.broadcast %cst_330 : f32 to vector<2x128xf32>
    %791 = arith.mulf %790, %789 : vector<2x128xf32>
    %cst_331 = arith.constant 5.000000e-01 : f32
    %792 = vector.broadcast %cst_331 : f32 to vector<2x128xf32>
    %793 = arith.addf %791, %792 : vector<2x128xf32>
    %794 = arith.select %7, %789, %793 : vector<2x128xi1>, vector<2x128xf32>
    %795 = vector.extract_strided_slice %794 {offsets = [0, 0], sizes = [2, 32], strides = [1, 1]} : vector<2x128xf32> to vector<2x32xf32>
    %796 = vector.extract_strided_slice %794 {offsets = [0, 32], sizes = [2, 32], strides = [1, 1]} : vector<2x128xf32> to vector<2x32xf32>
    %797 = vector.extract_strided_slice %794 {offsets = [0, 64], sizes = [2, 32], strides = [1, 1]} : vector<2x128xf32> to vector<2x32xf32>
    %798 = vector.extract_strided_slice %794 {offsets = [0, 96], sizes = [2, 32], strides = [1, 1]} : vector<2x128xf32> to vector<2x32xf32>
    %799 = arith.mulf %796, %699 : vector<2x32xf32>
    %800 = arith.mulf %795, %797 : vector<2x32xf32>
    %801 = arith.addf %799, %800 : vector<2x32xf32>
    %802 = math.tanh %801 : vector<2x32xf32>
    %803 = arith.mulf %798, %802 : vector<2x32xf32>
    %c0_332 = arith.constant 0 : index
    %c0_333 = arith.constant 0 : index
    %804 = vector.load %arg8[%c0_332, %c0_333] : memref<32x128xf32, #tpu.memory_space<vmem>>, vector<32x128xf32>
    %cst_334 = arith.constant dense<0.000000e+00> : vector<2x128xf32>
    %805 = tpu.matmul %803, %804, %cst_334 {dimension_numbers = #tpu.dot_dimension_numbers<[1], [0], [0], [1], [0, 0, 1, 1], [], []>} : vector<2x32xf32>, vector<32x128xf32>, vector<2x128xf32> -> vector<2x128xf32>
    %c14_335 = arith.constant 14 : index
    %c0_336 = arith.constant 0 : index
    %806 = vector.load %arg9[%c14_335, %c0_336] : memref<16x128xf32, #tpu.memory_space<vmem>>, vector<2x128xf32>
    tpu.vector_store %arg9[%c14_335, %c0_336], %805 {strides = array<i32>} : memref<16x128xf32, #tpu.memory_space<vmem>>, vector<2x128xf32>,
    return
  }
}

</mosaic_0001>

<llo_original>
// kernel: tpu_custom_call.1
$region0: #{tpu_custom_call.1}
  #allocation0 [shape = 'u32[]', space=smem, size = 0x4, offset = 0x4, fixed_abs, tag = 'smem constant byte address 0x4 - core index']
  #allocation1 [shape = 'u32[72,128]{1,0:T(1,128)}', space=vmem, size = 0x9000, scoped, tag = 'internal scratch']
  %s0 = inlined_call_operand.hbm [shape: s32[8], index: 0, kind: input, shape index: {}]
  %s1 = inlined_call_operand.hbm [shape: s32[16], index: 1, kind: input, shape index: {}]
  %s2 = inlined_call_operand.hbm [shape: f32[2,2,32], index: 2, kind: input, shape index: {}]
  %s3 = inlined_call_operand.hbm [shape: f32[2,2,32], index: 3, kind: input, shape index: {}]
  %s4 = inlined_call_operand.hbm [shape: f32[128,128], index: 4, kind: input, shape index: {}]
  %s5 = inlined_call_operand.hbm [shape: f32[2,32,128], index: 5, kind: input, shape index: {}]
  %s6 = inlined_call_operand.hbm [shape: f32[2,32,128], index: 6, kind: input, shape index: {}]
  %s7 = inlined_call_operand.vmem [shape: f32[2,1,128], index: 7, kind: input, shape index: {}]
  %s8 = inlined_call_operand.hbm [shape: f32[32,128], index: 8, kind: input, shape index: {}]
  %s9 = inlined_call_operand.hbm [shape: f32[16,128], index: 9, kind: output, shape index: {}]
  %s10 = sld [smem:[#allocation0]]
  $region78: #{tpu_custom_call.1} parent=0
    _
  %s12 = ssub.s32 1, %s10
  %s13 = scalar_select 0, %s12, %s10
  $region1: #{tpu_custom_call.1} parent=0
    #allocation2 [shape = 'u8[512]{0}', space=smem, size = 0x200, scoped, tag = 'input window, operand 0, single buffered']
    #allocation3 [shape = 's32[1]{0}', space=sflag, size = 0x4, scoped, tag = 'scoped memory for tpu_custom_call.1']
    #allocation4 [shape = 's32[1]{0}', space=sflag, size = 0x4, scoped, tag = 'scoped memory for tpu_custom_call.1']
    #allocation5 [shape = 's32[1]{0}', space=sflag, size = 0x4, scoped, tag = 'scoped memory for tpu_custom_call.1']
    #allocation6 [shape = 'u8[512]{0}', space=smem, size = 0x200, scoped, tag = 'input window, operand 1, single buffered']
    #allocation7 [shape = 's32[1]{0}', space=sflag, size = 0x4, scoped, tag = 'scoped memory for tpu_custom_call.1']
    #allocation8 [shape = 'u8[2048]{0}', space=vmem, size = 0x800, scoped, tag = 'input window, operand 2, single buffered']
    #allocation9 [shape = 'u8[2048]{0}', space=vmem, size = 0x800, scoped, tag = 'input window, operand 3, single buffered']
    #allocation10 [shape = 's32[1]{0}', space=sflag, size = 0x4, scoped, tag = 'scoped memory for tpu_custom_call.1']
    #allocation11 [shape = 'u8[65536]{0}', space=vmem, size = 0x10000, scoped, tag = 'input window, operand 4, single buffered']
    #allocation12 [shape = 'u8[32768]{0}', space=vmem, size = 0x8000, scoped, tag = 'input window, operand 5, single buffered']
    #allocation13 [shape = 's32[1]{0}', space=sflag, size = 0x4, scoped, tag = 'scoped memory for tpu_custom_call.1']
    #allocation14 [shape = 'u8[32768]{0}', space=vmem, size = 0x8000, scoped, tag = 'input window, operand 6, single buffered']
    #allocation15 [shape = 'u8[16384]{0}', space=vmem, size = 0x4000, scoped, tag = 'input window, operand 8, single buffered']
    #allocation16 [shape = 's32[1]{0}', space=sflag, size = 0x4, scoped, tag = 'scoped memory for tpu_custom_call.1']
    #allocation17 [shape = 'u8[8192]{0}', space=vmem, size = 0x2000, scoped, tag = 'output window, operand 0, single buffered']
    %14 = vsyncpa [#allocation5], 0
    %15 = vsyncpa [#allocation7], 0
    %16 = vsyncpa [#allocation3], 0
    %17 = vsyncpa [#allocation10], 0
    %18 = vsyncpa [#allocation13], 0
    %19 = vsyncpa [#allocation16], 0
    %20 = vsyncpa [#allocation4], 0
    // Predicated region
    $region2: #{tpu_custom_call.1} parent=1 // pred_check
      _
    $region3: #{tpu_custom_call.1} parent=1 // pred_check_branch
      %22 = sbr.rel (0) target = $region5
    $region4: #{tpu_custom_call.1} parent=1 // pred_region
      %24 = vsyncadd [#allocation5], 0
      %s26 = sshll.u32 %s0, 4
      %s27 = int_to_ptr.hbm [resolvable:$true] %s26
      %29 = dma.hbm_to_smem %s27, 16, [#allocation2], [#allocation5]
    $region5: #{tpu_custom_call.1} parent=1 // pred_fallthru
      _
    // Predicated region
    $region6: #{tpu_custom_call.1} parent=1 // pred_check
      _
    $region7: #{tpu_custom_call.1} parent=1 // pred_check_branch
      %31 = sbr.rel (0) target = $region9
    $region8: #{tpu_custom_call.1} parent=1 // pred_region
      %33 = vsyncadd [#allocation7], 0
      %s35 = sshll.u32 %s1, 4
      %s36 = int_to_ptr.hbm [resolvable:$true] %s35
      %38 = dma.hbm_to_smem %s36, 16, [#allocation6], [#allocation7]
    $region9: #{tpu_custom_call.1} parent=1 // pred_fallthru
      _
    // Predicated region
    $region10: #{tpu_custom_call.1} parent=1 // pred_check
      _
    $region11: #{tpu_custom_call.1} parent=1 // pred_check_branch
      %40 = sbr.rel (0) target = $region13
    $region12: #{tpu_custom_call.1} parent=1 // pred_region
      %42 = vsyncadd [#allocation3], 0
      %s43 = sshll.u32 %s2, 4
      %s44 = int_to_ptr.hbm [resolvable:$true] %s43
      %s45 = sshll.u32 [#allocation8], 4
      %s46 = int_to_ptr.vmem [resolvable:$true] %s45
      %51 = dma.hbm_to_vmem [thread:$0]  %s44, 64, %s46, [#allocation3], 32, 32, 2
    $region13: #{tpu_custom_call.1} parent=1 // pred_fallthru
      _
    // Predicated region
    $region14: #{tpu_custom_call.1} parent=1 // pred_check
      _
    $region15: #{tpu_custom_call.1} parent=1 // pred_check_branch
      %53 = sbr.rel (0) target = $region17
    $region16: #{tpu_custom_call.1} parent=1 // pred_region
      %55 = vsyncadd [#allocation10], 0
      %s56 = sshll.u32 %s3, 4
      %s57 = int_to_ptr.hbm [resolvable:$true] %s56
      %s58 = sshll.u32 [#allocation9], 4
      %s59 = int_to_ptr.vmem [resolvable:$true] %s58
      %64 = dma.hbm_to_vmem [thread:$0]  %s57, 64, %s59, [#allocation10], 32, 32, 2
    $region17: #{tpu_custom_call.1} parent=1 // pred_fallthru
      _
    // Predicated region
    $region18: #{tpu_custom_call.1} parent=1 // pred_check
      _
    $region19: #{tpu_custom_call.1} parent=1 // pred_check_branch
      %66 = sbr.rel (0) target = $region21
    $region20: #{tpu_custom_call.1} parent=1 // pred_region
      %68 = vsyncadd [#allocation10], 0
      %s69 = sshll.u32 %s4, 4
      %s70 = int_to_ptr.hbm [resolvable:$true] %s69
      %s71 = sshll.u32 [#allocation11], 4
      %s72 = int_to_ptr.vmem [resolvable:$true] %s71
      %77 = dma.hbm_to_vmem [thread:$0]  %s70, 2048, %s72, [#allocation10], 128, 128, 8
    $region21: #{tpu_custom_call.1} parent=1 // pred_fallthru
      _
    // Predicated region
    $region22: #{tpu_custom_call.1} parent=1 // pred_check
      _
    $region23: #{tpu_custom_call.1} parent=1 // pred_check_branch
      %79 = sbr.rel (0) target = $region25
    $region24: #{tpu_custom_call.1} parent=1 // pred_region
      %81 = vsyncadd [#allocation13], 0
      %s82 = sshll.u32 %s5, 4
      %s83 = int_to_ptr.hbm [resolvable:$true] %s82
      %s84 = sshll.u32 [#allocation12], 4
      %s85 = int_to_ptr.vmem [resolvable:$true] %s84
      %90 = dma.hbm_to_vmem [thread:$0]  %s83, 1024, %s85, [#allocation13], 128, 128, 8
    $region25: #{tpu_custom_call.1} parent=1 // pred_fallthru
      _
    // Predicated region
    $region26: #{tpu_custom_call.1} parent=1 // pred_check
      _
    $region27: #{tpu_custom_call.1} parent=1 // pred_check_branch
      %92 = sbr.rel (0) target = $region29
    $region28: #{tpu_custom_call.1} parent=1 // pred_region
      %94 = vsyncadd [#allocation13], 0
      %s95 = sshll.u32 %s6, 4
      %s96 = int_to_ptr.hbm [resolvable:$true] %s95
      %s97 = sshll.u32 [#allocation14], 4
      %s98 = int_to_ptr.vmem [resolvable:$true] %s97
      %103 = dma.hbm_to_vmem [thread:$0]  %s96, 1024, %s98, [#allocation13], 128, 128, 8
    $region29: #{tpu_custom_call.1} parent=1 // pred_fallthru
      _
    // Predicated region
    $region30: #{tpu_custom_call.1} parent=1 // pred_check
      _
    $region31: #{tpu_custom_call.1} parent=1 // pred_check_branch
      %105 = sbr.rel (0) target = $region33
    $region32: #{tpu_custom_call.1} parent=1 // pred_region
      _
    $region33: #{tpu_custom_call.1} parent=1 // pred_fallthru
      _
    // Predicated region
    $region34: #{tpu_custom_call.1} parent=1 // pred_check
      _
    $region35: #{tpu_custom_call.1} parent=1 // pred_check_branch
      %107 = sbr.rel (0) target = $region37
    $region36: #{tpu_custom_call.1} parent=1 // pred_region
      %109 = vsyncadd [#allocation16], 0
      %s110 = sshll.u32 %s8, 4
      %s111 = int_to_ptr.hbm [resolvable:$true] %s110
      %s112 = sshll.u32 [#allocation15], 4
      %s113 = int_to_ptr.vmem [resolvable:$true] %s112
      %118 = dma.hbm_to_vmem [thread:$0]  %s111, 512, %s113, [#allocation16], 128, 128, 8
    $region37: #{tpu_custom_call.1} parent=1 // pred_fallthru
      _
    // Predicated region
    $region38: #{tpu_custom_call.1} parent=1 // pred_check
      _
    $region39: #{tpu_custom_call.1} parent=1 // pred_check_branch
      %120 = sbr.rel (0) target = $region41
    $region40: #{tpu_custom_call.1} parent=1 // pred_region
      %122 = dma.done [#allocation5], 16
    $region41: #{tpu_custom_call.1} parent=1 // pred_fallthru
      _
    // Predicated region
    $region42: #{tpu_custom_call.1} parent=1 // pred_check
      _
    $region43: #{tpu_custom_call.1} parent=1 // pred_check_branch
      %124 = sbr.rel (0) target = $region45
    $region44: #{tpu_custom_call.1} parent=1 // pred_region
      %126 = dma.done [#allocation7], 16
    $region45: #{tpu_custom_call.1} parent=1 // pred_fallthru
      _
    // Predicated region
    $region46: #{tpu_custom_call.1} parent=1 // pred_check
      _
    $region47: #{tpu_custom_call.1} parent=1 // pred_check_branch
      %128 = sbr.rel (0) target = $region49
    $region48: #{tpu_custom_call.1} parent=1 // pred_region
      %130 = dma.done [#allocation3], 64
    $region49: #{tpu_custom_call.1} parent=1 // pred_fallthru
      _
    // Predicated region
    $region50: #{tpu_custom_call.1} parent=1 // pred_check
      _
    $region51: #{tpu_custom_call.1} parent=1 // pred_check_branch
      %132 = sbr.rel (0) target = $region53
    $region52: #{tpu_custom_call.1} parent=1 // pred_region
      %134 = dma.done [#allocation10], 64
    $region53: #{tpu_custom_call.1} parent=1 // pred_fallthru
      _
    // Predicated region
    $region54: #{tpu_custom_call.1} parent=1 // pred_check
      _
    $region55: #{tpu_custom_call.1} parent=1 // pred_check_branch
      %136 = sbr.rel (0) target = $region57
    $region56: #{tpu_custom_call.1} parent=1 // pred_region
      %138 = dma.done [#allocation10], 2048
    $region57: #{tpu_custom_call.1} parent=1 // pred_fallthru
      _
    // Predicated region
    $region58: #{tpu_custom_call.1} parent=1 // pred_check
      _
    $region59: #{tpu_custom_call.1} parent=1 // pred_check_branch
      %140 = sbr.rel (0) target = $region61
    $region60: #{tpu_custom_call.1} parent=1 // pred_region
      %142 = dma.done [#allocation13], 1024
    $region61: #{tpu_custom_call.1} parent=1 // pred_fallthru
      _
    // Predicated region
    $region62: #{tpu_custom_call.1} parent=1 // pred_check
      _
    $region63: #{tpu_custom_call.1} parent=1 // pred_check_branch
      %144 = sbr.rel (0) target = $region65
    $region64: #{tpu_custom_call.1} parent=1 // pred_region
      %146 = dma.done [#allocation13], 1024
    $region65: #{tpu_custom_call.1} parent=1 // pred_fallthru
      _
    // Predicated region
    $region66: #{tpu_custom_call.1} parent=1 // pred_check
      _
    $region67: #{tpu_custom_call.1} parent=1 // pred_check_branch
      %148 = sbr.rel (0) target = $region69
    $region68: #{tpu_custom_call.1} parent=1 // pred_region
      %150 = dma.done [#allocation16], 512
    $region69: #{tpu_custom_call.1} parent=1 // pred_fallthru
      _
    %151 = sfence
    %v152 = vlaneseq
    %v153 = vand.u32 %v152, 127
    %v154 = vlaneseq
    %v155 = vshrl.u32 %v154, 7
    %vm156 = vcmp.ge.s32.totalorder %v153, 64
    %vm157 = vcmp.lt.s32.totalorder %v153, 96
    %vm158 = vmand %vm156, %vm157
    %v159 = vld [vmem:[#allocation8] sm:$0x3]
    %s160 = scalar_lea.vmem [#allocation8], 2
    %v161 = vld [vmem:[%s160] sm:$0x3]
    %v162 = vld [vmem:[#allocation9] sm:$0x3]
    %s163 = scalar_lea.vmem [#allocation9], 2
    %v164 = vld [vmem:[%s163] sm:$0x3]
    %s165 = sld [smem:[#allocation6]]
    %vm166 = vcmp.eq.s32.totalorder %v155, 0
    %v167 = vstv %s165
    %vm168 = vcmp.eq.s32.totalorder %v153, %v167
    %v169 = vsel %vm168, 1, 0
    %v170 = vcvt.s32.f32 %v169
    %v171 = vsel %vm166, %v170, 0.0
    %s172 = sld [smem:[#allocation6 + $0x1]]
    %vm173 = vcmp.eq.s32.totalorder %v155, 1
    %v174 = vstv %s172
    %vm175 = vcmp.eq.s32.totalorder %v153, %v174
    %v176 = vsel %vm175, 1, 0
    %v177 = vcvt.s32.f32 %v176
    %v178 = vsel %vm173, %v177, %v171
    %v179 = vld [vmem:[#allocation11] sm:$0xff]
    %v180 = vld [vmem:[#allocation11 + $0x8] sm:$0xff]
    %v181 = vld [vmem:[#allocation11 + $0x10] sm:$0xff]
    %v182 = vld [vmem:[#allocation11 + $0x18] sm:$0xff]
    %v183 = vld [vmem:[#allocation11 + $0x20] sm:$0xff]
    %v184 = vld [vmem:[#allocation11 + $0x28] sm:$0xff]
    %v185 = vld [vmem:[#allocation11 + $0x30] sm:$0xff]
    %v186 = vld [vmem:[#allocation11 + $0x38] sm:$0xff]
    %v187 = vld [vmem:[#allocation11 + $0x40] sm:$0xff]
    %v188 = vld [vmem:[#allocation11 + $0x48] sm:$0xff]
    %v189 = vld [vmem:[#allocation11 + $0x50] sm:$0xff]
    %v190 = vld [vmem:[#allocation11 + $0x58] sm:$0xff]
    %v191 = vld [vmem:[#allocation11 + $0x60] sm:$0xff]
    %v192 = vld [vmem:[#allocation11 + $0x68] sm:$0xff]
    %v193 = vld [vmem:[#allocation11 + $0x70] sm:$0xff]
    %v194 = vld [vmem:[#allocation11 + $0x78] sm:$0xff]
    %v195 = vld [vmem:[#allocation14] sm:$0xff]
    %v196 = vld [vmem:[#allocation14 + $0x8] sm:$0xff]
    %v197 = vld [vmem:[#allocation14 + $0x10] sm:$0xff]
    %v198 = vld [vmem:[#allocation14 + $0x18] sm:$0xff]
    %vm199 = vcmask 261120
    %v201 = vsel %vm199, %v159, 0
    %203 = vmatpush.msra.mxu0 0.0
    %204 = vmatpush.msra.mxu0 0.0
    %205 = vmatpush.msra.mxu0 0.0
    %206 = vmatpush.msra.mxu0 0.0
    %207 = vmatpush.msra.mxu0 0.0
    %208 = vmatpush.msra.mxu0 0.0
    %209 = vmatpush.msra.mxu0 0.0
    %210 = vmatpush.msra.mxu0 0.0
    %211 = vmatpush.msra.mxu0 0.0
    %212 = vmatpush.msra.mxu0 0.0
    %213 = vmatpush.msra.mxu0 0.0
    %214 = vmatpush.msra.mxu0 0.0
    %215 = vmatpush.msra.mxu0 %v198
    %216 = vmatpush.msra.mxu0 %v197
    %217 = vmatpush.msra.mxu0 %v196
    %218 = vmatpush.msra.mxu0 %v195
    %219 = vmatmul.f32.gmra.mxu0 %v201
    %v220 = vpop.f32.mrf.mxu0
    %v221 = vadd.f32 0.0, %v220
    %222 = vdwg.mxu0
    %223 = vmatpush.msra.mxu0 %v194
    %224 = vmatpush.msra.mxu0 %v193
    %225 = vmatpush.msra.mxu0 %v192
    %226 = vmatpush.msra.mxu0 %v191
    %227 = vmatpush.msra.mxu0 %v190
    %228 = vmatpush.msra.mxu0 %v189
    %229 = vmatpush.msra.mxu0 %v188
    %230 = vmatpush.msra.mxu0 %v187
    %231 = vmatpush.msra.mxu0 %v186
    %232 = vmatpush.msra.mxu0 %v185
    %233 = vmatpush.msra.mxu0 %v184
    %234 = vmatpush.msra.mxu0 %v183
    %235 = vmatpush.msra.mxu0 %v182
    %236 = vmatpush.msra.mxu0 %v181
    %237 = vmatpush.msra.mxu0 %v180
    %238 = vmatpush.msra.mxu0 %v179
    %239 = vmatmul.f32.gmra.mxu0 %v178
    %v240 = vpop.f32.mrf.mxu0
    %v241 = vadd.f32 %v221, %v240
    %242 = vdwg.mxu0
    %v243 = vld [vmem:[%s7] sm:$0x1]
    %v245 = vperm.slane %v243, 0
    %v247 = vadd.f32 %v241, %v245
    %v248 = vmul.f32 %v247, 0.5
    %v249 = vsel %vm158, %v247, %v248
    %v250 = vtanh.pop %v249
    %v251 = vmul.f32 %v250, 0.5
    %v252 = vadd.f32 %v251, 0.5
    %v253 = vsel %vm158, %v250, %v252
    %255 = vrot.lane.b32.xlu0 %v162, 32
    %v256 = vpop.permute.xlu0 %255
    %v258 = vmul.f32 %v253, %v256
    %260 = vrot.lane.b32.xlu0 %v253, 64
    %v261 = vpop.permute.xlu0 %260
    %v263 = vmul.f32 %v253, %v261
    %265 = vrot.lane.b32.xlu0 %v263, 32
    %v266 = vpop.permute.xlu0 %265
    %v268 = vadd.f32 %v258, %v266
    %v269 = vtanh.pop %v268
    %271 = vrot.lane.b32.xlu0 %v269, 64
    %v272 = vpop.permute.xlu0 %271
    %v274 = vmul.f32 %v253, %v272
    %s275 = scalar_lea.vmem [#allocation12], 32
    %v276 = vld [vmem:[%s275] sm:$0xff]
    %v277 = vld [vmem:[%s275 + $0x8] sm:$0xff]
    %v278 = vld [vmem:[%s275 + $0x10] sm:$0xff]
    %v279 = vld [vmem:[%s275 + $0x18] sm:$0xff]
    %s280 = scalar_lea.vmem [#allocation14], 32
    %v281 = vld [vmem:[%s280] sm:$0xff]
    %v282 = vld [vmem:[%s280 + $0x8] sm:$0xff]
    %v283 = vld [vmem:[%s280 + $0x10] sm:$0xff]
    %v284 = vld [vmem:[%s280 + $0x18] sm:$0xff]
    %v286 = vsel %vm199, %v161, 0
    %288 = vmatpush.msra.mxu0 0.0
    %289 = vmatpush.msra.mxu0 0.0
    %290 = vmatpush.msra.mxu0 0.0
    %291 = vmatpush.msra.mxu0 0.0
    %292 = vmatpush.msra.mxu0 0.0
    %293 = vmatpush.msra.mxu0 0.0
    %294 = vmatpush.msra.mxu0 0.0
    %295 = vmatpush.msra.mxu0 0.0
    %296 = vmatpush.msra.mxu0 0.0
    %297 = vmatpush.msra.mxu0 0.0
    %298 = vmatpush.msra.mxu0 0.0
    %299 = vmatpush.msra.mxu0 0.0
    %300 = vmatpush.msra.mxu0 %v284
    %301 = vmatpush.msra.mxu0 %v283
    %302 = vmatpush.msra.mxu0 %v282
    %303 = vmatpush.msra.mxu0 %v281
    %304 = vmatmul.f32.gmra.mxu0 %v286
    %v305 = vpop.f32.mrf.mxu0
    %v306 = vadd.f32 0.0, %v305
    %307 = vdwg.mxu0
    %309 = vrot.lane.b32.xlu0 %v274, 32
    %v310 = vpop.permute.xlu0 %309
    %v311 = vsel %vm199, %v310, 0
    %313 = vmatpush.msra.mxu0 0.0
    %314 = vmatpush.msra.mxu0 0.0
    %315 = vmatpush.msra.mxu0 0.0
    %316 = vmatpush.msra.mxu0 0.0
    %317 = vmatpush.msra.mxu0 0.0
    %318 = vmatpush.msra.mxu0 0.0
    %319 = vmatpush.msra.mxu0 0.0
    %320 = vmatpush.msra.mxu0 0.0
    %321 = vmatpush.msra.mxu0 0.0
    %322 = vmatpush.msra.mxu0 0.0
    %323 = vmatpush.msra.mxu0 0.0
    %324 = vmatpush.msra.mxu0 0.0
    %325 = vmatpush.msra.mxu0 %v279
    %326 = vmatpush.msra.mxu0 %v278
    %327 = vmatpush.msra.mxu0 %v277
    %328 = vmatpush.msra.mxu0 %v276
    %329 = vmatmul.f32.gmra.mxu0 %v311
    %v330 = vpop.f32.mrf.mxu0
    %v331 = vadd.f32 %v306, %v330
    %332 = vdwg.mxu0
    %s333 = scalar_lea.vmem %s7, 1
    %v334 = vld [vmem:[%s333] sm:$0x1]
    %v336 = vperm.slane %v334, 0
    %v338 = vadd.f32 %v331, %v336
    %v339 = vmul.f32 %v338, 0.5
    %v340 = vsel %vm158, %v338, %v339
    %v341 = vtanh.pop %v340
    %v342 = vmul.f32 %v341, 0.5
    %v343 = vadd.f32 %v342, 0.5
    %v344 = vsel %vm158, %v341, %v343
    %346 = vrot.lane.b32.xlu0 %v164, 32
    %v347 = vpop.permute.xlu0 %346
    %v349 = vmul.f32 %v344, %v347
    %351 = vrot.lane.b32.xlu0 %v344, 64
    %v352 = vpop.permute.xlu0 %351
    %v354 = vmul.f32 %v344, %v352
    %356 = vrot.lane.b32.xlu0 %v354, 32
    %v357 = vpop.permute.xlu0 %356
    %v359 = vadd.f32 %v349, %v357
    %v360 = vtanh.pop %v359
    %362 = vrot.lane.b32.xlu0 %v360, 64
    %v363 = vpop.permute.xlu0 %362
    %v365 = vmul.f32 %v344, %v363
    %v366 = vld [vmem:[#allocation15] sm:$0xff]
    %v367 = vld [vmem:[#allocation15 + $0x8] sm:$0xff]
    %v368 = vld [vmem:[#allocation15 + $0x10] sm:$0xff]
    %v369 = vld [vmem:[#allocation15 + $0x18] sm:$0xff]
    %371 = vrot.lane.b32.xlu0 %v365, 32
    %v372 = vpop.permute.xlu0 %371
    %v373 = vsel %vm199, %v372, 0
    %375 = vmatpush.msra.mxu0 0.0
    %376 = vmatpush.msra.mxu0 0.0
    %377 = vmatpush.msra.mxu0 0.0
    %378 = vmatpush.msra.mxu0 0.0
    %379 = vmatpush.msra.mxu0 0.0
    %380 = vmatpush.msra.mxu0 0.0
    %381 = vmatpush.msra.mxu0 0.0
    %382 = vmatpush.msra.mxu0 0.0
    %383 = vmatpush.msra.mxu0 0.0
    %384 = vmatpush.msra.mxu0 0.0
    %385 = vmatpush.msra.mxu0 0.0
    %386 = vmatpush.msra.mxu0 0.0
    %387 = vmatpush.msra.mxu0 %v369
    %388 = vmatpush.msra.mxu0 %v368
    %389 = vmatpush.msra.mxu0 %v367
    %390 = vmatpush.msra.mxu0 %v366
    %391 = vmatmul.f32.gmra.mxu0 %v373
    %v392 = vpop.f32.mrf.mxu0
    %v393 = vadd.f32 0.0, %v392
    %394 = vdwg.mxu0
    %395 = vst [vmem:[#allocation17] sm:$0x3] %v393
    %s396 = sld [smem:[#allocation6 + $0x2]]
    %v397 = vstv %s396
    %vm398 = vcmp.eq.s32.totalorder %v153, %v397
    %v399 = vsel %vm398, 1, 0
    %v400 = vcvt.s32.f32 %v399
    %v401 = vsel %vm166, %v400, 0.0
    %s402 = sld [smem:[#allocation6 + $0x3]]
    %v403 = vstv %s402
    %vm404 = vcmp.eq.s32.totalorder %v153, %v403
    %v405 = vsel %vm404, 1, 0
    %v406 = vcvt.s32.f32 %v405
    %v407 = vsel %vm173, %v406, %v401
    %vm408 = vcmp.lt.s32.totalorder %v153, 64
    %v409 = vsel %vm408, %v393, -1e+30
    %vm410 = vcmask 1041408
    %v411 = vsel %vm410, %v409, -inf
    %412 = vmax.xlane.f32.xlu0 %v411
    %v413 = vpop.xlane.xlu0 %412
    %vm414 = vcmp.ge.f32.partialorder %v409, %v413
    %v415 = vsel %vm414, %v153, 128
    %v416 = vsel %vm410, %v415, 2147483647
    %v417 = vand.u32 %v416, 65535
    %v418 = vshra.s32 %v416, 16
    %v419 = vcvt.s32.f32 %v417
    %v420 = vcvt.s32.f32 %v418
    %421 = vmin.xlane.f32.xlu0 %v420
    %v422 = vpop.xlane.xlu0 %421
    %vm423 = vcmp.eq.f32.partialorder %v420, %v422
    %v424 = vsel %vm423, %v419, inf
    %425 = vmin.xlane.f32.xlu0 %v424
    %v426 = vpop.xlane.xlu0 %425
    %v427 = vcvt.f32.s32 %v426
    %v428 = vcvt.f32.s32 %v422
    %v429 = vshll.u32 %v428, 16
    %v430 = vadd.s32 %v429, %v427
    %vm431 = vcmp.eq.s32.totalorder %v153, %v430
    %v432 = vsel %vm431, 1, 0
    %v433 = vcvt.s32.f32 %v432
    %s434 = sld [smem:[#allocation2 + $0x1]]
    %p435 = scmp.ne.s32.totalorder %s434, 0
    %s436 = scalar_select %p435, 1, 0
    %s437 = scvt.s32.f32 %s436
    %v438 = vstv %s437
    %v439 = vmul.f32 %v438, %v407
    %s440 = ssub.f32 1.0, %s437
    %v441 = vstv %s440
    %v442 = vmul.f32 %v441, %v433
    %v443 = vadd.f32 %v439, %v442
    %v444 = vld [vmem:[#allocation11] sm:$0xff]
    %v445 = vld [vmem:[#allocation11 + $0x8] sm:$0xff]
    %v446 = vld [vmem:[#allocation11 + $0x10] sm:$0xff]
    %v447 = vld [vmem:[#allocation11 + $0x18] sm:$0xff]
    %v448 = vld [vmem:[#allocation11 + $0x20] sm:$0xff]
    %v449 = vld [vmem:[#allocation11 + $0x28] sm:$0xff]
    %v450 = vld [vmem:[#allocation11 + $0x30] sm:$0xff]
    %v451 = vld [vmem:[#allocation11 + $0x38] sm:$0xff]
    %v452 = vld [vmem:[#allocation11 + $0x40] sm:$0xff]
    %v453 = vld [vmem:[#allocation11 + $0x48] sm:$0xff]
    %v454 = vld [vmem:[#allocation11 + $0x50] sm:$0xff]
    %v455 = vld [vmem:[#allocation11 + $0x58] sm:$0xff]
    %v456 = vld [vmem:[#allocation11 + $0x60] sm:$0xff]
    %v457 = vld [vmem:[#allocation11 + $0x68] sm:$0xff]
    %v458 = vld [vmem:[#allocation11 + $0x70] sm:$0xff]
    %v459 = vld [vmem:[#allocation11 + $0x78] sm:$0xff]
    %v460 = vld [vmem:[#allocation14] sm:$0xff]
    %v461 = vld [vmem:[#allocation14 + $0x8] sm:$0xff]
    %v462 = vld [vmem:[#allocation14 + $0x10] sm:$0xff]
    %v463 = vld [vmem:[#allocation14 + $0x18] sm:$0xff]
    %464 = vmatpush.msra.mxu0 0.0
    %465 = vmatpush.msra.mxu0 0.0
    %466 = vmatpush.msra.mxu0 0.0
    %467 = vmatpush.msra.mxu0 0.0
    %468 = vmatpush.msra.mxu0 0.0
    %469 = vmatpush.msra.mxu0 0.0
    %470 = vmatpush.msra.mxu0 0.0
    %471 = vmatpush.msra.mxu0 0.0
    %472 = vmatpush.msra.mxu0 0.0
    %473 = vmatpush.msra.mxu0 0.0
    %474 = vmatpush.msra.mxu0 0.0
    %475 = vmatpush.msra.mxu0 0.0
    %476 = vmatpush.msra.mxu0 %v463
    %477 = vmatpush.msra.mxu0 %v462
    %478 = vmatpush.msra.mxu0 %v461
    %479 = vmatpush.msra.mxu0 %v460
    %480 = vmatmul.f32.gmra.mxu0 %v311
    %v481 = vpop.f32.mrf.mxu0
    %v482 = vadd.f32 0.0, %v481
    %483 = vdwg.mxu0
    %484 = vmatpush.msra.mxu0 %v459
    %485 = vmatpush.msra.mxu0 %v458
    %486 = vmatpush.msra.mxu0 %v457
    %487 = vmatpush.msra.mxu0 %v456
    %488 = vmatpush.msra.mxu0 %v455
    %489 = vmatpush.msra.mxu0 %v454
    %490 = vmatpush.msra.mxu0 %v453
    %491 = vmatpush.msra.mxu0 %v452
    %492 = vmatpush.msra.mxu0 %v451
    %493 = vmatpush.msra.mxu0 %v450
    %494 = vmatpush.msra.mxu0 %v449
    %495 = vmatpush.msra.mxu0 %v448
    %496 = vmatpush.msra.mxu0 %v447
    %497 = vmatpush.msra.mxu0 %v446
    %498 = vmatpush.msra.mxu0 %v445
    %499 = vmatpush.msra.mxu0 %v444
    %500 = vmatmul.f32.gmra.mxu0 %v443
    %v501 = vpop.f32.mrf.mxu0
    %v502 = vadd.f32 %v482, %v501
    %503 = vdwg.mxu0
    %v504 = vld [vmem:[%s7] sm:$0x1]
    %v506 = vperm.slane %v504, 0
    %v508 = vadd.f32 %v502, %v506
    %v509 = vmul.f32 %v508, 0.5
    %v510 = vsel %vm158, %v508, %v509
    %v511 = vtanh.pop %v510
    %v512 = vmul.f32 %v511, 0.5
    %v513 = vadd.f32 %v512, 0.5
    %v514 = vsel %vm158, %v511, %v513
    %v515 = vmul.f32 %v514, %v268
    %517 = vrot.lane.b32.xlu0 %v514, 64
    %v518 = vpop.permute.xlu0 %517
    %v520 = vmul.f32 %v514, %v518
    %522 = vrot.lane.b32.xlu0 %v520, 32
    %v523 = vpop.permute.xlu0 %522
    %v525 = vadd.f32 %v515, %v523
    %v526 = vtanh.pop %v525
    %528 = vrot.lane.b32.xlu0 %v526, 64
    %v529 = vpop.permute.xlu0 %528
    %v531 = vmul.f32 %v514, %v529
    %v532 = vld [vmem:[%s275] sm:$0xff]
    %v533 = vld [vmem:[%s275 + $0x8] sm:$0xff]
    %v534 = vld [vmem:[%s275 + $0x10] sm:$0xff]
    %v535 = vld [vmem:[%s275 + $0x18] sm:$0xff]
    %v536 = vld [vmem:[%s280] sm:$0xff]
    %v537 = vld [vmem:[%s280 + $0x8] sm:$0xff]
    %v538 = vld [vmem:[%s280 + $0x10] sm:$0xff]
    %v539 = vld [vmem:[%s280 + $0x18] sm:$0xff]
    %540 = vmatpush.msra.mxu0 0.0
    %541 = vmatpush.msra.mxu0 0.0
    %542 = vmatpush.msra.mxu0 0.0
    %543 = vmatpush.msra.mxu0 0.0
    %544 = vmatpush.msra.mxu0 0.0
    %545 = vmatpush.msra.mxu0 0.0
    %546 = vmatpush.msra.mxu0 0.0
    %547 = vmatpush.msra.mxu0 0.0
    %548 = vmatpush.msra.mxu0 0.0
    %549 = vmatpush.msra.mxu0 0.0
    %550 = vmatpush.msra.mxu0 0.0
    %551 = vmatpush.msra.mxu0 0.0
    %552 = vmatpush.msra.mxu0 %v539
    %553 = vmatpush.msra.mxu0 %v538
    %554 = vmatpush.msra.mxu0 %v537
    %555 = vmatpush.msra.mxu0 %v536
    %556 = vmatmul.f32.gmra.mxu0 %v373
    %v557 = vpop.f32.mrf.mxu0
    %v558 = vadd.f32 0.0, %v557
    %559 = vdwg.mxu0
    %561 = vrot.lane.b32.xlu0 %v531, 32
    %v562 = vpop.permute.xlu0 %561
    %v563 = vsel %vm199, %v562, 0
    %565 = vmatpush.msra.mxu0 0.0
    %566 = vmatpush.msra.mxu0 0.0
    %567 = vmatpush.msra.mxu0 0.0
    %568 = vmatpush.msra.mxu0 0.0
    %569 = vmatpush.msra.mxu0 0.0
    %570 = vmatpush.msra.mxu0 0.0
    %571 = vmatpush.msra.mxu0 0.0
    %572 = vmatpush.msra.mxu0 0.0
    %573 = vmatpush.msra.mxu0 0.0
    %574 = vmatpush.msra.mxu0 0.0
    %575 = vmatpush.msra.mxu0 0.0
    %576 = vmatpush.msra.mxu0 0.0
    %577 = vmatpush.msra.mxu0 %v535
    %578 = vmatpush.msra.mxu0 %v534
    %579 = vmatpush.msra.mxu0 %v533
    %580 = vmatpush.msra.mxu0 %v532
    %581 = vmatmul.f32.gmra.mxu0 %v563
    %v582 = vpop.f32.mrf.mxu0
    %v583 = vadd.f32 %v558, %v582
    %584 = vdwg.mxu0
    %v585 = vld [vmem:[%s333] sm:$0x1]
    %v587 = vperm.slane %v585, 0
    %v589 = vadd.f32 %v583, %v587
    %v590 = vmul.f32 %v589, 0.5
    %v591 = vsel %vm158, %v589, %v590
    %v592 = vtanh.pop %v591
    %v593 = vmul.f32 %v592, 0.5
    %v594 = vadd.f32 %v593, 0.5
    %v595 = vsel %vm158, %v592, %v594
    %v596 = vmul.f32 %v595, %v359
    %598 = vrot.lane.b32.xlu0 %v595, 64
    %v599 = vpop.permute.xlu0 %598
    %v601 = vmul.f32 %v595, %v599
    %603 = vrot.lane.b32.xlu0 %v601, 32
    %v604 = vpop.permute.xlu0 %603
    %v606 = vadd.f32 %v596, %v604
    %v607 = vtanh.pop %v606
    %609 = vrot.lane.b32.xlu0 %v607, 64
    %v610 = vpop.permute.xlu0 %609
    %v612 = vmul.f32 %v595, %v610
    %v613 = vld [vmem:[#allocation15] sm:$0xff]
    %v614 = vld [vmem:[#allocation15 + $0x8] sm:$0xff]
    %v615 = vld [vmem:[#allocation15 + $0x10] sm:$0xff]
    %v616 = vld [vmem:[#allocation15 + $0x18] sm:$0xff]
    %618 = vrot.lane.b32.xlu0 %v612, 32
    %v619 = vpop.permute.xlu0 %618
    %v620 = vsel %vm199, %v619, 0
    %622 = vmatpush.msra.mxu0 0.0
    %623 = vmatpush.msra.mxu0 0.0
    %624 = vmatpush.msra.mxu0 0.0
    %625 = vmatpush.msra.mxu0 0.0
    %626 = vmatpush.msra.mxu0 0.0
    %627 = vmatpush.msra.mxu0 0.0
    %628 = vmatpush.msra.mxu0 0.0
    %629 = vmatpush.msra.mxu0 0.0
    %630 = vmatpush.msra.mxu0 0.0
    %631 = vmatpush.msra.mxu0 0.0
    %632 = vmatpush.msra.mxu0 0.0
    %633 = vmatpush.msra.mxu0 0.0
    %634 = vmatpush.msra.mxu0 %v616
    %635 = vmatpush.msra.mxu0 %v615
    %636 = vmatpush.msra.mxu0 %v614
    %637 = vmatpush.msra.mxu0 %v613
    %638 = vmatmul.f32.gmra.mxu0 %v620
    %v639 = vpop.f32.mrf.mxu0
    %v640 = vadd.f32 0.0, %v639
    %641 = vdwg.mxu0
    %642 = vst [vmem:[#allocation17 + $0x2] sm:$0x3] %v640
    %s643 = sld [smem:[#allocation6 + $0x4]]
    %v644 = vstv %s643
    %vm645 = vcmp.eq.s32.totalorder %v153, %v644
    %v646 = vsel %vm645, 1, 0
    %v647 = vcvt.s32.f32 %v646
    %v648 = vsel %vm166, %v647, 0.0
    %s649 = sld [smem:[#allocation6 + $0x5]]
    %v650 = vstv %s649
    %vm651 = vcmp.eq.s32.totalorder %v153, %v650
    %v652 = vsel %vm651, 1, 0
    %v653 = vcvt.s32.f32 %v652
    %v654 = vsel %vm173, %v653, %v648
    %v655 = vsel %vm408, %v640, -1e+30
    %v656 = vsel %vm410, %v655, -inf
    %657 = vmax.xlane.f32.xlu0 %v656
    %v658 = vpop.xlane.xlu0 %657
    %vm659 = vcmp.ge.f32.partialorder %v655, %v658
    %v660 = vsel %vm659, %v153, 128
    %v661 = vsel %vm410, %v660, 2147483647
    %v662 = vand.u32 %v661, 65535
    %v663 = vshra.s32 %v661, 16
    %v664 = vcvt.s32.f32 %v662
    %v665 = vcvt.s32.f32 %v663
    %666 = vmin.xlane.f32.xlu0 %v665
    %v667 = vpop.xlane.xlu0 %666
    %vm668 = vcmp.eq.f32.partialorder %v665, %v667
    %v669 = vsel %vm668, %v664, inf
    %670 = vmin.xlane.f32.xlu0 %v669
    %v671 = vpop.xlane.xlu0 %670
    %v672 = vcvt.f32.s32 %v671
    %v673 = vcvt.f32.s32 %v667
    %v674 = vshll.u32 %v673, 16
    %v675 = vadd.s32 %v674, %v672
    %vm676 = vcmp.eq.s32.totalorder %v153, %v675
    %v677 = vsel %vm676, 1, 0
    %v678 = vcvt.s32.f32 %v677
    %s679 = sld [smem:[#allocation2 + $0x2]]
    %p680 = scmp.ne.s32.totalorder %s679, 0
    %s681 = scalar_select %p680, 1, 0
    %s682 = scvt.s32.f32 %s681
    %v683 = vstv %s682
    %v684 = vmul.f32 %v683, %v654
    %s685 = ssub.f32 1.0, %s682
    %v686 = vstv %s685
    %v687 = vmul.f32 %v686, %v678
    %v688 = vadd.f32 %v684, %v687
    %v689 = vld [vmem:[#allocation11] sm:$0xff]
    %v690 = vld [vmem:[#allocation11 + $0x8] sm:$0xff]
    %v691 = vld [vmem:[#allocation11 + $0x10] sm:$0xff]
    %v692 = vld [vmem:[#allocation11 + $0x18] sm:$0xff]
    %v693 = vld [vmem:[#allocation11 + $0x20] sm:$0xff]
    %v694 = vld [vmem:[#allocation11 + $0x28] sm:$0xff]
    %v695 = vld [vmem:[#allocation11 + $0x30] sm:$0xff]
    %v696 = vld [vmem:[#allocation11 + $0x38] sm:$0xff]
    %v697 = vld [vmem:[#allocation11 + $0x40] sm:$0xff]
    %v698 = vld [vmem:[#allocation11 + $0x48] sm:$0xff]
    %v699 = vld [vmem:[#allocation11 + $0x50] sm:$0xff]
    %v700 = vld [vmem:[#allocation11 + $0x58] sm:$0xff]
    %v701 = vld [vmem:[#allocation11 + $0x60] sm:$0xff]
    %v702 = vld [vmem:[#allocation11 + $0x68] sm:$0xff]
    %v703 = vld [vmem:[#allocation11 + $0x70] sm:$0xff]
    %v704 = vld [vmem:[#allocation11 + $0x78] sm:$0xff]
    %v705 = vld [vmem:[#allocation14] sm:$0xff]
    %v706 = vld [vmem:[#allocation14 + $0x8] sm:$0xff]
    %v707 = vld [vmem:[#allocation14 + $0x10] sm:$0xff]
    %v708 = vld [vmem:[#allocation14 + $0x18] sm:$0xff]
    %709 = vmatpush.msra.mxu0 0.0
    %710 = vmatpush.msra.mxu0 0.0
    %711 = vmatpush.msra.mxu0 0.0
    %712 = vmatpush.msra.mxu0 0.0
    %713 = vmatpush.msra.mxu0 0.0
    %714 = vmatpush.msra.mxu0 0.0
    %715 = vmatpush.msra.mxu0 0.0
    %716 = vmatpush.msra.mxu0 0.0
    %717 = vmatpush.msra.mxu0 0.0
    %718 = vmatpush.msra.mxu0 0.0
    %719 = vmatpush.msra.mxu0 0.0
    %720 = vmatpush.msra.mxu0 0.0
    %721 = vmatpush.msra.mxu0 %v708
    %722 = vmatpush.msra.mxu0 %v707
    %723 = vmatpush.msra.mxu0 %v706
    %724 = vmatpush.msra.mxu0 %v705
    %725 = vmatmul.f32.gmra.mxu0 %v563
    %v726 = vpop.f32.mrf.mxu0
    %v727 = vadd.f32 0.0, %v726
    %728 = vdwg.mxu0
    %729 = vmatpush.msra.mxu0 %v704
    %730 = vmatpush.msra.mxu0 %v703
    %731 = vmatpush.msra.mxu0 %v702
    %732 = vmatpush.msra.mxu0 %v701
    %733 = vmatpush.msra.mxu0 %v700
    %734 = vmatpush.msra.mxu0 %v699
    %735 = vmatpush.msra.mxu0 %v698
    %736 = vmatpush.msra.mxu0 %v697
    %737 = vmatpush.msra.mxu0 %v696
    %738 = vmatpush.msra.mxu0 %v695
    %739 = vmatpush.msra.mxu0 %v694
    %740 = vmatpush.msra.mxu0 %v693
    %741 = vmatpush.msra.mxu0 %v692
    %742 = vmatpush.msra.mxu0 %v691
    %743 = vmatpush.msra.mxu0 %v690
    %744 = vmatpush.msra.mxu0 %v689
    %745 = vmatmul.f32.gmra.mxu0 %v688
    %v746 = vpop.f32.mrf.mxu0
    %v747 = vadd.f32 %v727, %v746
    %748 = vdwg.mxu0
    %v749 = vld [vmem:[%s7] sm:$0x1]
    %v751 = vperm.slane %v749, 0
    %v753 = vadd.f32 %v747, %v751
    %v754 = vmul.f32 %v753, 0.5
    %v755 = vsel %vm158, %v753, %v754
    %v756 = vtanh.pop %v755
    %v757 = vmul.f32 %v756, 0.5
    %v758 = vadd.f32 %v757, 0.5
    %v759 = vsel %vm158, %v756, %v758
    %v760 = vmul.f32 %v759, %v525
    %762 = vrot.lane.b32.xlu0 %v759, 64
    %v763 = vpop.permute.xlu0 %762
    %v765 = vmul.f32 %v759, %v763
    %767 = vrot.lane.b32.xlu0 %v765, 32
    %v768 = vpop.permute.xlu0 %767
    %v770 = vadd.f32 %v760, %v768
    %v771 = vtanh.pop %v770
    %773 = vrot.lane.b32.xlu0 %v771, 64
    %v774 = vpop.permute.xlu0 %773
    %v776 = vmul.f32 %v759, %v774
    %v777 = vld [vmem:[%s275] sm:$0xff]
    %v778 = vld [vmem:[%s275 + $0x8] sm:$0xff]
    %v779 = vld [vmem:[%s275 + $0x10] sm:$0xff]
    %v780 = vld [vmem:[%s275 + $0x18] sm:$0xff]
    %v781 = vld [vmem:[%s280] sm:$0xff]
    %v782 = vld [vmem:[%s280 + $0x8] sm:$0xff]
    %v783 = vld [vmem:[%s280 + $0x10] sm:$0xff]
    %v784 = vld [vmem:[%s280 + $0x18] sm:$0xff]
    %785 = vmatpush.msra.mxu0 0.0
    %786 = vmatpush.msra.mxu0 0.0
    %787 = vmatpush.msra.mxu0 0.0
    %788 = vmatpush.msra.mxu0 0.0
    %789 = vmatpush.msra.mxu0 0.0
    %790 = vmatpush.msra.mxu0 0.0
    %791 = vmatpush.msra.mxu0 0.0
    %792 = vmatpush.msra.mxu0 0.0
    %793 = vmatpush.msra.mxu0 0.0
    %794 = vmatpush.msra.mxu0 0.0
    %795 = vmatpush.msra.mxu0 0.0
    %796 = vmatpush.msra.mxu0 0.0
    %797 = vmatpush.msra.mxu0 %v784
    %798 = vmatpush.msra.mxu0 %v783
    %799 = vmatpush.msra.mxu0 %v782
    %800 = vmatpush.msra.mxu0 %v781
    %801 = vmatmul.f32.gmra.mxu0 %v620
    %v802 = vpop.f32.mrf.mxu0
    %v803 = vadd.f32 0.0, %v802
    %804 = vdwg.mxu0
    %806 = vrot.lane.b32.xlu0 %v776, 32
    %v807 = vpop.permute.xlu0 %806
    %v808 = vsel %vm199, %v807, 0
    %810 = vmatpush.msra.mxu0 0.0
    %811 = vmatpush.msra.mxu0 0.0
    %812 = vmatpush.msra.mxu0 0.0
    %813 = vmatpush.msra.mxu0 0.0
    %814 = vmatpush.msra.mxu0 0.0
    %815 = vmatpush.msra.mxu0 0.0
    %816 = vmatpush.msra.mxu0 0.0
    %817 = vmatpush.msra.mxu0 0.0
    %818 = vmatpush.msra.mxu0 0.0
    %819 = vmatpush.msra.mxu0 0.0
    %820 = vmatpush.msra.mxu0 0.0
    %821 = vmatpush.msra.mxu0 0.0
    %822 = vmatpush.msra.mxu0 %v780
    %823 = vmatpush.msra.mxu0 %v779
    %824 = vmatpush.msra.mxu0 %v778
    %825 = vmatpush.msra.mxu0 %v777
    %826 = vmatmul.f32.gmra.mxu0 %v808
    %v827 = vpop.f32.mrf.mxu0
    %v828 = vadd.f32 %v803, %v827
    %829 = vdwg.mxu0
    %v830 = vld [vmem:[%s333] sm:$0x1]
    %v832 = vperm.slane %v830, 0
    %v834 = vadd.f32 %v828, %v832
    %v835 = vmul.f32 %v834, 0.5
    %v836 = vsel %vm158, %v834, %v835
    %v837 = vtanh.pop %v836
    %v838 = vmul.f32 %v837, 0.5
    %v839 = vadd.f32 %v838, 0.5
    %v840 = vsel %vm158, %v837, %v839
    %v841 = vmul.f32 %v840, %v606
    %843 = vrot.lane.b32.xlu0 %v840, 64
    %v844 = vpop.permute.xlu0 %843
    %v846 = vmul.f32 %v840, %v844
    %848 = vrot.lane.b32.xlu0 %v846, 32
    %v849 = vpop.permute.xlu0 %848
    %v851 = vadd.f32 %v841, %v849
    %v852 = vtanh.pop %v851
    %854 = vrot.lane.b32.xlu0 %v852, 64
    %v855 = vpop.permute.xlu0 %854
    %v857 = vmul.f32 %v840, %v855
    %v858 = vld [vmem:[#allocation15] sm:$0xff]
    %v859 = vld [vmem:[#allocation15 + $0x8] sm:$0xff]
    %v860 = vld [vmem:[#allocation15 + $0x10] sm:$0xff]
    %v861 = vld [vmem:[#allocation15 + $0x18] sm:$0xff]
    %863 = vrot.lane.b32.xlu0 %v857, 32
    %v864 = vpop.permute.xlu0 %863
    %v865 = vsel %vm199, %v864, 0
    %867 = vmatpush.msra.mxu0 0.0
    %868 = vmatpush.msra.mxu0 0.0
    %869 = vmatpush.msra.mxu0 0.0
    %870 = vmatpush.msra.mxu0 0.0
    %871 = vmatpush.msra.mxu0 0.0
    %872 = vmatpush.msra.mxu0 0.0
    %873 = vmatpush.msra.mxu0 0.0
    %874 = vmatpush.msra.mxu0 0.0
    %875 = vmatpush.msra.mxu0 0.0
    %876 = vmatpush.msra.mxu0 0.0
    %877 = vmatpush.msra.mxu0 0.0
    %878 = vmatpush.msra.mxu0 0.0
    %879 = vmatpush.msra.mxu0 %v861
    %880 = vmatpush.msra.mxu0 %v860
    %881 = vmatpush.msra.mxu0 %v859
    %882 = vmatpush.msra.mxu0 %v858
    %883 = vmatmul.f32.gmra.mxu0 %v865
    %v884 = vpop.f32.mrf.mxu0
    %v885 = vadd.f32 0.0, %v884
    %886 = vdwg.mxu0
    %887 = vst [vmem:[#allocation17 + $0x4] sm:$0x3] %v885
    %s888 = sld [smem:[#allocation6 + $0x6]]
    %v889 = vstv %s888
    %vm890 = vcmp.eq.s32.totalorder %v153, %v889
    %v891 = vsel %vm890, 1, 0
    %v892 = vcvt.s32.f32 %v891
    %v893 = vsel %vm166, %v892, 0.0
    %s894 = sld [smem:[#allocation6 + $0x7]]
    %v895 = vstv %s894
    %vm896 = vcmp.eq.s32.totalorder %v153, %v895
    %v897 = vsel %vm896, 1, 0
    %v898 = vcvt.s32.f32 %v897
    %v899 = vsel %vm173, %v898, %v893
    %v900 = vsel %vm408, %v885, -1e+30
    %v901 = vsel %vm410, %v900, -inf
    %902 = vmax.xlane.f32.xlu0 %v901
    %v903 = vpop.xlane.xlu0 %902
    %vm904 = vcmp.ge.f32.partialorder %v900, %v903
    %v905 = vsel %vm904, %v153, 128
    %v906 = vsel %vm410, %v905, 2147483647
    %v907 = vand.u32 %v906, 65535
    %v908 = vshra.s32 %v906, 16
    %v909 = vcvt.s32.f32 %v907
    %v910 = vcvt.s32.f32 %v908
    %911 = vmin.xlane.f32.xlu0 %v910
    %v912 = vpop.xlane.xlu0 %911
    %vm913 = vcmp.eq.f32.partialorder %v910, %v912
    %v914 = vsel %vm913, %v909, inf
    %915 = vmin.xlane.f32.xlu0 %v914
    %v916 = vpop.xlane.xlu0 %915
    %v917 = vcvt.f32.s32 %v916
    %v918 = vcvt.f32.s32 %v912
    %v919 = vshll.u32 %v918, 16
    %v920 = vadd.s32 %v919, %v917
    %vm921 = vcmp.eq.s32.totalorder %v153, %v920
    %v922 = vsel %vm921, 1, 0
    %v923 = vcvt.s32.f32 %v922
    %s924 = sld [smem:[#allocation2 + $0x3]]
    %p925 = scmp.ne.s32.totalorder %s924, 0
    %s926 = scalar_select %p925, 1, 0
    %s927 = scvt.s32.f32 %s926
    %v928 = vstv %s927
    %v929 = vmul.f32 %v928, %v899
    %s930 = ssub.f32 1.0, %s927
    %v931 = vstv %s930
    %v932 = vmul.f32 %v931, %v923
    %v933 = vadd.f32 %v929, %v932
    %v934 = vld [vmem:[#allocation11] sm:$0xff]
    %v935 = vld [vmem:[#allocation11 + $0x8] sm:$0xff]
    %v936 = vld [vmem:[#allocation11 + $0x10] sm:$0xff]
    %v937 = vld [vmem:[#allocation11 + $0x18] sm:$0xff]
    %v938 = vld [vmem:[#allocation11 + $0x20] sm:$0xff]
    %v939 = vld [vmem:[#allocation11 + $0x28] sm:$0xff]
    %v940 = vld [vmem:[#allocation11 + $0x30] sm:$0xff]
    %v941 = vld [vmem:[#allocation11 + $0x38] sm:$0xff]
    %v942 = vld [vmem:[#allocation11 + $0x40] sm:$0xff]
    %v943 = vld [vmem:[#allocation11 + $0x48] sm:$0xff]
    %v944 = vld [vmem:[#allocation11 + $0x50] sm:$0xff]
    %v945 = vld [vmem:[#allocation11 + $0x58] sm:$0xff]
    %v946 = vld [vmem:[#allocation11 + $0x60] sm:$0xff]
    %v947 = vld [vmem:[#allocation11 + $0x68] sm:$0xff]
    %v948 = vld [vmem:[#allocation11 + $0x70] sm:$0xff]
    %v949 = vld [vmem:[#allocation11 + $0x78] sm:$0xff]
    %v950 = vld [vmem:[#allocation14] sm:$0xff]
    %v951 = vld [vmem:[#allocation14 + $0x8] sm:$0xff]
    %v952 = vld [vmem:[#allocation14 + $0x10] sm:$0xff]
    %v953 = vld [vmem:[#allocation14 + $0x18] sm:$0xff]
    %954 = vmatpush.msra.mxu0 0.0
    %955 = vmatpush.msra.mxu0 0.0
    %956 = vmatpush.msra.mxu0 0.0
    %957 = vmatpush.msra.mxu0 0.0
    %958 = vmatpush.msra.mxu0 0.0
    %959 = vmatpush.msra.mxu0 0.0
    %960 = vmatpush.msra.mxu0 0.0
    %961 = vmatpush.msra.mxu0 0.0
    %962 = vmatpush.msra.mxu0 0.0
    %963 = vmatpush.msra.mxu0 0.0
    %964 = vmatpush.msra.mxu0 0.0
    %965 = vmatpush.msra.mxu0 0.0
    %966 = vmatpush.msra.mxu0 %v953
    %967 = vmatpush.msra.mxu0 %v952
    %968 = vmatpush.msra.mxu0 %v951
    %969 = vmatpush.msra.mxu0 %v950
    %970 = vmatmul.f32.gmra.mxu0 %v808
    %v971 = vpop.f32.mrf.mxu0
    %v972 = vadd.f32 0.0, %v971
    %973 = vdwg.mxu0
    %974 = vmatpush.msra.mxu0 %v949
    %975 = vmatpush.msra.mxu0 %v948
    %976 = vmatpush.msra.mxu0 %v947
    %977 = vmatpush.msra.mxu0 %v946
    %978 = vmatpush.msra.mxu0 %v945
    %979 = vmatpush.msra.mxu0 %v944
    %980 = vmatpush.msra.mxu0 %v943
    %981 = vmatpush.msra.mxu0 %v942
    %982 = vmatpush.msra.mxu0 %v941
    %983 = vmatpush.msra.mxu0 %v940
    %984 = vmatpush.msra.mxu0 %v939
    %985 = vmatpush.msra.mxu0 %v938
    %986 = vmatpush.msra.mxu0 %v937
    %987 = vmatpush.msra.mxu0 %v936
    %988 = vmatpush.msra.mxu0 %v935
    %989 = vmatpush.msra.mxu0 %v934
    %990 = vmatmul.f32.gmra.mxu0 %v933
    %v991 = vpop.f32.mrf.mxu0
    %v992 = vadd.f32 %v972, %v991
    %993 = vdwg.mxu0
    %v994 = vld [vmem:[%s7] sm:$0x1]
    %v996 = vperm.slane %v994, 0
    %v998 = vadd.f32 %v992, %v996
    %v999 = vmul.f32 %v998, 0.5
    %v1000 = vsel %vm158, %v998, %v999
    %v1001 = vtanh.pop %v1000
    %v1002 = vmul.f32 %v1001, 0.5
    %v1003 = vadd.f32 %v1002, 0.5
    %v1004 = vsel %vm158, %v1001, %v1003
    %v1005 = vmul.f32 %v1004, %v770
    %1007 = vrot.lane.b32.xlu0 %v1004, 64
    %v1008 = vpop.permute.xlu0 %1007
    %v1010 = vmul.f32 %v1004, %v1008
    %1012 = vrot.lane.b32.xlu0 %v1010, 32
    %v1013 = vpop.permute.xlu0 %1012
    %v1015 = vadd.f32 %v1005, %v1013
    %v1016 = vtanh.pop %v1015
    %1018 = vrot.lane.b32.xlu0 %v1016, 64
    %v1019 = vpop.permute.xlu0 %1018
    %v1021 = vmul.f32 %v1004, %v1019
    %v1022 = vld [vmem:[%s275] sm:$0xff]
    %v1023 = vld [vmem:[%s275 + $0x8] sm:$0xff]
    %v1024 = vld [vmem:[%s275 + $0x10] sm:$0xff]
    %v1025 = vld [vmem:[%s275 + $0x18] sm:$0xff]
    %v1026 = vld [vmem:[%s280] sm:$0xff]
    %v1027 = vld [vmem:[%s280 + $0x8] sm:$0xff]
    %v1028 = vld [vmem:[%s280 + $0x10] sm:$0xff]
    %v1029 = vld [vmem:[%s280 + $0x18] sm:$0xff]
    %1030 = vmatpush.msra.mxu0 0.0
    %1031 = vmatpush.msra.mxu0 0.0
    %1032 = vmatpush.msra.mxu0 0.0
    %1033 = vmatpush.msra.mxu0 0.0
    %1034 = vmatpush.msra.mxu0 0.0
    %1035 = vmatpush.msra.mxu0 0.0
    %1036 = vmatpush.msra.mxu0 0.0
    %1037 = vmatpush.msra.mxu0 0.0
    %1038 = vmatpush.msra.mxu0 0.0
    %1039 = vmatpush.msra.mxu0 0.0
    %1040 = vmatpush.msra.mxu0 0.0
    %1041 = vmatpush.msra.mxu0 0.0
    %1042 = vmatpush.msra.mxu0 %v1029
    %1043 = vmatpush.msra.mxu0 %v1028
    %1044 = vmatpush.msra.mxu0 %v1027
    %1045 = vmatpush.msra.mxu0 %v1026
    %1046 = vmatmul.f32.gmra.mxu0 %v865
    %v1047 = vpop.f32.mrf.mxu0
    %v1048 = vadd.f32 0.0, %v1047
    %1049 = vdwg.mxu0
    %1051 = vrot.lane.b32.xlu0 %v1021, 32
    %v1052 = vpop.permute.xlu0 %1051
    %v1053 = vsel %vm199, %v1052, 0
    %1055 = vmatpush.msra.mxu0 0.0
    %1056 = vmatpush.msra.mxu0 0.0
    %1057 = vmatpush.msra.mxu0 0.0
    %1058 = vmatpush.msra.mxu0 0.0
    %1059 = vmatpush.msra.mxu0 0.0
    %1060 = vmatpush.msra.mxu0 0.0
    %1061 = vmatpush.msra.mxu0 0.0
    %1062 = vmatpush.msra.mxu0 0.0
    %1063 = vmatpush.msra.mxu0 0.0
    %1064 = vmatpush.msra.mxu0 0.0
    %1065 = vmatpush.msra.mxu0 0.0
    %1066 = vmatpush.msra.mxu0 0.0
    %1067 = vmatpush.msra.mxu0 %v1025
    %1068 = vmatpush.msra.mxu0 %v1024
    %1069 = vmatpush.msra.mxu0 %v1023
    %1070 = vmatpush.msra.mxu0 %v1022
    %1071 = vmatmul.f32.gmra.mxu0 %v1053
    %v1072 = vpop.f32.mrf.mxu0
    %v1073 = vadd.f32 %v1048, %v1072
    %1074 = vdwg.mxu0
    %v1075 = vld [vmem:[%s333] sm:$0x1]
    %v1077 = vperm.slane %v1075, 0
    %v1079 = vadd.f32 %v1073, %v1077
    %v1080 = vmul.f32 %v1079, 0.5
    %v1081 = vsel %vm158, %v1079, %v1080
    %v1082 = vtanh.pop %v1081
    %v1083 = vmul.f32 %v1082, 0.5
    %v1084 = vadd.f32 %v1083, 0.5
    %v1085 = vsel %vm158, %v1082, %v1084
    %v1086 = vmul.f32 %v1085, %v851
    %1088 = vrot.lane.b32.xlu0 %v1085, 64
    %v1089 = vpop.permute.xlu0 %1088
    %v1091 = vmul.f32 %v1085, %v1089
    %1093 = vrot.lane.b32.xlu0 %v1091, 32
    %v1094 = vpop.permute.xlu0 %1093
    %v1096 = vadd.f32 %v1086, %v1094
    %v1097 = vtanh.pop %v1096
    %1099 = vrot.lane.b32.xlu0 %v1097, 64
    %v1100 = vpop.permute.xlu0 %1099
    %v1102 = vmul.f32 %v1085, %v1100
    %v1103 = vld [vmem:[#allocation15] sm:$0xff]
    %v1104 = vld [vmem:[#allocation15 + $0x8] sm:$0xff]
    %v1105 = vld [vmem:[#allocation15 + $0x10] sm:$0xff]
    %v1106 = vld [vmem:[#allocation15 + $0x18] sm:$0xff]
    %1108 = vrot.lane.b32.xlu0 %v1102, 32
    %v1109 = vpop.permute.xlu0 %1108
    %v1110 = vsel %vm199, %v1109, 0
    %1112 = vmatpush.msra.mxu0 0.0
    %1113 = vmatpush.msra.mxu0 0.0
    %1114 = vmatpush.msra.mxu0 0.0
    %1115 = vmatpush.msra.mxu0 0.0
    %1116 = vmatpush.msra.mxu0 0.0
    %1117 = vmatpush.msra.mxu0 0.0
    %1118 = vmatpush.msra.mxu0 0.0
    %1119 = vmatpush.msra.mxu0 0.0
    %1120 = vmatpush.msra.mxu0 0.0
    %1121 = vmatpush.msra.mxu0 0.0
    %1122 = vmatpush.msra.mxu0 0.0
    %1123 = vmatpush.msra.mxu0 0.0
    %1124 = vmatpush.msra.mxu0 %v1106
    %1125 = vmatpush.msra.mxu0 %v1105
    %1126 = vmatpush.msra.mxu0 %v1104
    %1127 = vmatpush.msra.mxu0 %v1103
    %1128 = vmatmul.f32.gmra.mxu0 %v1110
    %v1129 = vpop.f32.mrf.mxu0
    %v1130 = vadd.f32 0.0, %v1129
    %1131 = vdwg.mxu0
    %1132 = vst [vmem:[#allocation17 + $0x6] sm:$0x3] %v1130
    %s1133 = sld [smem:[#allocation6 + $0x8]]
    %v1134 = vstv %s1133
    %vm1135 = vcmp.eq.s32.totalorder %v153, %v1134
    %v1136 = vsel %vm1135, 1, 0
    %v1137 = vcvt.s32.f32 %v1136
    %v1138 = vsel %vm166, %v1137, 0.0
    %s1139 = sld [smem:[#allocation6 + $0x9]]
    %v1140 = vstv %s1139
    %vm1141 = vcmp.eq.s32.totalorder %v153, %v1140
    %v1142 = vsel %vm1141, 1, 0
    %v1143 = vcvt.s32.f32 %v1142
    %v1144 = vsel %vm173, %v1143, %v1138
    %v1145 = vsel %vm408, %v1130, -1e+30
    %v1146 = vsel %vm410, %v1145, -inf
    %1147 = vmax.xlane.f32.xlu0 %v1146
    %v1148 = vpop.xlane.xlu0 %1147
    %vm1149 = vcmp.ge.f32.partialorder %v1145, %v1148
    %v1150 = vsel %vm1149, %v153, 128
    %v1151 = vsel %vm410, %v1150, 2147483647
    %v1152 = vand.u32 %v1151, 65535
    %v1153 = vshra.s32 %v1151, 16
    %v1154 = vcvt.s32.f32 %v1152
    %v1155 = vcvt.s32.f32 %v1153
    %1156 = vmin.xlane.f32.xlu0 %v1155
    %v1157 = vpop.xlane.xlu0 %1156
    %vm1158 = vcmp.eq.f32.partialorder %v1155, %v1157
    %v1159 = vsel %vm1158, %v1154, inf
    %1160 = vmin.xlane.f32.xlu0 %v1159
    %v1161 = vpop.xlane.xlu0 %1160
    %v1162 = vcvt.f32.s32 %v1161
    %v1163 = vcvt.f32.s32 %v1157
    %v1164 = vshll.u32 %v1163, 16
    %v1165 = vadd.s32 %v1164, %v1162
    %vm1166 = vcmp.eq.s32.totalorder %v153, %v1165
    %v1167 = vsel %vm1166, 1, 0
    %v1168 = vcvt.s32.f32 %v1167
    %s1169 = sld [smem:[#allocation2 + $0x4]]
    %p1170 = scmp.ne.s32.totalorder %s1169, 0
    %s1171 = scalar_select %p1170, 1, 0
    %s1172 = scvt.s32.f32 %s1171
    %v1173 = vstv %s1172
    %v1174 = vmul.f32 %v1173, %v1144
    %s1175 = ssub.f32 1.0, %s1172
    %v1176 = vstv %s1175
    %v1177 = vmul.f32 %v1176, %v1168
    %v1178 = vadd.f32 %v1174, %v1177
    %v1179 = vld [vmem:[#allocation11] sm:$0xff]
    %v1180 = vld [vmem:[#allocation11 + $0x8] sm:$0xff]
    %v1181 = vld [vmem:[#allocation11 + $0x10] sm:$0xff]
    %v1182 = vld [vmem:[#allocation11 + $0x18] sm:$0xff]
    %v1183 = vld [vmem:[#allocation11 + $0x20] sm:$0xff]
    %v1184 = vld [vmem:[#allocation11 + $0x28] sm:$0xff]
    %v1185 = vld [vmem:[#allocation11 + $0x30] sm:$0xff]
    %v1186 = vld [vmem:[#allocation11 + $0x38] sm:$0xff]
    %v1187 = vld [vmem:[#allocation11 + $0x40] sm:$0xff]
    %v1188 = vld [vmem:[#allocation11 + $0x48] sm:$0xff]
    %v1189 = vld [vmem:[#allocation11 + $0x50] sm:$0xff]
    %v1190 = vld [vmem:[#allocation11 + $0x58] sm:$0xff]
    %v1191 = vld [vmem:[#allocation11 + $0x60] sm:$0xff]
    %v1192 = vld [vmem:[#allocation11 + $0x68] sm:$0xff]
    %v1193 = vld [vmem:[#allocation11 + $0x70] sm:$0xff]
    %v1194 = vld [vmem:[#allocation11 + $0x78] sm:$0xff]
    %v1195 = vld [vmem:[#allocation14] sm:$0xff]
    %v1196 = vld [vmem:[#allocation14 + $0x8] sm:$0xff]
    %v1197 = vld [vmem:[#allocation14 + $0x10] sm:$0xff]
    %v1198 = vld [vmem:[#allocation14 + $0x18] sm:$0xff]
    %1199 = vmatpush.msra.mxu0 0.0
    %1200 = vmatpush.msra.mxu0 0.0
    %1201 = vmatpush.msra.mxu0 0.0
    %1202 = vmatpush.msra.mxu0 0.0
    %1203 = vmatpush.msra.mxu0 0.0
    %1204 = vmatpush.msra.mxu0 0.0
    %1205 = vmatpush.msra.mxu0 0.0
    %1206 = vmatpush.msra.mxu0 0.0
    %1207 = vmatpush.msra.mxu0 0.0
    %1208 = vmatpush.msra.mxu0 0.0
    %1209 = vmatpush.msra.mxu0 0.0
    %1210 = vmatpush.msra.mxu0 0.0
    %1211 = vmatpush.msra.mxu0 %v1198
    %1212 = vmatpush.msra.mxu0 %v1197
    %1213 = vmatpush.msra.mxu0 %v1196
    %1214 = vmatpush.msra.mxu0 %v1195
    %1215 = vmatmul.f32.gmra.mxu0 %v1053
    %v1216 = vpop.f32.mrf.mxu0
    %v1217 = vadd.f32 0.0, %v1216
    %1218 = vdwg.mxu0
    %1219 = vmatpush.msra.mxu0 %v1194
    %1220 = vmatpush.msra.mxu0 %v1193
    %1221 = vmatpush.msra.mxu0 %v1192
    %1222 = vmatpush.msra.mxu0 %v1191
    %1223 = vmatpush.msra.mxu0 %v1190
    %1224 = vmatpush.msra.mxu0 %v1189
    %1225 = vmatpush.msra.mxu0 %v1188
    %1226 = vmatpush.msra.mxu0 %v1187
    %1227 = vmatpush.msra.mxu0 %v1186
    %1228 = vmatpush.msra.mxu0 %v1185
    %1229 = vmatpush.msra.mxu0 %v1184
    %1230 = vmatpush.msra.mxu0 %v1183
    %1231 = vmatpush.msra.mxu0 %v1182
    %1232 = vmatpush.msra.mxu0 %v1181
    %1233 = vmatpush.msra.mxu0 %v1180
    %1234 = vmatpush.msra.mxu0 %v1179
    %1235 = vmatmul.f32.gmra.mxu0 %v1178
    %v1236 = vpop.f32.mrf.mxu0
    %v1237 = vadd.f32 %v1217, %v1236
    %1238 = vdwg.mxu0
    %v1239 = vld [vmem:[%s7] sm:$0x1]
    %v1241 = vperm.slane %v1239, 0
    %v1243 = vadd.f32 %v1237, %v1241
    %v1244 = vmul.f32 %v1243, 0.5
    %v1245 = vsel %vm158, %v1243, %v1244
    %v1246 = vtanh.pop %v1245
    %v1247 = vmul.f32 %v1246, 0.5
    %v1248 = vadd.f32 %v1247, 0.5
    %v1249 = vsel %vm158, %v1246, %v1248
    %v1250 = vmul.f32 %v1249, %v1015
    %1252 = vrot.lane.b32.xlu0 %v1249, 64
    %v1253 = vpop.permute.xlu0 %1252
    %v1255 = vmul.f32 %v1249, %v1253
    %1257 = vrot.lane.b32.xlu0 %v1255, 32
    %v1258 = vpop.permute.xlu0 %1257
    %v1260 = vadd.f32 %v1250, %v1258
    %v1261 = vtanh.pop %v1260
    %1263 = vrot.lane.b32.xlu0 %v1261, 64
    %v1264 = vpop.permute.xlu0 %1263
    %v1266 = vmul.f32 %v1249, %v1264
    %v1267 = vld [vmem:[%s275] sm:$0xff]
    %v1268 = vld [vmem:[%s275 + $0x8] sm:$0xff]
    %v1269 = vld [vmem:[%s275 + $0x10] sm:$0xff]
    %v1270 = vld [vmem:[%s275 + $0x18] sm:$0xff]
    %v1271 = vld [vmem:[%s280] sm:$0xff]
    %v1272 = vld [vmem:[%s280 + $0x8] sm:$0xff]
    %v1273 = vld [vmem:[%s280 + $0x10] sm:$0xff]
    %v1274 = vld [vmem:[%s280 + $0x18] sm:$0xff]
    %1275 = vmatpush.msra.mxu0 0.0
    %1276 = vmatpush.msra.mxu0 0.0
    %1277 = vmatpush.msra.mxu0 0.0
    %1278 = vmatpush.msra.mxu0 0.0
    %1279 = vmatpush.msra.mxu0 0.0
    %1280 = vmatpush.msra.mxu0 0.0
    %1281 = vmatpush.msra.mxu0 0.0
    %1282 = vmatpush.msra.mxu0 0.0
    %1283 = vmatpush.msra.mxu0 0.0
    %1284 = vmatpush.msra.mxu0 0.0
    %1285 = vmatpush.msra.mxu0 0.0
    %1286 = vmatpush.msra.mxu0 0.0
    %1287 = vmatpush.msra.mxu0 %v1274
    %1288 = vmatpush.msra.mxu0 %v1273
    %1289 = vmatpush.msra.mxu0 %v1272
    %1290 = vmatpush.msra.mxu0 %v1271
    %1291 = vmatmul.f32.gmra.mxu0 %v1110
    %v1292 = vpop.f32.mrf.mxu0
    %v1293 = vadd.f32 0.0, %v1292
    %1294 = vdwg.mxu0
    %1296 = vrot.lane.b32.xlu0 %v1266, 32
    %v1297 = vpop.permute.xlu0 %1296
    %v1298 = vsel %vm199, %v1297, 0
    %1300 = vmatpush.msra.mxu0 0.0
    %1301 = vmatpush.msra.mxu0 0.0
    %1302 = vmatpush.msra.mxu0 0.0
    %1303 = vmatpush.msra.mxu0 0.0
    %1304 = vmatpush.msra.mxu0 0.0
    %1305 = vmatpush.msra.mxu0 0.0
    %1306 = vmatpush.msra.mxu0 0.0
    %1307 = vmatpush.msra.mxu0 0.0
    %1308 = vmatpush.msra.mxu0 0.0
    %1309 = vmatpush.msra.mxu0 0.0
    %1310 = vmatpush.msra.mxu0 0.0
    %1311 = vmatpush.msra.mxu0 0.0
    %1312 = vmatpush.msra.mxu0 %v1270
    %1313 = vmatpush.msra.mxu0 %v1269
    %1314 = vmatpush.msra.mxu0 %v1268
    %1315 = vmatpush.msra.mxu0 %v1267
    %1316 = vmatmul.f32.gmra.mxu0 %v1298
    %v1317 = vpop.f32.mrf.mxu0
    %v1318 = vadd.f32 %v1293, %v1317
    %1319 = vdwg.mxu0
    %v1320 = vld [vmem:[%s333] sm:$0x1]
    %v1322 = vperm.slane %v1320, 0
    %v1324 = vadd.f32 %v1318, %v1322
    %v1325 = vmul.f32 %v1324, 0.5
    %v1326 = vsel %vm158, %v1324, %v1325
    %v1327 = vtanh.pop %v1326
    %v1328 = vmul.f32 %v1327, 0.5
    %v1329 = vadd.f32 %v1328, 0.5
    %v1330 = vsel %vm158, %v1327, %v1329
    %v1331 = vmul.f32 %v1330, %v1096
    %1333 = vrot.lane.b32.xlu0 %v1330, 64
    %v1334 = vpop.permute.xlu0 %1333
    %v1336 = vmul.f32 %v1330, %v1334
    %1338 = vrot.lane.b32.xlu0 %v1336, 32
    %v1339 = vpop.permute.xlu0 %1338
    %v1341 = vadd.f32 %v1331, %v1339
    %v1342 = vtanh.pop %v1341
    %1344 = vrot.lane.b32.xlu0 %v1342, 64
    %v1345 = vpop.permute.xlu0 %1344
    %v1347 = vmul.f32 %v1330, %v1345
    %v1348 = vld [vmem:[#allocation15] sm:$0xff]
    %v1349 = vld [vmem:[#allocation15 + $0x8] sm:$0xff]
    %v1350 = vld [vmem:[#allocation15 + $0x10] sm:$0xff]
    %v1351 = vld [vmem:[#allocation15 + $0x18] sm:$0xff]
    %1353 = vrot.lane.b32.xlu0 %v1347, 32
    %v1354 = vpop.permute.xlu0 %1353
    %v1355 = vsel %vm199, %v1354, 0
    %1357 = vmatpush.msra.mxu0 0.0
    %1358 = vmatpush.msra.mxu0 0.0
    %1359 = vmatpush.msra.mxu0 0.0
    %1360 = vmatpush.msra.mxu0 0.0
    %1361 = vmatpush.msra.mxu0 0.0
    %1362 = vmatpush.msra.mxu0 0.0
    %1363 = vmatpush.msra.mxu0 0.0
    %1364 = vmatpush.msra.mxu0 0.0
    %1365 = vmatpush.msra.mxu0 0.0
    %1366 = vmatpush.msra.mxu0 0.0
    %1367 = vmatpush.msra.mxu0 0.0
    %1368 = vmatpush.msra.mxu0 0.0
    %1369 = vmatpush.msra.mxu0 %v1351
    %1370 = vmatpush.msra.mxu0 %v1350
    %1371 = vmatpush.msra.mxu0 %v1349
    %1372 = vmatpush.msra.mxu0 %v1348
    %1373 = vmatmul.f32.gmra.mxu0 %v1355
    %v1374 = vpop.f32.mrf.mxu0
    %v1375 = vadd.f32 0.0, %v1374
    %1376 = vdwg.mxu0
    %1377 = vst [vmem:[#allocation17 + $0x8] sm:$0x3] %v1375
    %s1378 = sld [smem:[#allocation6 + $0xa]]
    %v1379 = vstv %s1378
    %vm1380 = vcmp.eq.s32.totalorder %v153, %v1379
    %v1381 = vsel %vm1380, 1, 0
    %v1382 = vcvt.s32.f32 %v1381
    %v1383 = vsel %vm166, %v1382, 0.0
    %s1384 = sld [smem:[#allocation6 + $0xb]]
    %v1385 = vstv %s1384
    %vm1386 = vcmp.eq.s32.totalorder %v153, %v1385
    %v1387 = vsel %vm1386, 1, 0
    %v1388 = vcvt.s32.f32 %v1387
    %v1389 = vsel %vm173, %v1388, %v1383
    %v1390 = vsel %vm408, %v1375, -1e+30
    %v1391 = vsel %vm410, %v1390, -inf
    %1392 = vmax.xlane.f32.xlu0 %v1391
    %v1393 = vpop.xlane.xlu0 %1392
    %vm1394 = vcmp.ge.f32.partialorder %v1390, %v1393
    %v1395 = vsel %vm1394, %v153, 128
    %v1396 = vsel %vm410, %v1395, 2147483647
    %v1397 = vand.u32 %v1396, 65535
    %v1398 = vshra.s32 %v1396, 16
    %v1399 = vcvt.s32.f32 %v1397
    %v1400 = vcvt.s32.f32 %v1398
    %1401 = vmin.xlane.f32.xlu0 %v1400
    %v1402 = vpop.xlane.xlu0 %1401
    %vm1403 = vcmp.eq.f32.partialorder %v1400, %v1402
    %v1404 = vsel %vm1403, %v1399, inf
    %1405 = vmin.xlane.f32.xlu0 %v1404
    %v1406 = vpop.xlane.xlu0 %1405
    %v1407 = vcvt.f32.s32 %v1406
    %v1408 = vcvt.f32.s32 %v1402
    %v1409 = vshll.u32 %v1408, 16
    %v1410 = vadd.s32 %v1409, %v1407
    %vm1411 = vcmp.eq.s32.totalorder %v153, %v1410
    %v1412 = vsel %vm1411, 1, 0
    %v1413 = vcvt.s32.f32 %v1412
    %s1414 = sld [smem:[#allocation2 + $0x5]]
    %p1415 = scmp.ne.s32.totalorder %s1414, 0
    %s1416 = scalar_select %p1415, 1, 0
    %s1417 = scvt.s32.f32 %s1416
    %v1418 = vstv %s1417
    %v1419 = vmul.f32 %v1418, %v1389
    %s1420 = ssub.f32 1.0, %s1417
    %v1421 = vstv %s1420
    %v1422 = vmul.f32 %v1421, %v1413
    %v1423 = vadd.f32 %v1419, %v1422
    %v1424 = vld [vmem:[#allocation11] sm:$0xff]
    %v1425 = vld [vmem:[#allocation11 + $0x8] sm:$0xff]
    %v1426 = vld [vmem:[#allocation11 + $0x10] sm:$0xff]
    %v1427 = vld [vmem:[#allocation11 + $0x18] sm:$0xff]
    %v1428 = vld [vmem:[#allocation11 + $0x20] sm:$0xff]
    %v1429 = vld [vmem:[#allocation11 + $0x28] sm:$0xff]
    %v1430 = vld [vmem:[#allocation11 + $0x30] sm:$0xff]
    %v1431 = vld [vmem:[#allocation11 + $0x38] sm:$0xff]
    %v1432 = vld [vmem:[#allocation11 + $0x40] sm:$0xff]
    %v1433 = vld [vmem:[#allocation11 + $0x48] sm:$0xff]
    %v1434 = vld [vmem:[#allocation11 + $0x50] sm:$0xff]
    %v1435 = vld [vmem:[#allocation11 + $0x58] sm:$0xff]
    %v1436 = vld [vmem:[#allocation11 + $0x60] sm:$0xff]
    %v1437 = vld [vmem:[#allocation11 + $0x68] sm:$0xff]
    %v1438 = vld [vmem:[#allocation11 + $0x70] sm:$0xff]
    %v1439 = vld [vmem:[#allocation11 + $0x78] sm:$0xff]
    %v1440 = vld [vmem:[#allocation14] sm:$0xff]
    %v1441 = vld [vmem:[#allocation14 + $0x8] sm:$0xff]
    %v1442 = vld [vmem:[#allocation14 + $0x10] sm:$0xff]
    %v1443 = vld [vmem:[#allocation14 + $0x18] sm:$0xff]
    %1444 = vmatpush.msra.mxu0 0.0
    %1445 = vmatpush.msra.mxu0 0.0
    %1446 = vmatpush.msra.mxu0 0.0
    %1447 = vmatpush.msra.mxu0 0.0
    %1448 = vmatpush.msra.mxu0 0.0
    %1449 = vmatpush.msra.mxu0 0.0
    %1450 = vmatpush.msra.mxu0 0.0
    %1451 = vmatpush.msra.mxu0 0.0
    %1452 = vmatpush.msra.mxu0 0.0
    %1453 = vmatpush.msra.mxu0 0.0
    %1454 = vmatpush.msra.mxu0 0.0
    %1455 = vmatpush.msra.mxu0 0.0
    %1456 = vmatpush.msra.mxu0 %v1443
    %1457 = vmatpush.msra.mxu0 %v1442
    %1458 = vmatpush.msra.mxu0 %v1441
    %1459 = vmatpush.msra.mxu0 %v1440
    %1460 = vmatmul.f32.gmra.mxu0 %v1298
    %v1461 = vpop.f32.mrf.mxu0
    %v1462 = vadd.f32 0.0, %v1461
    %1463 = vdwg.mxu0
    %1464 = vmatpush.msra.mxu0 %v1439
    %1465 = vmatpush.msra.mxu0 %v1438
    %1466 = vmatpush.msra.mxu0 %v1437
    %1467 = vmatpush.msra.mxu0 %v1436
    %1468 = vmatpush.msra.mxu0 %v1435
    %1469 = vmatpush.msra.mxu0 %v1434
    %1470 = vmatpush.msra.mxu0 %v1433
    %1471 = vmatpush.msra.mxu0 %v1432
    %1472 = vmatpush.msra.mxu0 %v1431
    %1473 = vmatpush.msra.mxu0 %v1430
    %1474 = vmatpush.msra.mxu0 %v1429
    %1475 = vmatpush.msra.mxu0 %v1428
    %1476 = vmatpush.msra.mxu0 %v1427
    %1477 = vmatpush.msra.mxu0 %v1426
    %1478 = vmatpush.msra.mxu0 %v1425
    %1479 = vmatpush.msra.mxu0 %v1424
    %1480 = vmatmul.f32.gmra.mxu0 %v1423
    %v1481 = vpop.f32.mrf.mxu0
    %v1482 = vadd.f32 %v1462, %v1481
    %1483 = vdwg.mxu0
    %v1484 = vld [vmem:[%s7] sm:$0x1]
    %v1486 = vperm.slane %v1484, 0
    %v1488 = vadd.f32 %v1482, %v1486
    %v1489 = vmul.f32 %v1488, 0.5
    %v1490 = vsel %vm158, %v1488, %v1489
    %v1491 = vtanh.pop %v1490
    %v1492 = vmul.f32 %v1491, 0.5
    %v1493 = vadd.f32 %v1492, 0.5
    %v1494 = vsel %vm158, %v1491, %v1493
    %v1495 = vmul.f32 %v1494, %v1260
    %1497 = vrot.lane.b32.xlu0 %v1494, 64
    %v1498 = vpop.permute.xlu0 %1497
    %v1500 = vmul.f32 %v1494, %v1498
    %1502 = vrot.lane.b32.xlu0 %v1500, 32
    %v1503 = vpop.permute.xlu0 %1502
    %v1505 = vadd.f32 %v1495, %v1503
    %v1506 = vtanh.pop %v1505
    %1508 = vrot.lane.b32.xlu0 %v1506, 64
    %v1509 = vpop.permute.xlu0 %1508
    %v1511 = vmul.f32 %v1494, %v1509
    %v1512 = vld [vmem:[%s275] sm:$0xff]
    %v1513 = vld [vmem:[%s275 + $0x8] sm:$0xff]
    %v1514 = vld [vmem:[%s275 + $0x10] sm:$0xff]
    %v1515 = vld [vmem:[%s275 + $0x18] sm:$0xff]
    %v1516 = vld [vmem:[%s280] sm:$0xff]
    %v1517 = vld [vmem:[%s280 + $0x8] sm:$0xff]
    %v1518 = vld [vmem:[%s280 + $0x10] sm:$0xff]
    %v1519 = vld [vmem:[%s280 + $0x18] sm:$0xff]
    %1520 = vmatpush.msra.mxu0 0.0
    %1521 = vmatpush.msra.mxu0 0.0
    %1522 = vmatpush.msra.mxu0 0.0
    %1523 = vmatpush.msra.mxu0 0.0
    %1524 = vmatpush.msra.mxu0 0.0
    %1525 = vmatpush.msra.mxu0 0.0
    %1526 = vmatpush.msra.mxu0 0.0
    %1527 = vmatpush.msra.mxu0 0.0
    %1528 = vmatpush.msra.mxu0 0.0
    %1529 = vmatpush.msra.mxu0 0.0
    %1530 = vmatpush.msra.mxu0 0.0
    %1531 = vmatpush.msra.mxu0 0.0
    %1532 = vmatpush.msra.mxu0 %v1519
    %1533 = vmatpush.msra.mxu0 %v1518
    %1534 = vmatpush.msra.mxu0 %v1517
    %1535 = vmatpush.msra.mxu0 %v1516
    %1536 = vmatmul.f32.gmra.mxu0 %v1355
    %v1537 = vpop.f32.mrf.mxu0
    %v1538 = vadd.f32 0.0, %v1537
    %1539 = vdwg.mxu0
    %1541 = vrot.lane.b32.xlu0 %v1511, 32
    %v1542 = vpop.permute.xlu0 %1541
    %v1543 = vsel %vm199, %v1542, 0
    %1545 = vmatpush.msra.mxu0 0.0
    %1546 = vmatpush.msra.mxu0 0.0
    %1547 = vmatpush.msra.mxu0 0.0
    %1548 = vmatpush.msra.mxu0 0.0
    %1549 = vmatpush.msra.mxu0 0.0
    %1550 = vmatpush.msra.mxu0 0.0
    %1551 = vmatpush.msra.mxu0 0.0
    %1552 = vmatpush.msra.mxu0 0.0
    %1553 = vmatpush.msra.mxu0 0.0
    %1554 = vmatpush.msra.mxu0 0.0
    %1555 = vmatpush.msra.mxu0 0.0
    %1556 = vmatpush.msra.mxu0 0.0
    %1557 = vmatpush.msra.mxu0 %v1515
    %1558 = vmatpush.msra.mxu0 %v1514
    %1559 = vmatpush.msra.mxu0 %v1513
    %1560 = vmatpush.msra.mxu0 %v1512
    %1561 = vmatmul.f32.gmra.mxu0 %v1543
    %v1562 = vpop.f32.mrf.mxu0
    %v1563 = vadd.f32 %v1538, %v1562
    %1564 = vdwg.mxu0
    %v1565 = vld [vmem:[%s333] sm:$0x1]
    %v1567 = vperm.slane %v1565, 0
    %v1569 = vadd.f32 %v1563, %v1567
    %v1570 = vmul.f32 %v1569, 0.5
    %v1571 = vsel %vm158, %v1569, %v1570
    %v1572 = vtanh.pop %v1571
    %v1573 = vmul.f32 %v1572, 0.5
    %v1574 = vadd.f32 %v1573, 0.5
    %v1575 = vsel %vm158, %v1572, %v1574
    %v1576 = vmul.f32 %v1575, %v1341
    %1578 = vrot.lane.b32.xlu0 %v1575, 64
    %v1579 = vpop.permute.xlu0 %1578
    %v1581 = vmul.f32 %v1575, %v1579
    %1583 = vrot.lane.b32.xlu0 %v1581, 32
    %v1584 = vpop.permute.xlu0 %1583
    %v1586 = vadd.f32 %v1576, %v1584
    %v1587 = vtanh.pop %v1586
    %1589 = vrot.lane.b32.xlu0 %v1587, 64
    %v1590 = vpop.permute.xlu0 %1589
    %v1592 = vmul.f32 %v1575, %v1590
    %v1593 = vld [vmem:[#allocation15] sm:$0xff]
    %v1594 = vld [vmem:[#allocation15 + $0x8] sm:$0xff]
    %v1595 = vld [vmem:[#allocation15 + $0x10] sm:$0xff]
    %v1596 = vld [vmem:[#allocation15 + $0x18] sm:$0xff]
    %1598 = vrot.lane.b32.xlu0 %v1592, 32
    %v1599 = vpop.permute.xlu0 %1598
    %v1600 = vsel %vm199, %v1599, 0
    %1602 = vmatpush.msra.mxu0 0.0
    %1603 = vmatpush.msra.mxu0 0.0
    %1604 = vmatpush.msra.mxu0 0.0
    %1605 = vmatpush.msra.mxu0 0.0
    %1606 = vmatpush.msra.mxu0 0.0
    %1607 = vmatpush.msra.mxu0 0.0
    %1608 = vmatpush.msra.mxu0 0.0
    %1609 = vmatpush.msra.mxu0 0.0
    %1610 = vmatpush.msra.mxu0 0.0
    %1611 = vmatpush.msra.mxu0 0.0
    %1612 = vmatpush.msra.mxu0 0.0
    %1613 = vmatpush.msra.mxu0 0.0
    %1614 = vmatpush.msra.mxu0 %v1596
    %1615 = vmatpush.msra.mxu0 %v1595
    %1616 = vmatpush.msra.mxu0 %v1594
    %1617 = vmatpush.msra.mxu0 %v1593
    %1618 = vmatmul.f32.gmra.mxu0 %v1600
    %v1619 = vpop.f32.mrf.mxu0
    %v1620 = vadd.f32 0.0, %v1619
    %1621 = vdwg.mxu0
    %1622 = vst [vmem:[#allocation17 + $0xa] sm:$0x3] %v1620
    %s1623 = sld [smem:[#allocation6 + $0xc]]
    %v1624 = vstv %s1623
    %vm1625 = vcmp.eq.s32.totalorder %v153, %v1624
    %v1626 = vsel %vm1625, 1, 0
    %v1627 = vcvt.s32.f32 %v1626
    %v1628 = vsel %vm166, %v1627, 0.0
    %s1629 = sld [smem:[#allocation6 + $0xd]]
    %v1630 = vstv %s1629
    %vm1631 = vcmp.eq.s32.totalorder %v153, %v1630
    %v1632 = vsel %vm1631, 1, 0
    %v1633 = vcvt.s32.f32 %v1632
    %v1634 = vsel %vm173, %v1633, %v1628
    %v1635 = vsel %vm408, %v1620, -1e+30
    %v1636 = vsel %vm410, %v1635, -inf
    %1637 = vmax.xlane.f32.xlu0 %v1636
    %v1638 = vpop.xlane.xlu0 %1637
    %vm1639 = vcmp.ge.f32.partialorder %v1635, %v1638
    %v1640 = vsel %vm1639, %v153, 128
    %v1641 = vsel %vm410, %v1640, 2147483647
    %v1642 = vand.u32 %v1641, 65535
    %v1643 = vshra.s32 %v1641, 16
    %v1644 = vcvt.s32.f32 %v1642
    %v1645 = vcvt.s32.f32 %v1643
    %1646 = vmin.xlane.f32.xlu0 %v1645
    %v1647 = vpop.xlane.xlu0 %1646
    %vm1648 = vcmp.eq.f32.partialorder %v1645, %v1647
    %v1649 = vsel %vm1648, %v1644, inf
    %1650 = vmin.xlane.f32.xlu0 %v1649
    %v1651 = vpop.xlane.xlu0 %1650
    %v1652 = vcvt.f32.s32 %v1651
    %v1653 = vcvt.f32.s32 %v1647
    %v1654 = vshll.u32 %v1653, 16
    %v1655 = vadd.s32 %v1654, %v1652
    %vm1656 = vcmp.eq.s32.totalorder %v153, %v1655
    %v1657 = vsel %vm1656, 1, 0
    %v1658 = vcvt.s32.f32 %v1657
    %s1659 = sld [smem:[#allocation2 + $0x6]]
    %p1660 = scmp.ne.s32.totalorder %s1659, 0
    %s1661 = scalar_select %p1660, 1, 0
    %s1662 = scvt.s32.f32 %s1661
    %v1663 = vstv %s1662
    %v1664 = vmul.f32 %v1663, %v1634
    %s1665 = ssub.f32 1.0, %s1662
    %v1666 = vstv %s1665
    %v1667 = vmul.f32 %v1666, %v1658
    %v1668 = vadd.f32 %v1664, %v1667
    %v1669 = vld [vmem:[#allocation11] sm:$0xff]
    %v1670 = vld [vmem:[#allocation11 + $0x8] sm:$0xff]
    %v1671 = vld [vmem:[#allocation11 + $0x10] sm:$0xff]
    %v1672 = vld [vmem:[#allocation11 + $0x18] sm:$0xff]
    %v1673 = vld [vmem:[#allocation11 + $0x20] sm:$0xff]
    %v1674 = vld [vmem:[#allocation11 + $0x28] sm:$0xff]
    %v1675 = vld [vmem:[#allocation11 + $0x30] sm:$0xff]
    %v1676 = vld [vmem:[#allocation11 + $0x38] sm:$0xff]
    %v1677 = vld [vmem:[#allocation11 + $0x40] sm:$0xff]
    %v1678 = vld [vmem:[#allocation11 + $0x48] sm:$0xff]
    %v1679 = vld [vmem:[#allocation11 + $0x50] sm:$0xff]
    %v1680 = vld [vmem:[#allocation11 + $0x58] sm:$0xff]
    %v1681 = vld [vmem:[#allocation11 + $0x60] sm:$0xff]
    %v1682 = vld [vmem:[#allocation11 + $0x68] sm:$0xff]
    %v1683 = vld [vmem:[#allocation11 + $0x70] sm:$0xff]
    %v1684 = vld [vmem:[#allocation11 + $0x78] sm:$0xff]
    %v1685 = vld [vmem:[#allocation14] sm:$0xff]
    %v1686 = vld [vmem:[#allocation14 + $0x8] sm:$0xff]
    %v1687 = vld [vmem:[#allocation14 + $0x10] sm:$0xff]
    %v1688 = vld [vmem:[#allocation14 + $0x18] sm:$0xff]
    %1689 = vmatpush.msra.mxu0 0.0
    %1690 = vmatpush.msra.mxu0 0.0
    %1691 = vmatpush.msra.mxu0 0.0
    %1692 = vmatpush.msra.mxu0 0.0
    %1693 = vmatpush.msra.mxu0 0.0
    %1694 = vmatpush.msra.mxu0 0.0
    %1695 = vmatpush.msra.mxu0 0.0
    %1696 = vmatpush.msra.mxu0 0.0
    %1697 = vmatpush.msra.mxu0 0.0
    %1698 = vmatpush.msra.mxu0 0.0
    %1699 = vmatpush.msra.mxu0 0.0
    %1700 = vmatpush.msra.mxu0 0.0
    %1701 = vmatpush.msra.mxu0 %v1688
    %1702 = vmatpush.msra.mxu0 %v1687
    %1703 = vmatpush.msra.mxu0 %v1686
    %1704 = vmatpush.msra.mxu0 %v1685
    %1705 = vmatmul.f32.gmra.mxu0 %v1543
    %v1706 = vpop.f32.mrf.mxu0
    %v1707 = vadd.f32 0.0, %v1706
    %1708 = vdwg.mxu0
    %1709 = vmatpush.msra.mxu0 %v1684
    %1710 = vmatpush.msra.mxu0 %v1683
    %1711 = vmatpush.msra.mxu0 %v1682
    %1712 = vmatpush.msra.mxu0 %v1681
    %1713 = vmatpush.msra.mxu0 %v1680
    %1714 = vmatpush.msra.mxu0 %v1679
    %1715 = vmatpush.msra.mxu0 %v1678
    %1716 = vmatpush.msra.mxu0 %v1677
    %1717 = vmatpush.msra.mxu0 %v1676
    %1718 = vmatpush.msra.mxu0 %v1675
    %1719 = vmatpush.msra.mxu0 %v1674
    %1720 = vmatpush.msra.mxu0 %v1673
    %1721 = vmatpush.msra.mxu0 %v1672
    %1722 = vmatpush.msra.mxu0 %v1671
    %1723 = vmatpush.msra.mxu0 %v1670
    %1724 = vmatpush.msra.mxu0 %v1669
    %1725 = vmatmul.f32.gmra.mxu0 %v1668
    %v1726 = vpop.f32.mrf.mxu0
    %v1727 = vadd.f32 %v1707, %v1726
    %1728 = vdwg.mxu0
    %v1729 = vld [vmem:[%s7] sm:$0x1]
    %v1731 = vperm.slane %v1729, 0
    %v1733 = vadd.f32 %v1727, %v1731
    %v1734 = vmul.f32 %v1733, 0.5
    %v1735 = vsel %vm158, %v1733, %v1734
    %v1736 = vtanh.pop %v1735
    %v1737 = vmul.f32 %v1736, 0.5
    %v1738 = vadd.f32 %v1737, 0.5
    %v1739 = vsel %vm158, %v1736, %v1738
    %v1740 = vmul.f32 %v1739, %v1505
    %1742 = vrot.lane.b32.xlu0 %v1739, 64
    %v1743 = vpop.permute.xlu0 %1742
    %v1745 = vmul.f32 %v1739, %v1743
    %1747 = vrot.lane.b32.xlu0 %v1745, 32
    %v1748 = vpop.permute.xlu0 %1747
    %v1750 = vadd.f32 %v1740, %v1748
    %v1751 = vtanh.pop %v1750
    %1753 = vrot.lane.b32.xlu0 %v1751, 64
    %v1754 = vpop.permute.xlu0 %1753
    %v1756 = vmul.f32 %v1739, %v1754
    %v1757 = vld [vmem:[%s275] sm:$0xff]
    %v1758 = vld [vmem:[%s275 + $0x8] sm:$0xff]
    %v1759 = vld [vmem:[%s275 + $0x10] sm:$0xff]
    %v1760 = vld [vmem:[%s275 + $0x18] sm:$0xff]
    %v1761 = vld [vmem:[%s280] sm:$0xff]
    %v1762 = vld [vmem:[%s280 + $0x8] sm:$0xff]
    %v1763 = vld [vmem:[%s280 + $0x10] sm:$0xff]
    %v1764 = vld [vmem:[%s280 + $0x18] sm:$0xff]
    %1765 = vmatpush.msra.mxu0 0.0
    %1766 = vmatpush.msra.mxu0 0.0
    %1767 = vmatpush.msra.mxu0 0.0
    %1768 = vmatpush.msra.mxu0 0.0
    %1769 = vmatpush.msra.mxu0 0.0
    %1770 = vmatpush.msra.mxu0 0.0
    %1771 = vmatpush.msra.mxu0 0.0
    %1772 = vmatpush.msra.mxu0 0.0
    %1773 = vmatpush.msra.mxu0 0.0
    %1774 = vmatpush.msra.mxu0 0.0
    %1775 = vmatpush.msra.mxu0 0.0
    %1776 = vmatpush.msra.mxu0 0.0
    %1777 = vmatpush.msra.mxu0 %v1764
    %1778 = vmatpush.msra.mxu0 %v1763
    %1779 = vmatpush.msra.mxu0 %v1762
    %1780 = vmatpush.msra.mxu0 %v1761
    %1781 = vmatmul.f32.gmra.mxu0 %v1600
    %v1782 = vpop.f32.mrf.mxu0
    %v1783 = vadd.f32 0.0, %v1782
    %1784 = vdwg.mxu0
    %1786 = vrot.lane.b32.xlu0 %v1756, 32
    %v1787 = vpop.permute.xlu0 %1786
    %v1788 = vsel %vm199, %v1787, 0
    %1790 = vmatpush.msra.mxu0 0.0
    %1791 = vmatpush.msra.mxu0 0.0
    %1792 = vmatpush.msra.mxu0 0.0
    %1793 = vmatpush.msra.mxu0 0.0
    %1794 = vmatpush.msra.mxu0 0.0
    %1795 = vmatpush.msra.mxu0 0.0
    %1796 = vmatpush.msra.mxu0 0.0
    %1797 = vmatpush.msra.mxu0 0.0
    %1798 = vmatpush.msra.mxu0 0.0
    %1799 = vmatpush.msra.mxu0 0.0
    %1800 = vmatpush.msra.mxu0 0.0
    %1801 = vmatpush.msra.mxu0 0.0
    %1802 = vmatpush.msra.mxu0 %v1760
    %1803 = vmatpush.msra.mxu0 %v1759
    %1804 = vmatpush.msra.mxu0 %v1758
    %1805 = vmatpush.msra.mxu0 %v1757
    %1806 = vmatmul.f32.gmra.mxu0 %v1788
    %v1807 = vpop.f32.mrf.mxu0
    %v1808 = vadd.f32 %v1783, %v1807
    %1809 = vdwg.mxu0
    %v1810 = vld [vmem:[%s333] sm:$0x1]
    %v1812 = vperm.slane %v1810, 0
    %v1814 = vadd.f32 %v1808, %v1812
    %v1815 = vmul.f32 %v1814, 0.5
    %v1816 = vsel %vm158, %v1814, %v1815
    %v1817 = vtanh.pop %v1816
    %v1818 = vmul.f32 %v1817, 0.5
    %v1819 = vadd.f32 %v1818, 0.5
    %v1820 = vsel %vm158, %v1817, %v1819
    %v1821 = vmul.f32 %v1820, %v1586
    %1823 = vrot.lane.b32.xlu0 %v1820, 64
    %v1824 = vpop.permute.xlu0 %1823
    %v1826 = vmul.f32 %v1820, %v1824
    %1828 = vrot.lane.b32.xlu0 %v1826, 32
    %v1829 = vpop.permute.xlu0 %1828
    %v1831 = vadd.f32 %v1821, %v1829
    %v1832 = vtanh.pop %v1831
    %1834 = vrot.lane.b32.xlu0 %v1832, 64
    %v1835 = vpop.permute.xlu0 %1834
    %v1837 = vmul.f32 %v1820, %v1835
    %v1838 = vld [vmem:[#allocation15] sm:$0xff]
    %v1839 = vld [vmem:[#allocation15 + $0x8] sm:$0xff]
    %v1840 = vld [vmem:[#allocation15 + $0x10] sm:$0xff]
    %v1841 = vld [vmem:[#allocation15 + $0x18] sm:$0xff]
    %1843 = vrot.lane.b32.xlu0 %v1837, 32
    %v1844 = vpop.permute.xlu0 %1843
    %v1845 = vsel %vm199, %v1844, 0
    %1847 = vmatpush.msra.mxu0 0.0
    %1848 = vmatpush.msra.mxu0 0.0
    %1849 = vmatpush.msra.mxu0 0.0
    %1850 = vmatpush.msra.mxu0 0.0
    %1851 = vmatpush.msra.mxu0 0.0
    %1852 = vmatpush.msra.mxu0 0.0
    %1853 = vmatpush.msra.mxu0 0.0
    %1854 = vmatpush.msra.mxu0 0.0
    %1855 = vmatpush.msra.mxu0 0.0
    %1856 = vmatpush.msra.mxu0 0.0
    %1857 = vmatpush.msra.mxu0 0.0
    %1858 = vmatpush.msra.mxu0 0.0
    %1859 = vmatpush.msra.mxu0 %v1841
    %1860 = vmatpush.msra.mxu0 %v1840
    %1861 = vmatpush.msra.mxu0 %v1839
    %1862 = vmatpush.msra.mxu0 %v1838
    %1863 = vmatmul.f32.gmra.mxu0 %v1845
    %v1864 = vpop.f32.mrf.mxu0
    %v1865 = vadd.f32 0.0, %v1864
    %1866 = vdwg.mxu0
    %1867 = vst [vmem:[#allocation17 + $0xc] sm:$0x3] %v1865
    %s1868 = sld [smem:[#allocation6 + $0xe]]
    %v1869 = vstv %s1868
    %vm1870 = vcmp.eq.s32.totalorder %v153, %v1869
    %v1871 = vsel %vm1870, 1, 0
    %v1872 = vcvt.s32.f32 %v1871
    %v1873 = vsel %vm166, %v1872, 0.0
    %s1874 = sld [smem:[#allocation6 + $0xf]]
    %v1875 = vstv %s1874
    %vm1876 = vcmp.eq.s32.totalorder %v153, %v1875
    %v1877 = vsel %vm1876, 1, 0
    %v1878 = vcvt.s32.f32 %v1877
    %v1879 = vsel %vm173, %v1878, %v1873
    %v1880 = vsel %vm408, %v1865, -1e+30
    %v1881 = vsel %vm410, %v1880, -inf
    %1882 = vmax.xlane.f32.xlu0 %v1881
    %v1883 = vpop.xlane.xlu0 %1882
    %vm1884 = vcmp.ge.f32.partialorder %v1880, %v1883
    %v1885 = vsel %vm1884, %v153, 128
    %v1886 = vsel %vm410, %v1885, 2147483647
    %v1887 = vand.u32 %v1886, 65535
    %v1888 = vshra.s32 %v1886, 16
    %v1889 = vcvt.s32.f32 %v1887
    %v1890 = vcvt.s32.f32 %v1888
    %1891 = vmin.xlane.f32.xlu0 %v1890
    %v1892 = vpop.xlane.xlu0 %1891
    %vm1893 = vcmp.eq.f32.partialorder %v1890, %v1892
    %v1894 = vsel %vm1893, %v1889, inf
    %1895 = vmin.xlane.f32.xlu0 %v1894
    %v1896 = vpop.xlane.xlu0 %1895
    %v1897 = vcvt.f32.s32 %v1896
    %v1898 = vcvt.f32.s32 %v1892
    %v1899 = vshll.u32 %v1898, 16
    %v1900 = vadd.s32 %v1899, %v1897
    %vm1901 = vcmp.eq.s32.totalorder %v153, %v1900
    %v1902 = vsel %vm1901, 1, 0
    %v1903 = vcvt.s32.f32 %v1902
    %s1904 = sld [smem:[#allocation2 + $0x7]]
    %p1905 = scmp.ne.s32.totalorder %s1904, 0
    %s1906 = scalar_select %p1905, 1, 0
    %s1907 = scvt.s32.f32 %s1906
    %v1908 = vstv %s1907
    %v1909 = vmul.f32 %v1908, %v1879
    %s1910 = ssub.f32 1.0, %s1907
    %v1911 = vstv %s1910
    %v1912 = vmul.f32 %v1911, %v1903
    %v1913 = vadd.f32 %v1909, %v1912
    %v1914 = vld [vmem:[#allocation11] sm:$0xff]
    %v1915 = vld [vmem:[#allocation11 + $0x8] sm:$0xff]
    %v1916 = vld [vmem:[#allocation11 + $0x10] sm:$0xff]
    %v1917 = vld [vmem:[#allocation11 + $0x18] sm:$0xff]
    %v1918 = vld [vmem:[#allocation11 + $0x20] sm:$0xff]
    %v1919 = vld [vmem:[#allocation11 + $0x28] sm:$0xff]
    %v1920 = vld [vmem:[#allocation11 + $0x30] sm:$0xff]
    %v1921 = vld [vmem:[#allocation11 + $0x38] sm:$0xff]
    %v1922 = vld [vmem:[#allocation11 + $0x40] sm:$0xff]
    %v1923 = vld [vmem:[#allocation11 + $0x48] sm:$0xff]
    %v1924 = vld [vmem:[#allocation11 + $0x50] sm:$0xff]
    %v1925 = vld [vmem:[#allocation11 + $0x58] sm:$0xff]
    %v1926 = vld [vmem:[#allocation11 + $0x60] sm:$0xff]
    %v1927 = vld [vmem:[#allocation11 + $0x68] sm:$0xff]
    %v1928 = vld [vmem:[#allocation11 + $0x70] sm:$0xff]
    %v1929 = vld [vmem:[#allocation11 + $0x78] sm:$0xff]
    %v1930 = vld [vmem:[#allocation14] sm:$0xff]
    %v1931 = vld [vmem:[#allocation14 + $0x8] sm:$0xff]
    %v1932 = vld [vmem:[#allocation14 + $0x10] sm:$0xff]
    %v1933 = vld [vmem:[#allocation14 + $0x18] sm:$0xff]
    %1934 = vmatpush.msra.mxu0 0.0
    %1935 = vmatpush.msra.mxu0 0.0
    %1936 = vmatpush.msra.mxu0 0.0
    %1937 = vmatpush.msra.mxu0 0.0
    %1938 = vmatpush.msra.mxu0 0.0
    %1939 = vmatpush.msra.mxu0 0.0
    %1940 = vmatpush.msra.mxu0 0.0
    %1941 = vmatpush.msra.mxu0 0.0
    %1942 = vmatpush.msra.mxu0 0.0
    %1943 = vmatpush.msra.mxu0 0.0
    %1944 = vmatpush.msra.mxu0 0.0
    %1945 = vmatpush.msra.mxu0 0.0
    %1946 = vmatpush.msra.mxu0 %v1933
    %1947 = vmatpush.msra.mxu0 %v1932
    %1948 = vmatpush.msra.mxu0 %v1931
    %1949 = vmatpush.msra.mxu0 %v1930
    %1950 = vmatmul.f32.gmra.mxu0 %v1788
    %v1951 = vpop.f32.mrf.mxu0
    %v1952 = vadd.f32 0.0, %v1951
    %1953 = vdwg.mxu0
    %1954 = vmatpush.msra.mxu0 %v1929
    %1955 = vmatpush.msra.mxu0 %v1928
    %1956 = vmatpush.msra.mxu0 %v1927
    %1957 = vmatpush.msra.mxu0 %v1926
    %1958 = vmatpush.msra.mxu0 %v1925
    %1959 = vmatpush.msra.mxu0 %v1924
    %1960 = vmatpush.msra.mxu0 %v1923
    %1961 = vmatpush.msra.mxu0 %v1922
    %1962 = vmatpush.msra.mxu0 %v1921
    %1963 = vmatpush.msra.mxu0 %v1920
    %1964 = vmatpush.msra.mxu0 %v1919
    %1965 = vmatpush.msra.mxu0 %v1918
    %1966 = vmatpush.msra.mxu0 %v1917
    %1967 = vmatpush.msra.mxu0 %v1916
    %1968 = vmatpush.msra.mxu0 %v1915
    %1969 = vmatpush.msra.mxu0 %v1914
    %1970 = vmatmul.f32.gmra.mxu0 %v1913
    %v1971 = vpop.f32.mrf.mxu0
    %v1972 = vadd.f32 %v1952, %v1971
    %1973 = vdwg.mxu0
    %v1974 = vld [vmem:[%s7] sm:$0x1]
    %v1976 = vperm.slane %v1974, 0
    %v1978 = vadd.f32 %v1972, %v1976
    %v1979 = vmul.f32 %v1978, 0.5
    %v1980 = vsel %vm158, %v1978, %v1979
    %v1981 = vtanh.pop %v1980
    %v1982 = vmul.f32 %v1981, 0.5
    %v1983 = vadd.f32 %v1982, 0.5
    %v1984 = vsel %vm158, %v1981, %v1983
    %v1985 = vmul.f32 %v1984, %v1750
    %1987 = vrot.lane.b32.xlu0 %v1984, 64
    %v1988 = vpop.permute.xlu0 %1987
    %v1990 = vmul.f32 %v1984, %v1988
    %1992 = vrot.lane.b32.xlu0 %v1990, 32
    %v1993 = vpop.permute.xlu0 %1992
    %v1995 = vadd.f32 %v1985, %v1993
    %v1996 = vtanh.pop %v1995
    %1998 = vrot.lane.b32.xlu0 %v1996, 64
    %v1999 = vpop.permute.xlu0 %1998
    %v2001 = vmul.f32 %v1984, %v1999
    %v2002 = vld [vmem:[%s275] sm:$0xff]
    %v2003 = vld [vmem:[%s275 + $0x8] sm:$0xff]
    %v2004 = vld [vmem:[%s275 + $0x10] sm:$0xff]
    %v2005 = vld [vmem:[%s275 + $0x18] sm:$0xff]
    %v2006 = vld [vmem:[%s280] sm:$0xff]
    %v2007 = vld [vmem:[%s280 + $0x8] sm:$0xff]
    %v2008 = vld [vmem:[%s280 + $0x10] sm:$0xff]
    %v2009 = vld [vmem:[%s280 + $0x18] sm:$0xff]
    %2010 = vmatpush.msra.mxu0 0.0
    %2011 = vmatpush.msra.mxu0 0.0
    %2012 = vmatpush.msra.mxu0 0.0
    %2013 = vmatpush.msra.mxu0 0.0
    %2014 = vmatpush.msra.mxu0 0.0
    %2015 = vmatpush.msra.mxu0 0.0
    %2016 = vmatpush.msra.mxu0 0.0
    %2017 = vmatpush.msra.mxu0 0.0
    %2018 = vmatpush.msra.mxu0 0.0
    %2019 = vmatpush.msra.mxu0 0.0
    %2020 = vmatpush.msra.mxu0 0.0
    %2021 = vmatpush.msra.mxu0 0.0
    %2022 = vmatpush.msra.mxu0 %v2009
    %2023 = vmatpush.msra.mxu0 %v2008
    %2024 = vmatpush.msra.mxu0 %v2007
    %2025 = vmatpush.msra.mxu0 %v2006
    %2026 = vmatmul.f32.gmra.mxu0 %v1845
    %v2027 = vpop.f32.mrf.mxu0
    %v2028 = vadd.f32 0.0, %v2027
    %2029 = vdwg.mxu0
    %2031 = vrot.lane.b32.xlu0 %v2001, 32
    %v2032 = vpop.permute.xlu0 %2031
    %v2033 = vsel %vm199, %v2032, 0
    %2035 = vmatpush.msra.mxu0 0.0
    %2036 = vmatpush.msra.mxu0 0.0
    %2037 = vmatpush.msra.mxu0 0.0
    %2038 = vmatpush.msra.mxu0 0.0
    %2039 = vmatpush.msra.mxu0 0.0
    %2040 = vmatpush.msra.mxu0 0.0
    %2041 = vmatpush.msra.mxu0 0.0
    %2042 = vmatpush.msra.mxu0 0.0
    %2043 = vmatpush.msra.mxu0 0.0
    %2044 = vmatpush.msra.mxu0 0.0
    %2045 = vmatpush.msra.mxu0 0.0
    %2046 = vmatpush.msra.mxu0 0.0
    %2047 = vmatpush.msra.mxu0 %v2005
    %2048 = vmatpush.msra.mxu0 %v2004
    %2049 = vmatpush.msra.mxu0 %v2003
    %2050 = vmatpush.msra.mxu0 %v2002
    %2051 = vmatmul.f32.gmra.mxu0 %v2033
    %v2052 = vpop.f32.mrf.mxu0
    %v2053 = vadd.f32 %v2028, %v2052
    %2054 = vdwg.mxu0
    %v2055 = vld [vmem:[%s333] sm:$0x1]
    %v2057 = vperm.slane %v2055, 0
    %v2059 = vadd.f32 %v2053, %v2057
    %v2060 = vmul.f32 %v2059, 0.5
    %v2061 = vsel %vm158, %v2059, %v2060
    %v2062 = vtanh.pop %v2061
    %v2063 = vmul.f32 %v2062, 0.5
    %v2064 = vadd.f32 %v2063, 0.5
    %v2065 = vsel %vm158, %v2062, %v2064
    %v2066 = vmul.f32 %v2065, %v1831
    %2068 = vrot.lane.b32.xlu0 %v2065, 64
    %v2069 = vpop.permute.xlu0 %2068
    %v2071 = vmul.f32 %v2065, %v2069
    %2073 = vrot.lane.b32.xlu0 %v2071, 32
    %v2074 = vpop.permute.xlu0 %2073
    %v2076 = vadd.f32 %v2066, %v2074
    %v2077 = vtanh.pop %v2076
    %2079 = vrot.lane.b32.xlu0 %v2077, 64
    %v2080 = vpop.permute.xlu0 %2079
    %v2082 = vmul.f32 %v2065, %v2080
    %v2083 = vld [vmem:[#allocation15] sm:$0xff]
    %v2084 = vld [vmem:[#allocation15 + $0x8] sm:$0xff]
    %v2085 = vld [vmem:[#allocation15 + $0x10] sm:$0xff]
    %v2086 = vld [vmem:[#allocation15 + $0x18] sm:$0xff]
    %2088 = vrot.lane.b32.xlu0 %v2082, 32
    %v2089 = vpop.permute.xlu0 %2088
    %v2090 = vsel %vm199, %v2089, 0
    %2092 = vmatpush.msra.mxu0 0.0
    %2093 = vmatpush.msra.mxu0 0.0
    %2094 = vmatpush.msra.mxu0 0.0
    %2095 = vmatpush.msra.mxu0 0.0
    %2096 = vmatpush.msra.mxu0 0.0
    %2097 = vmatpush.msra.mxu0 0.0
    %2098 = vmatpush.msra.mxu0 0.0
    %2099 = vmatpush.msra.mxu0 0.0
    %2100 = vmatpush.msra.mxu0 0.0
    %2101 = vmatpush.msra.mxu0 0.0
    %2102 = vmatpush.msra.mxu0 0.0
    %2103 = vmatpush.msra.mxu0 0.0
    %2104 = vmatpush.msra.mxu0 %v2086
    %2105 = vmatpush.msra.mxu0 %v2085
    %2106 = vmatpush.msra.mxu0 %v2084
    %2107 = vmatpush.msra.mxu0 %v2083
    %2108 = vmatmul.f32.gmra.mxu0 %v2090
    %v2109 = vpop.f32.mrf.mxu0
    %v2110 = vadd.f32 0.0, %v2109
    %2111 = vdwg.mxu0
    %2112 = vst [vmem:[#allocation17 + $0xe] sm:$0x3] %v2110
    // Predicated region
    $region70: #{tpu_custom_call.1} parent=1 // pred_check
      _
    $region71: #{tpu_custom_call.1} parent=1 // pred_check_branch
      %2114 = sbr.rel (0) target = $region73
    $region72: #{tpu_custom_call.1} parent=1 // pred_region
      %2116 = vsyncadd [#allocation4], 0
      %s2117 = sshll.u32 [#allocation17], 4
      %s2118 = int_to_ptr.vmem [resolvable:$true] %s2117
      %s2119 = sshll.u32 %s9, 4
      %s2120 = int_to_ptr.hbm [resolvable:$true] %s2119
      %2125 = dma.vmem_to_hbm [thread:$0]  %s2118, 256, %s2120, [#allocation4], 128, 128, 8
    $region73: #{tpu_custom_call.1} parent=1 // pred_fallthru
      _
    // Predicated region
    $region74: #{tpu_custom_call.1} parent=1 // pred_check
      _
    $region75: #{tpu_custom_call.1} parent=1 // pred_check_branch
      %2127 = sbr.rel (0) target = $region77
    $region76: #{tpu_custom_call.1} parent=1 // pred_region
      %2129 = dma.done [#allocation4], 256
    $region77: #{tpu_custom_call.1} parent=1 // pred_fallthru
      _
    %2130 = vsyncpa [#allocation3], 1
    %2131 = vsyncpa [#allocation10], 1
    %2132 = vsyncpa [#allocation13], 1
    %2133 = vsyncpa [#allocation16], 1
    %2134 = vsyncpa [#allocation4], 1
    %2135 = vsyncpa [#allocation5], 1
    %2136 = vsyncpa [#allocation7], 1

</llo_original>
